<compile_context>
chip_gen: v7x
topology: tpu7x:2x2x1
jax: 0.10.0
libtpu: 0.0.40
codegen_flags: <defaults>
</compile_context>

<pallas_src>
import functools
import math

import jax
import jax.numpy as jnp
from jax.experimental import pallas as pl
from jax.experimental.pallas import tpu as pltpu


def _round_up(x, m):
    return ((x + m - 1) // m) * m


def _tile(dim, pref):
    """Tile size + (possibly padded) extent for one matmul dim."""
    if dim <= pref:
        return dim, dim                      # full-extent block, no padding
    if dim % pref == 0:
        return pref, dim
    return pref, _round_up(dim, pref)


def _seq_tile(S, pref=256):
    if S <= pref:
        return S
    for t in (pref, 128):
        if S % t == 0:
            return t
    return S                                 # fall back to one full-extent block


# ----------------------------- tiled linear (bias + optional ReLU fused) ----

def _matmul_kernel(x_ref, w_ref, b_ref, o_ref, acc_ref, *, activation):
    @pl.when(pl.program_id(2) == 0)
    def _():
        acc_ref[...] = jnp.zeros_like(acc_ref)

    acc_ref[...] += jnp.dot(x_ref[...], w_ref[...],
                            preferred_element_type=jnp.float32)

    @pl.when(pl.program_id(2) == pl.num_programs(2) - 1)
    def _():
        out = acc_ref[...] + b_ref[...]
        if activation == "relu":
            out = jnp.maximum(out, 0.0)
        o_ref[...] = out.astype(o_ref.dtype)


def linear(x2d, w_t, b2d, *, activation=None, out_dtype=jnp.bfloat16):
    """x2d (N,K) @ w_t (K,Out) + b2d (1,Out). Weights are bf16 from init."""
    N, K = x2d.shape
    Kw, Out = w_t.shape
    assert Kw == K
    tm, Np = _tile(N, 512)
    tk, Kp = _tile(K, 512)
    tn, Op = _tile(Out, 512)

    xp = x2d if x2d.dtype == jnp.bfloat16 else x2d.astype(jnp.bfloat16)
    if (Np, Kp) != (N, K):
        xp = jnp.pad(xp, ((0, Np - N), (0, Kp - K)))
    wp = w_t
    if (Kp, Op) != (K, Out):                 # never triggers for aligned dims
        wp = jnp.pad(wp, ((0, Kp - K), (0, Op - Out)))
    bp = b2d
    if Op != Out:
        bp = jnp.pad(bp, ((0, 0), (0, Op - Out)))

    kern = functools.partial(_matmul_kernel, activation=activation)
    out = pl.pallas_call(
        kern,
        out_shape=jax.ShapeDtypeStruct((Np, Op), out_dtype),
        grid=(Np // tm, Op // tn, Kp // tk),
        in_specs=[
            pl.BlockSpec((tm, tk), lambda i, j, k: (i, k)),
            pl.BlockSpec((tk, tn), lambda i, j, k: (k, j)),
            pl.BlockSpec((1, tn), lambda i, j, k: (0, j)),
        ],
        out_specs=pl.BlockSpec((tm, tn), lambda i, j, k: (i, j)),
        scratch_shapes=[pltpu.VMEM((tm, tn), jnp.float32)],
        compiler_params=pltpu.CompilerParams(
            dimension_semantics=("parallel", "parallel", "arbitrary")),
    )(xp, wp, bp)

    if (Np, Op) != (N, Out):
        out = out[:N, :Out]
    return out


# --------------- matmul with fused (residual + LayerNorm) epilogue ----------

def _matmul_res_ln_kernel(x_ref, w_ref, b_ref, r_ref, g_ref, bt_ref, o_ref,
                          acc_ref, *, eps):
    @pl.when(pl.program_id(1) == 0)
    def _():
        acc_ref[...] = jnp.zeros_like(acc_ref)

    acc_ref[...] += jnp.dot(x_ref[...], w_ref[...],
                            preferred_element_type=jnp.float32)

    @pl.when(pl.program_id(1) == pl.num_programs(1) - 1)
    def _():
        h = acc_ref[...] + b_ref[...] + r_ref[...].astype(jnp.float32)
        mean = jnp.mean(h, axis=-1, keepdims=True)
        var = jnp.mean((h - mean) ** 2, axis=-1, keepdims=True)
        y = (h - mean) * jax.lax.rsqrt(var + eps) * g_ref[...] + bt_ref[...]
        o_ref[...] = y.astype(o_ref.dtype)


def linear_res_ln(x2d, w_t, b2d, residual, gamma2d, beta2d, *, eps=1e-5,
                  out_dtype=jnp.bfloat16):
    """LayerNorm(residual + (x2d @ w_t + b)).  Out (=H) is one lane tile."""
    N, K = x2d.shape
    Kw, H = w_t.shape
    assert Kw == K and residual.shape == (N, H)
    tm, Np = _tile(N, 256)
    tk, Kp = _tile(K, 512)

    xp = x2d if x2d.dtype == jnp.bfloat16 else x2d.astype(jnp.bfloat16)
    if (Np, Kp) != (N, K):
        xp = jnp.pad(xp, ((0, Np - N), (0, Kp - K)))
    wp = w_t
    if Kp != K:
        wp = jnp.pad(wp, ((0, Kp - K), (0, 0)))
    rp = residual
    if Np != N:
        rp = jnp.pad(rp, ((0, Np - N), (0, 0)))

    kern = functools.partial(_matmul_res_ln_kernel, eps=eps)
    out = pl.pallas_call(
        kern,
        out_shape=jax.ShapeDtypeStruct((Np, H), out_dtype),
        grid=(Np // tm, Kp // tk),
        in_specs=[
            pl.BlockSpec((tm, tk), lambda i, k: (i, k)),
            pl.BlockSpec((tk, H), lambda i, k: (k, 0)),
            pl.BlockSpec((1, H), lambda i, k: (0, 0)),
            pl.BlockSpec((tm, H), lambda i, k: (i, 0)),
            pl.BlockSpec((1, H), lambda i, k: (0, 0)),
            pl.BlockSpec((1, H), lambda i, k: (0, 0)),
        ],
        out_specs=pl.BlockSpec((tm, H), lambda i, k: (i, 0)),
        scratch_shapes=[pltpu.VMEM((tm, H), jnp.float32)],
        compiler_params=pltpu.CompilerParams(
            dimension_semantics=("parallel", "arbitrary")),
    )(xp, wp, b2d, rp, gamma2d, beta2d)

    return out[:N] if Np != N else out


# ----------------------------- flash-style attention ------------------------

def _flash_kernel(q_ref, kT_ref, v_ref, o_ref, m_sc, l_sc, acc_sc, *, scale):
    ki = pl.program_id(3)

    @pl.when(ki == 0)
    def _():
        m_sc[...] = jnp.full_like(m_sc, -jnp.inf)
        l_sc[...] = jnp.zeros_like(l_sc)
        acc_sc[...] = jnp.zeros_like(acc_sc)

    q = q_ref[0, 0]                                       # (tq, dh)  bf16
    kT = kT_ref[0, 0]                                     # (dh, tkv) bf16
    v = v_ref[0, 0]                                       # (tkv, dh) bf16
    # TODO(synk): no attn_mask / key_padding_mask path (matches mask-free call).
    s = jnp.dot(q, kT, preferred_element_type=jnp.float32) * scale
    m_new = jnp.maximum(m_sc[...], s.max(axis=-1, keepdims=True))
    alpha = jnp.exp(m_sc[...] - m_new)
    p = jnp.exp(s - m_new)
    l_sc[...] = alpha * l_sc[...] + p.sum(axis=-1, keepdims=True)
    acc_sc[...] = alpha * acc_sc[...] + jnp.dot(
        p.astype(v.dtype), v, preferred_element_type=jnp.float32)
    m_sc[...] = m_new

    @pl.when(ki == pl.num_programs(3) - 1)
    def _():
        o_ref[0, 0] = (acc_sc[...] *
                       pl.reciprocal(l_sc[...], approx=True)).astype(o_ref.dtype)


def flash_attention(q, kT, v, *, scale):
    """q,v: (B,nH,S,dh); kT: (B,nH,dh,S) -> softmax(qk^T*scale)v : (B,nH,S,dh)."""
    B, nH, S, dh = q.shape
    tq = _seq_tile(S)
    tkv = _seq_tile(S)
    kern = functools.partial(_flash_kernel, scale=scale)
    return pl.pallas_call(
        kern,
        out_shape=jax.ShapeDtypeStruct((B, nH, S, dh), jnp.bfloat16),
        grid=(B, nH, S // tq, S // tkv),
        in_specs=[
            pl.BlockSpec((1, 1, tq, dh), lambda b, h, qi, ki: (b, h, qi, 0)),
            pl.BlockSpec((1, 1, dh, tkv), lambda b, h, qi, ki: (b, h, 0, ki)),
            pl.BlockSpec((1, 1, tkv, dh), lambda b, h, qi, ki: (b, h, ki, 0)),
        ],
        out_specs=pl.BlockSpec((1, 1, tq, dh), lambda b, h, qi, ki: (b, h, qi, 0)),
        scratch_shapes=[pltpu.VMEM((tq, 1), jnp.float32),
                        pltpu.VMEM((tq, 1), jnp.float32),
                        pltpu.VMEM((tq, dh), jnp.float32)],
        compiler_params=pltpu.CompilerParams(
            dimension_semantics=("parallel", "parallel", "parallel", "arbitrary")),
    )(q, kT, v)


# ----------------------------- fused output head ----------------------------

def _head_kernel(x_ref, w1_ref, b1_ref, g_ref, bln_ref, w2_ref, b2_ref, o_ref,
                 *, eps):
    x = x_ref[...]
    if x.dtype != jnp.bfloat16:
        x = x.astype(jnp.bfloat16)
    h = jnp.dot(x, w1_ref[...], preferred_element_type=jnp.float32) + b1_ref[...]
    mean = jnp.mean(h, axis=-1, keepdims=True)
    var = jnp.mean((h - mean) ** 2, axis=-1, keepdims=True)
    y = (h - mean) * jax.lax.rsqrt(var + eps) * g_ref[...] + bln_ref[...]
    y = jnp.maximum(y, 0.0)
    # TODO(synk): nn.Dropout is identity here (eval-mode semantics).
    out = jnp.dot(y.astype(jnp.bfloat16), w2_ref[...],
                  preferred_element_type=jnp.float32) + b2_ref[...]
    o_ref[...] = out.astype(o_ref.dtype)


def output_head(x, p1, pln, p2, eps=1e-5):
    """Linear(H->H/2) -> LayerNorm -> ReLU -> Linear(H/2->out), one kernel."""
    N, H = x.shape
    half = p1["wt"].shape[1]
    out_dim = p2["wt"].shape[1]
    tm, Np = _tile(N, 256)
    xp = jnp.pad(x, ((0, Np - N), (0, 0))) if Np != N else x

    kern = functools.partial(_head_kernel, eps=eps)
    out = pl.pallas_call(
        kern,
        out_shape=jax.ShapeDtypeStruct((Np, out_dim), jnp.float32),
        grid=(Np // tm,),
        in_specs=[
            pl.BlockSpec((tm, H), lambda i: (i, 0)),
            pl.BlockSpec((H, half), lambda i: (0, 0)),
            pl.BlockSpec((1, half), lambda i: (0, 0)),
            pl.BlockSpec((1, half), lambda i: (0, 0)),
            pl.BlockSpec((1, half), lambda i: (0, 0)),
            pl.BlockSpec((half, out_dim), lambda i: (0, 0)),
            pl.BlockSpec((1, out_dim), lambda i: (0, 0)),
        ],
        out_specs=pl.BlockSpec((tm, out_dim), lambda i: (i, 0)),
        compiler_params=pltpu.CompilerParams(dimension_semantics=("parallel",)),
    )(xp, p1["wt"], p1["b"], pln["g"], pln["b"], p2["wt"], p2["b"])
    return out[:N] if Np != N else out


# ----------------------------- parameters ------------------------------------

def _kaiming_t(key, in_f, out_f):
    # kaiming_normal_(mode='fan_in', nonlinearity='relu') -> std = sqrt(2 / fan_in)
    # Stored pre-transposed (in, out) in bf16 for the MXU, once at init.
    std = math.sqrt(2.0 / in_f)
    w = std * jax.random.normal(key, (out_f, in_f), dtype=jnp.float32)
    return w.T.astype(jnp.bfloat16)


def _bias(n):
    return jnp.zeros((1, n), jnp.float32)


def init_params(key, input_dim, hidden_dim, num_layers, num_heads, output_dim,
                dim_feedforward=2048):
    keys = jax.random.split(key, 3 + num_layers)
    params = {}
    params["input_proj"] = dict(wt=_kaiming_t(keys[0], input_dim, hidden_dim),
                                b=_bias(hidden_dim))
    layers = []
    for li in range(num_layers):
        lk = jax.random.split(keys[3 + li], 4)
        layers.append(dict(
            in_proj_wt=_kaiming_t(lk[0], hidden_dim, 3 * hidden_dim),
            in_proj_b=_bias(3 * hidden_dim),
            out_proj_wt=_kaiming_t(lk[1], hidden_dim, hidden_dim),
            out_proj_b=_bias(hidden_dim),
            ln1_g=jnp.ones((1, hidden_dim), jnp.float32),
            ln1_b=_bias(hidden_dim),
            ff1_wt=_kaiming_t(lk[2], hidden_dim, dim_feedforward),
            ff1_b=_bias(dim_feedforward),
            ff2_wt=_kaiming_t(lk[3], dim_feedforward, hidden_dim),
            ff2_b=_bias(hidden_dim),
            ln2_g=jnp.ones((1, hidden_dim), jnp.float32),
            ln2_b=_bias(hidden_dim),
        ))
    params["layers"] = layers
    half = hidden_dim // 2
    params["out1"] = dict(wt=_kaiming_t(keys[1], hidden_dim, half), b=_bias(half))
    params["out_ln"] = dict(g=jnp.ones((1, half), jnp.float32), b=_bias(half))
    params["out2"] = dict(wt=_kaiming_t(keys[2], half, output_dim),
                          b=_bias(output_dim))
    return params


# ----------------------------- forward pass ----------------------------------

def encoder_layer(x2d, B, S, H, p, num_heads):
    """PyTorch nn.TransformerEncoderLayer, norm_first=False (post-LN), eval mode."""
    nH = num_heads
    dh = H // nH

    # --- self attention ---
    qkv = linear(x2d, p["in_proj_wt"], p["in_proj_b"])            # (B*S, 3H) bf16
    qkv = qkv.reshape(B, S, 3, nH, dh)
    q = qkv[:, :, 0].transpose(0, 2, 1, 3)                        # (B, nH, S, dh)
    kT = qkv[:, :, 1].transpose(0, 2, 3, 1)                       # (B, nH, dh, S)
    v = qkv[:, :, 2].transpose(0, 2, 1, 3)                        # (B, nH, S, dh)
    attn = flash_attention(q, kT, v, scale=1.0 / math.sqrt(dh))   # (B, nH, S, dh)
    attn2d = attn.transpose(0, 2, 1, 3).reshape(B * S, H)
    # out_proj + residual add + LayerNorm1, fused
    x2d = linear_res_ln(attn2d, p["out_proj_wt"], p["out_proj_b"],
                        x2d, p["ln1_g"], p["ln1_b"])

    # --- feed forward ---
    h = linear(x2d, p["ff1_wt"], p["ff1_b"], activation="relu")
    # ff2 + residual add + LayerNorm2, fused
    x2d = linear_res_ln(h, p["ff2_wt"], p["ff2_b"], x2d, p["ln2_g"], p["ln2_b"])
    return x2d


def transformer_forward(params, x, num_heads):
    # x: (B, S, input_dim)
    B, S, Din = x.shape
    H = params["input_proj"]["wt"].shape[1]
    h2d = linear(x.reshape(B * S, Din),
                 params["input_proj"]["wt"], params["input_proj"]["b"])
    for p in params["layers"]:
        h2d = encoder_layer(h2d, B, S, H, p, num_heads)
    last = h2d.reshape(B, S, H)[:, -1, :]                          # (B, H)
    return output_head(last, params["out1"], params["out_ln"], params["out2"])


if __name__ == "__main__":
    B, S = 2, 8
    input_dim, hidden_dim, num_layers, num_heads, output_dim = 16, 32, 2, 4, 4

    key = jax.random.PRNGKey(0)
    pkey, xkey = jax.random.split(key)
    params = init_params(pkey, input_dim, hidden_dim, num_layers, num_heads,
                         output_dim)
    x = jax.random.normal(xkey, (B, S, input_dim), dtype=jnp.float32)

    fwd = jax.jit(functools.partial(transformer_forward, num_heads=num_heads))
    out = fwd(params, x)
    jax.block_until_ready(out)
    assert out.shape == (B, output_dim)
    print("KERNEL_OK")
</pallas_src>

<mosaic_0001>
module attributes {stable_mosaic.version = 11 : i64} {
  func.func @_matmul_kernel(%arg0: i32, %arg1: i32, %arg2: i32, %arg3: memref<16x16xbf16, #tpu.memory_space<vmem>>, %arg4: memref<16x32xbf16, #tpu.memory_space<vmem>>, %arg5: memref<1x32xf32, #tpu.memory_space<vmem>>, %arg6: memref<16x32xbf16, #tpu.memory_space<vmem>>, %arg7: memref<16x32xf32, #tpu.memory_space<vmem>>) attributes {dimension_semantics = [#tpu.dimension_semantics<parallel>, #tpu.dimension_semantics<parallel>, #tpu.dimension_semantics<arbitrary>], iteration_bounds = array<i64: 1, 1, 1>, scalar_prefetch = 0 : i64, scratch_operands = 1 : i64, tpu.core_type = #tpu.core_type<tc>, window_params = [{transform_indices = @transform_0, window_bounds = array<i64: 16, 16>}, {transform_indices = @transform_1, window_bounds = array<i64: 16, 32>}, {transform_indices = @transform_2, window_bounds = array<i64: 1, 32>}, {transform_indices = @transform_3, window_bounds = array<i64: 16, 32>}]} {
    %c0_i32 = arith.constant 0 : i32
    %0 = arith.cmpi eq, %arg2, %c0_i32 : i32
    %1 = arith.extui %0 : i1 to i32
    %c0_i32_0 = arith.constant 0 : i32
    %2 = arith.cmpi ne, %1, %c0_i32_0 : i32
    scf.if %2 {
      %cst_10 = arith.constant 0.000000e+00 : f32
      %12 = vector.broadcast %cst_10 : f32 to vector<16x32xf32>
      %c0_11 = arith.constant 0 : index
      %c0_12 = arith.constant 0 : index
      %13 = vector.load %arg7[%c0_11, %c0_12] : memref<16x32xf32, #tpu.memory_space<vmem>>, vector<16x32xf32>
      tpu.vector_store %arg7[%c0_11, %c0_12], %12 {strides = array<i32>} : memref<16x32xf32, #tpu.memory_space<vmem>>, vector<16x32xf32>,
    } else {
    }
    %c0 = arith.constant 0 : index
    %c0_1 = arith.constant 0 : index
    %3 = vector.load %arg7[%c0, %c0_1] : memref<16x32xf32, #tpu.memory_space<vmem>>, vector<16x32xf32>
    %c0_2 = arith.constant 0 : index
    %c0_3 = arith.constant 0 : index
    %4 = vector.load %arg3[%c0_2, %c0_3] : memref<16x16xbf16, #tpu.memory_space<vmem>>, vector<16x16xbf16>
    %c0_4 = arith.constant 0 : index
    %c0_5 = arith.constant 0 : index
    %5 = vector.load %arg4[%c0_4, %c0_5] : memref<16x32xbf16, #tpu.memory_space<vmem>>, vector<16x32xbf16>
    %cst = arith.constant dense<0.000000e+00> : vector<16x32xf32>
    %6 = tpu.matmul %4, %5, %cst {dimension_numbers = #tpu.dot_dimension_numbers<[1], [0], [0], [1], [0, 0, 1, 1], [], []>} : vector<16x16xbf16>, vector<16x32xbf16>, vector<16x32xf32> -> vector<16x32xf32>
    %7 = arith.addf %3, %6 : vector<16x32xf32>
    %c0_6 = arith.constant 0 : index
    %c0_7 = arith.constant 0 : index
    %8 = vector.load %arg7[%c0_6, %c0_7] : memref<16x32xf32, #tpu.memory_space<vmem>>, vector<16x32xf32>
    tpu.vector_store %arg7[%c0_6, %c0_7], %7 {strides = array<i32>} : memref<16x32xf32, #tpu.memory_space<vmem>>, vector<16x32xf32>,
    %c0_i32_8 = arith.constant 0 : i32
    %9 = arith.cmpi eq, %arg2, %c0_i32_8 : i32
    %10 = arith.extui %9 : i1 to i32
    %c0_i32_9 = arith.constant 0 : i32
    %11 = arith.cmpi ne, %10, %c0_i32_9 : i32
    scf.if %11 {
      %c0_10 = arith.constant 0 : index
      %c0_11 = arith.constant 0 : index
      %12 = vector.load %arg7[%c0_10, %c0_11] : memref<16x32xf32, #tpu.memory_space<vmem>>, vector<16x32xf32>
      %c0_12 = arith.constant 0 : index
      %c0_13 = arith.constant 0 : index
      %13 = vector.load %arg5[%c0_12, %c0_13] : memref<1x32xf32, #tpu.memory_space<vmem>>, vector<1x32xf32>
      %14 = vector.broadcast %13 : vector<1x32xf32> to vector<16x32xf32>
      %15 = arith.addf %12, %14 : vector<16x32xf32>
      %16 = arith.truncf %15 : vector<16x32xf32> to vector<16x32xbf16>
      %c0_14 = arith.constant 0 : index
      %c0_15 = arith.constant 0 : index
      %17 = vector.load %arg6[%c0_14, %c0_15] : memref<16x32xbf16, #tpu.memory_space<vmem>>, vector<16x32xbf16>
      tpu.vector_store %arg6[%c0_14, %c0_15], %16 {strides = array<i32>} : memref<16x32xbf16, #tpu.memory_space<vmem>>, vector<16x32xbf16>,
    } else {
    }
    return
  }
  func.func @transform_0(%arg0: i32, %arg1: i32, %arg2: i32) -> (i32, i32) {
    %c0_i32 = arith.constant 0 : i32
    return %arg0, %arg2 : i32, i32
  }
  func.func @transform_1(%arg0: i32, %arg1: i32, %arg2: i32) -> (i32, i32) {
    %c0_i32 = arith.constant 0 : i32
    return %arg2, %arg1 : i32, i32
  }
  func.func @transform_2(%arg0: i32, %arg1: i32, %arg2: i32) -> (i32, i32) {
    %c0_i32 = arith.constant 0 : i32
    %c0_i32_0 = arith.constant 0 : i32
    return %c0_i32, %arg1 : i32, i32
  }
  func.func @transform_3(%arg0: i32, %arg1: i32, %arg2: i32) -> (i32, i32) {
    %c0_i32 = arith.constant 0 : i32
    return %arg0, %arg1 : i32, i32
  }
}

module attributes {stable_mosaic.version = 11 : i64} {
  func.func @_matmul_kernel(%arg0: i32, %arg1: i32, %arg2: i32, %arg3: memref<16x32xbf16, #tpu.memory_space<vmem>>, %arg4: memref<32x96xbf16, #tpu.memory_space<vmem>>, %arg5: memref<1x96xf32, #tpu.memory_space<vmem>>, %arg6: memref<16x96xbf16, #tpu.memory_space<vmem>>, %arg7: memref<16x96xf32, #tpu.memory_space<vmem>>) attributes {dimension_semantics = [#tpu.dimension_semantics<parallel>, #tpu.dimension_semantics<parallel>, #tpu.dimension_semantics<arbitrary>], iteration_bounds = array<i64: 1, 1, 1>, scalar_prefetch = 0 : i64, scratch_operands = 1 : i64, tpu.core_type = #tpu.core_type<tc>, window_params = [{transform_indices = @transform_0, window_bounds = array<i64: 16, 32>}, {transform_indices = @transform_1, window_bounds = array<i64: 32, 96>}, {transform_indices = @transform_2, window_bounds = array<i64: 1, 96>}, {transform_indices = @transform_3, window_bounds = array<i64: 16, 96>}]} {
    %c0_i32 = arith.constant 0 : i32
    %0 = arith.cmpi eq, %arg2, %c0_i32 : i32
    %1 = arith.extui %0 : i1 to i32
    %c0_i32_0 = arith.constant 0 : i32
    %2 = arith.cmpi ne, %1, %c0_i32_0 : i32
    scf.if %2 {
      %cst_10 = arith.constant 0.000000e+00 : f32
      %12 = vector.broadcast %cst_10 : f32 to vector<16x96xf32>
      %c0_11 = arith.constant 0 : index
      %c0_12 = arith.constant 0 : index
      %13 = vector.load %arg7[%c0_11, %c0_12] : memref<16x96xf32, #tpu.memory_space<vmem>>, vector<16x96xf32>
      tpu.vector_store %arg7[%c0_11, %c0_12], %12 {strides = array<i32>} : memref<16x96xf32, #tpu.memory_space<vmem>>, vector<16x96xf32>,
    } else {
    }
    %c0 = arith.constant 0 : index
    %c0_1 = arith.constant 0 : index
    %3 = vector.load %arg7[%c0, %c0_1] : memref<16x96xf32, #tpu.memory_space<vmem>>, vector<16x96xf32>
    %c0_2 = arith.constant 0 : index
    %c0_3 = arith.constant 0 : index
    %4 = vector.load %arg3[%c0_2, %c0_3] : memref<16x32xbf16, #tpu.memory_space<vmem>>, vector<16x32xbf16>
    %c0_4 = arith.constant 0 : index
    %c0_5 = arith.constant 0 : index
    %5 = vector.load %arg4[%c0_4, %c0_5] : memref<32x96xbf16, #tpu.memory_space<vmem>>, vector<32x96xbf16>
    %cst = arith.constant dense<0.000000e+00> : vector<16x96xf32>
    %6 = tpu.matmul %4, %5, %cst {dimension_numbers = #tpu.dot_dimension_numbers<[1], [0], [0], [1], [0, 0, 1, 1], [], []>} : vector<16x32xbf16>, vector<32x96xbf16>, vector<16x96xf32> -> vector<16x96xf32>
    %7 = arith.addf %3, %6 : vector<16x96xf32>
    %c0_6 = arith.constant 0 : index
    %c0_7 = arith.constant 0 : index
    %8 = vector.load %arg7[%c0_6, %c0_7] : memref<16x96xf32, #tpu.memory_space<vmem>>, vector<16x96xf32>
    tpu.vector_store %arg7[%c0_6, %c0_7], %7 {strides = array<i32>} : memref<16x96xf32, #tpu.memory_space<vmem>>, vector<16x96xf32>,
    %c0_i32_8 = arith.constant 0 : i32
    %9 = arith.cmpi eq, %arg2, %c0_i32_8 : i32
    %10 = arith.extui %9 : i1 to i32
    %c0_i32_9 = arith.constant 0 : i32
    %11 = arith.cmpi ne, %10, %c0_i32_9 : i32
    scf.if %11 {
      %c0_10 = arith.constant 0 : index
      %c0_11 = arith.constant 0 : index
      %12 = vector.load %arg7[%c0_10, %c0_11] : memref<16x96xf32, #tpu.memory_space<vmem>>, vector<16x96xf32>
      %c0_12 = arith.constant 0 : index
      %c0_13 = arith.constant 0 : index
      %13 = vector.load %arg5[%c0_12, %c0_13] : memref<1x96xf32, #tpu.memory_space<vmem>>, vector<1x96xf32>
      %14 = vector.broadcast %13 : vector<1x96xf32> to vector<16x96xf32>
      %15 = arith.addf %12, %14 : vector<16x96xf32>
      %16 = arith.truncf %15 : vector<16x96xf32> to vector<16x96xbf16>
      %c0_14 = arith.constant 0 : index
      %c0_15 = arith.constant 0 : index
      %17 = vector.load %arg6[%c0_14, %c0_15] : memref<16x96xbf16, #tpu.memory_space<vmem>>, vector<16x96xbf16>
      tpu.vector_store %arg6[%c0_14, %c0_15], %16 {strides = array<i32>} : memref<16x96xbf16, #tpu.memory_space<vmem>>, vector<16x96xbf16>,
    } else {
    }
    return
  }
  func.func @transform_0(%arg0: i32, %arg1: i32, %arg2: i32) -> (i32, i32) {
    %c0_i32 = arith.constant 0 : i32
    return %arg0, %arg2 : i32, i32
  }
  func.func @transform_1(%arg0: i32, %arg1: i32, %arg2: i32) -> (i32, i32) {
    %c0_i32 = arith.constant 0 : i32
    return %arg2, %arg1 : i32, i32
  }
  func.func @transform_2(%arg0: i32, %arg1: i32, %arg2: i32) -> (i32, i32) {
    %c0_i32 = arith.constant 0 : i32
    %c0_i32_0 = arith.constant 0 : i32
    return %c0_i32, %arg1 : i32, i32
  }
  func.func @transform_3(%arg0: i32, %arg1: i32, %arg2: i32) -> (i32, i32) {
    %c0_i32 = arith.constant 0 : i32
    return %arg0, %arg1 : i32, i32
  }
}

module attributes {stable_mosaic.version = 11 : i64} {
  func.func @_flash_kernel(%arg0: i32, %arg1: i32, %arg2: i32, %arg3: i32, %arg4: memref<1x1x8x8xbf16, #tpu.memory_space<vmem>>, %arg5: memref<1x1x8x8xbf16, #tpu.memory_space<vmem>>, %arg6: memref<1x1x8x8xbf16, #tpu.memory_space<vmem>>, %arg7: memref<1x1x8x8xbf16, #tpu.memory_space<vmem>>, %arg8: memref<8x1xf32, #tpu.memory_space<vmem>>, %arg9: memref<8x1xf32, #tpu.memory_space<vmem>>, %arg10: memref<8x8xf32, #tpu.memory_space<vmem>>) attributes {dimension_semantics = [#tpu.dimension_semantics<parallel>, #tpu.dimension_semantics<parallel>, #tpu.dimension_semantics<parallel>, #tpu.dimension_semantics<arbitrary>], iteration_bounds = array<i64: 2, 4, 1, 1>, scalar_prefetch = 0 : i64, scratch_operands = 3 : i64, tpu.core_type = #tpu.core_type<tc>, window_params = [{transform_indices = @transform_0, window_bounds = array<i64: 1, 1, 8, 8>}, {transform_indices = @transform_1, window_bounds = array<i64: 1, 1, 8, 8>}, {transform_indices = @transform_2, window_bounds = array<i64: 1, 1, 8, 8>}, {transform_indices = @transform_3, window_bounds = array<i64: 1, 1, 8, 8>}]} {
    %c0_i32 = arith.constant 0 : i32
    %0 = arith.cmpi eq, %arg3, %c0_i32 : i32
    %1 = arith.extui %0 : i1 to i32
    %c0_i32_0 = arith.constant 0 : i32
    %2 = arith.cmpi ne, %1, %c0_i32_0 : i32
    scf.if %2 {
      %cst_32 = arith.constant 0xFF800000 : f32
      %39 = vector.broadcast %cst_32 : f32 to vector<8x1xf32>
      %c0_33 = arith.constant 0 : index
      %c0_34 = arith.constant 0 : index
      %40 = vector.load %arg8[%c0_33, %c0_34] : memref<8x1xf32, #tpu.memory_space<vmem>>, vector<8x1xf32>
      tpu.vector_store %arg8[%c0_33, %c0_34], %39 {strides = array<i32>} : memref<8x1xf32, #tpu.memory_space<vmem>>, vector<8x1xf32>,
      %cst_35 = arith.constant 0.000000e+00 : f32
      %41 = vector.broadcast %cst_35 : f32 to vector<8x1xf32>
      %c0_36 = arith.constant 0 : index
      %c0_37 = arith.constant 0 : index
      %42 = vector.load %arg9[%c0_36, %c0_37] : memref<8x1xf32, #tpu.memory_space<vmem>>, vector<8x1xf32>
      tpu.vector_store %arg9[%c0_36, %c0_37], %41 {strides = array<i32>} : memref<8x1xf32, #tpu.memory_space<vmem>>, vector<8x1xf32>,
      %cst_38 = arith.constant 0.000000e+00 : f32
      %43 = vector.broadcast %cst_38 : f32 to vector<8x8xf32>
      %c0_39 = arith.constant 0 : index
      %c0_40 = arith.constant 0 : index
      %44 = vector.load %arg10[%c0_39, %c0_40] : memref<8x8xf32, #tpu.memory_space<vmem>>, vector<8x8xf32>
      tpu.vector_store %arg10[%c0_39, %c0_40], %43 {strides = array<i32>} : memref<8x8xf32, #tpu.memory_space<vmem>>, vector<8x8xf32>,
    } else {
    }
    %c0 = arith.constant 0 : index
    %c0_1 = arith.constant 0 : index
    %c0_2 = arith.constant 0 : index
    %c0_3 = arith.constant 0 : index
    %3 = vector.load %arg4[%c0, %c0_1, %c0_2, %c0_3] : memref<1x1x8x8xbf16, #tpu.memory_space<vmem>>, vector<1x1x8x8xbf16>
    %4 = vector.shape_cast %3 : vector<1x1x8x8xbf16> to vector<8x8xbf16>
    %c0_4 = arith.constant 0 : index
    %c0_5 = arith.constant 0 : index
    %c0_6 = arith.constant 0 : index
    %c0_7 = arith.constant 0 : index
    %5 = vector.load %arg5[%c0_4, %c0_5, %c0_6, %c0_7] : memref<1x1x8x8xbf16, #tpu.memory_space<vmem>>, vector<1x1x8x8xbf16>
    %6 = vector.shape_cast %5 : vector<1x1x8x8xbf16> to vector<8x8xbf16>
    %c0_8 = arith.constant 0 : index
    %c0_9 = arith.constant 0 : index
    %c0_10 = arith.constant 0 : index
    %c0_11 = arith.constant 0 : index
    %7 = vector.load %arg6[%c0_8, %c0_9, %c0_10, %c0_11] : memref<1x1x8x8xbf16, #tpu.memory_space<vmem>>, vector<1x1x8x8xbf16>
    %8 = vector.shape_cast %7 : vector<1x1x8x8xbf16> to vector<8x8xbf16>
    %cst = arith.constant dense<0.000000e+00> : vector<8x8xf32>
    %9 = tpu.matmul %4, %6, %cst {dimension_numbers = #tpu.dot_dimension_numbers<[1], [0], [0], [1], [0, 0, 1, 1], [], []>} : vector<8x8xbf16>, vector<8x8xbf16>, vector<8x8xf32> -> vector<8x8xf32>
    %cst_12 = arith.constant 0.353553385 : f32
    %10 = vector.broadcast %cst_12 : f32 to vector<8x8xf32>
    %11 = arith.mulf %9, %10 : vector<8x8xf32>
    %c0_13 = arith.constant 0 : index
    %c0_14 = arith.constant 0 : index
    %12 = vector.load %arg8[%c0_13, %c0_14] : memref<8x1xf32, #tpu.memory_space<vmem>>, vector<8x1xf32>
    %cst_15 = arith.constant dense<0xFF800000> : vector<8xf32>
    %13 = vector.multi_reduction <maximumf>, %11, %cst_15 [1] : vector<8x8xf32> to vector<8xf32>
    %14 = vector.shape_cast %13 : vector<8xf32> to vector<8x1xf32>
    %15 = arith.maximumf %12, %14 : vector<8x1xf32>
    %c0_16 = arith.constant 0 : index
    %c0_17 = arith.constant 0 : index
    %16 = vector.load %arg8[%c0_16, %c0_17] : memref<8x1xf32, #tpu.memory_space<vmem>>, vector<8x1xf32>
    %17 = arith.subf %16, %15 : vector<8x1xf32>
    %18 = math.exp %17 : vector<8x1xf32>
    %19 = vector.broadcast %15 : vector<8x1xf32> to vector<8x8xf32>
    %20 = arith.subf %11, %19 : vector<8x8xf32>
    %21 = math.exp %20 : vector<8x8xf32>
    %c0_18 = arith.constant 0 : index
    %c0_19 = arith.constant 0 : index
    %22 = vector.load %arg9[%c0_18, %c0_19] : memref<8x1xf32, #tpu.memory_space<vmem>>, vector<8x1xf32>
    %23 = arith.mulf %18, %22 : vector<8x1xf32>
    %cst_20 = arith.constant dense<0.000000e+00> : vector<8xf32>
    %24 = vector.multi_reduction <add>, %21, %cst_20 [1] : vector<8x8xf32> to vector<8xf32>
    %25 = vector.shape_cast %24 : vector<8xf32> to vector<8x1xf32>
    %26 = arith.addf %23, %25 : vector<8x1xf32>
    %c0_21 = arith.constant 0 : index
    %c0_22 = arith.constant 0 : index
    %27 = vector.load %arg9[%c0_21, %c0_22] : memref<8x1xf32, #tpu.memory_space<vmem>>, vector<8x1xf32>
    tpu.vector_store %arg9[%c0_21, %c0_22], %26 {strides = array<i32>} : memref<8x1xf32, #tpu.memory_space<vmem>>, vector<8x1xf32>,
    %c0_23 = arith.constant 0 : index
    %c0_24 = arith.constant 0 : index
    %28 = vector.load %arg10[%c0_23, %c0_24] : memref<8x8xf32, #tpu.memory_space<vmem>>, vector<8x8xf32>
    %29 = vector.broadcast %18 : vector<8x1xf32> to vector<8x8xf32>
    %30 = arith.mulf %29, %28 : vector<8x8xf32>
    %31 = arith.truncf %21 : vector<8x8xf32> to vector<8x8xbf16>
    %cst_25 = arith.constant dense<0.000000e+00> : vector<8x8xf32>
    %32 = tpu.matmul %31, %8, %cst_25 {dimension_numbers = #tpu.dot_dimension_numbers<[1], [0], [0], [1], [0, 0, 1, 1], [], []>} : vector<8x8xbf16>, vector<8x8xbf16>, vector<8x8xf32> -> vector<8x8xf32>
    %33 = arith.addf %30, %32 : vector<8x8xf32>
    %c0_26 = arith.constant 0 : index
    %c0_27 = arith.constant 0 : index
    %34 = vector.load %arg10[%c0_26, %c0_27] : memref<8x8xf32, #tpu.memory_space<vmem>>, vector<8x8xf32>
    tpu.vector_store %arg10[%c0_26, %c0_27], %33 {strides = array<i32>} : memref<8x8xf32, #tpu.memory_space<vmem>>, vector<8x8xf32>,
    %c0_28 = arith.constant 0 : index
    %c0_29 = arith.constant 0 : index
    %35 = vector.load %arg8[%c0_28, %c0_29] : memref<8x1xf32, #tpu.memory_space<vmem>>, vector<8x1xf32>
    tpu.vector_store %arg8[%c0_28, %c0_29], %15 {strides = array<i32>} : memref<8x1xf32, #tpu.memory_space<vmem>>, vector<8x1xf32>,
    %c0_i32_30 = arith.constant 0 : i32
    %36 = arith.cmpi eq, %arg3, %c0_i32_30 : i32
    %37 = arith.extui %36 : i1 to i32
    %c0_i32_31 = arith.constant 0 : i32
    %38 = arith.cmpi ne, %37, %c0_i32_31 : i32
    scf.if %38 {
      %c0_32 = arith.constant 0 : index
      %c0_33 = arith.constant 0 : index
      %39 = vector.load %arg10[%c0_32, %c0_33] : memref<8x8xf32, #tpu.memory_space<vmem>>, vector<8x8xf32>
      %c0_34 = arith.constant 0 : index
      %c0_35 = arith.constant 0 : index
      %40 = vector.load %arg9[%c0_34, %c0_35] : memref<8x1xf32, #tpu.memory_space<vmem>>, vector<8x1xf32>
      %41 = tpu.reciprocal %40 {approx = true} : vector<8x1xf32> -> vector<8x1xf32>
      %42 = vector.broadcast %41 : vector<8x1xf32> to vector<8x8xf32>
      %43 = arith.mulf %39, %42 : vector<8x8xf32>
      %44 = arith.truncf %43 : vector<8x8xf32> to vector<8x8xbf16>
      %c0_36 = arith.constant 0 : index
      %c0_37 = arith.constant 0 : index
      %c0_38 = arith.constant 0 : index
      %c0_39 = arith.constant 0 : index
      %45 = vector.load %arg7[%c0_36, %c0_37, %c0_38, %c0_39] : memref<1x1x8x8xbf16, #tpu.memory_space<vmem>>, vector<1x1x8x8xbf16>
      %46 = vector.shape_cast %45 : vector<1x1x8x8xbf16> to vector<8x8xbf16>
      %47 = vector.shape_cast %44 : vector<8x8xbf16> to vector<1x1x8x8xbf16>
      tpu.vector_store %arg7[%c0_36, %c0_37, %c0_38, %c0_39], %47 {strides = array<i32>} : memref<1x1x8x8xbf16, #tpu.memory_space<vmem>>, vector<1x1x8x8xbf16>,
    } else {
    }
    return
  }
  func.func @transform_0(%arg0: i32, %arg1: i32, %arg2: i32, %arg3: i32) -> (i32, i32, i32, i32) {
    %c0_i32 = arith.constant 0 : i32
    %c0_i32_0 = arith.constant 0 : i32
    return %arg0, %arg1, %arg2, %c0_i32 : i32, i32, i32, i32
  }
  func.func @transform_1(%arg0: i32, %arg1: i32, %arg2: i32, %arg3: i32) -> (i32, i32, i32, i32) {
    %c0_i32 = arith.constant 0 : i32
    %c0_i32_0 = arith.constant 0 : i32
    return %arg0, %arg1, %c0_i32, %arg3 : i32, i32, i32, i32
  }
  func.func @transform_2(%arg0: i32, %arg1: i32, %arg2: i32, %arg3: i32) -> (i32, i32, i32, i32) {
    %c0_i32 = arith.constant 0 : i32
    %c0_i32_0 = arith.constant 0 : i32
    return %arg0, %arg1, %arg3, %c0_i32 : i32, i32, i32, i32
  }
  func.func @transform_3(%arg0: i32, %arg1: i32, %arg2: i32, %arg3: i32) -> (i32, i32, i32, i32) {
    %c0_i32 = arith.constant 0 : i32
    %c0_i32_0 = arith.constant 0 : i32
    return %arg0, %arg1, %arg2, %c0_i32 : i32, i32, i32, i32
  }
}

module attributes {stable_mosaic.version = 11 : i64} {
  func.func @_matmul_res_ln_kernel(%arg0: i32, %arg1: i32, %arg2: memref<16x32xbf16, #tpu.memory_space<vmem>>, %arg3: memref<32x32xbf16, #tpu.memory_space<vmem>>, %arg4: memref<1x32xf32, #tpu.memory_space<vmem>>, %arg5: memref<16x32xbf16, #tpu.memory_space<vmem>>, %arg6: memref<1x32xf32, #tpu.memory_space<vmem>>, %arg7: memref<1x32xf32, #tpu.memory_space<vmem>>, %arg8: memref<16x32xbf16, #tpu.memory_space<vmem>>, %arg9: memref<16x32xf32, #tpu.memory_space<vmem>>) attributes {dimension_semantics = [#tpu.dimension_semantics<parallel>, #tpu.dimension_semantics<arbitrary>], iteration_bounds = array<i64: 1, 1>, scalar_prefetch = 0 : i64, scratch_operands = 1 : i64, tpu.core_type = #tpu.core_type<tc>, window_params = [{transform_indices = @transform_0, window_bounds = array<i64: 16, 32>}, {transform_indices = @transform_1, window_bounds = array<i64: 32, 32>}, {pipeline_mode = #tpu.pipeline_mode<synchronous>, transform_indices = @transform_2, window_bounds = array<i64: 1, 32>}, {transform_indices = @transform_3, window_bounds = array<i64: 16, 32>}, {pipeline_mode = #tpu.pipeline_mode<synchronous>, transform_indices = @transform_4, window_bounds = array<i64: 1, 32>}, {pipeline_mode = #tpu.pipeline_mode<synchronous>, transform_indices = @transform_5, window_bounds = array<i64: 1, 32>}, {transform_indices = @transform_6, window_bounds = array<i64: 16, 32>}]} {
    %c0_i32 = arith.constant 0 : i32
    %0 = arith.cmpi eq, %arg1, %c0_i32 : i32
    %1 = arith.extui %0 : i1 to i32
    %c0_i32_0 = arith.constant 0 : i32
    %2 = arith.cmpi ne, %1, %c0_i32_0 : i32
    scf.if %2 {
      %cst_10 = arith.constant 0.000000e+00 : f32
      %12 = vector.broadcast %cst_10 : f32 to vector<16x32xf32>
      %c0_11 = arith.constant 0 : index
      %c0_12 = arith.constant 0 : index
      %13 = vector.load %arg9[%c0_11, %c0_12] : memref<16x32xf32, #tpu.memory_space<vmem>>, vector<16x32xf32>
      tpu.vector_store %arg9[%c0_11, %c0_12], %12 {strides = array<i32>} : memref<16x32xf32, #tpu.memory_space<vmem>>, vector<16x32xf32>,
    } else {
    }
    %c0 = arith.constant 0 : index
    %c0_1 = arith.constant 0 : index
    %3 = vector.load %arg9[%c0, %c0_1] : memref<16x32xf32, #tpu.memory_space<vmem>>, vector<16x32xf32>
    %c0_2 = arith.constant 0 : index
    %c0_3 = arith.constant 0 : index
    %4 = vector.load %arg2[%c0_2, %c0_3] : memref<16x32xbf16, #tpu.memory_space<vmem>>, vector<16x32xbf16>
    %c0_4 = arith.constant 0 : index
    %c0_5 = arith.constant 0 : index
    %5 = vector.load %arg3[%c0_4, %c0_5] : memref<32x32xbf16, #tpu.memory_space<vmem>>, vector<32x32xbf16>
    %cst = arith.constant dense<0.000000e+00> : vector<16x32xf32>
    %6 = tpu.matmul %4, %5, %cst {dimension_numbers = #tpu.dot_dimension_numbers<[1], [0], [0], [1], [0, 0, 1, 1], [], []>} : vector<16x32xbf16>, vector<32x32xbf16>, vector<16x32xf32> -> vector<16x32xf32>
    %7 = arith.addf %3, %6 : vector<16x32xf32>
    %c0_6 = arith.constant 0 : index
    %c0_7 = arith.constant 0 : index
    %8 = vector.load %arg9[%c0_6, %c0_7] : memref<16x32xf32, #tpu.memory_space<vmem>>, vector<16x32xf32>
    tpu.vector_store %arg9[%c0_6, %c0_7], %7 {strides = array<i32>} : memref<16x32xf32, #tpu.memory_space<vmem>>, vector<16x32xf32>,
    %c0_i32_8 = arith.constant 0 : i32
    %9 = arith.cmpi eq, %arg1, %c0_i32_8 : i32
    %10 = arith.extui %9 : i1 to i32
    %c0_i32_9 = arith.constant 0 : i32
    %11 = arith.cmpi ne, %10, %c0_i32_9 : i32
    scf.if %11 {
      %c0_10 = arith.constant 0 : index
      %c0_11 = arith.constant 0 : index
      %12 = vector.load %arg9[%c0_10, %c0_11] : memref<16x32xf32, #tpu.memory_space<vmem>>, vector<16x32xf32>
      %c0_12 = arith.constant 0 : index
      %c0_13 = arith.constant 0 : index
      %13 = vector.load %arg4[%c0_12, %c0_13] : memref<1x32xf32, #tpu.memory_space<vmem>>, vector<1x32xf32>
      %14 = vector.broadcast %13 : vector<1x32xf32> to vector<16x32xf32>
      %15 = arith.addf %12, %14 : vector<16x32xf32>
      %c0_14 = arith.constant 0 : index
      %c0_15 = arith.constant 0 : index
      %16 = vector.load %arg5[%c0_14, %c0_15] : memref<16x32xbf16, #tpu.memory_space<vmem>>, vector<16x32xbf16>
      %17 = arith.extf %16 : vector<16x32xbf16> to vector<16x32xf32>
      %18 = arith.addf %15, %17 : vector<16x32xf32>
      %cst_16 = arith.constant dense<0.000000e+00> : vector<16xf32>
      %19 = vector.multi_reduction <add>, %18, %cst_16 [1] : vector<16x32xf32> to vector<16xf32>
      %20 = vector.shape_cast %19 : vector<16xf32> to vector<16x1xf32>
      %cst_17 = arith.constant 3.200000e+01 : f32
      %21 = vector.broadcast %cst_17 : f32 to vector<16x1xf32>
      %22 = arith.divf %20, %21 : vector<16x1xf32>
      %23 = vector.broadcast %22 : vector<16x1xf32> to vector<16x32xf32>
      %24 = arith.subf %18, %23 : vector<16x32xf32>
      %25 = arith.mulf %24, %24 : vector<16x32xf32>
      %cst_18 = arith.constant dense<0.000000e+00> : vector<16xf32>
      %26 = vector.multi_reduction <add>, %25, %cst_18 [1] : vector<16x32xf32> to vector<16xf32>
      %27 = vector.shape_cast %26 : vector<16xf32> to vector<16x1xf32>
      %cst_19 = arith.constant 3.200000e+01 : f32
      %28 = vector.broadcast %cst_19 : f32 to vector<16x1xf32>
      %29 = arith.divf %27, %28 : vector<16x1xf32>
      %30 = vector.broadcast %22 : vector<16x1xf32> to vector<16x32xf32>
      %31 = arith.subf %18, %30 : vector<16x32xf32>
      %cst_20 = arith.constant 9.99999974E-6 : f32
      %32 = vector.broadcast %cst_20 : f32 to vector<16x1xf32>
      %33 = arith.addf %29, %32 : vector<16x1xf32>
      %34 = math.rsqrt %33 : vector<16x1xf32>
      %35 = vector.broadcast %34 : vector<16x1xf32> to vector<16x32xf32>
      %36 = arith.mulf %31, %35 : vector<16x32xf32>
      %c0_21 = arith.constant 0 : index
      %c0_22 = arith.constant 0 : index
      %37 = vector.load %arg6[%c0_21, %c0_22] : memref<1x32xf32, #tpu.memory_space<vmem>>, vector<1x32xf32>
      %38 = vector.broadcast %37 : vector<1x32xf32> to vector<16x32xf32>
      %39 = arith.mulf %36, %38 : vector<16x32xf32>
      %c0_23 = arith.constant 0 : index
      %c0_24 = arith.constant 0 : index
      %40 = vector.load %arg7[%c0_23, %c0_24] : memref<1x32xf32, #tpu.memory_space<vmem>>, vector<1x32xf32>
      %41 = vector.broadcast %40 : vector<1x32xf32> to vector<16x32xf32>
      %42 = arith.addf %39, %41 : vector<16x32xf32>
      %43 = arith.truncf %42 : vector<16x32xf32> to vector<16x32xbf16>
      %c0_25 = arith.constant 0 : index
      %c0_26 = arith.constant 0 : index
      %44 = vector.load %arg8[%c0_25, %c0_26] : memref<16x32xbf16, #tpu.memory_space<vmem>>, vector<16x32xbf16>
      tpu.vector_store %arg8[%c0_25, %c0_26], %43 {strides = array<i32>} : memref<16x32xbf16, #tpu.memory_space<vmem>>, vector<16x32xbf16>,
    } else {
    }
    return
  }
  func.func @transform_0(%arg0: i32, %arg1: i32) -> (i32, i32) {
    %c0_i32 = arith.constant 0 : i32
    return %arg0, %arg1 : i32, i32
  }
  func.func @transform_1(%arg0: i32, %arg1: i32) -> (i32, i32) {
    %c0_i32 = arith.constant 0 : i32
    %c0_i32_0 = arith.constant 0 : i32
    return %arg1, %c0_i32 : i32, i32
  }
  func.func @transform_2(%arg0: i32, %arg1: i32) -> (i32, i32) {
    %c0_i32 = arith.constant 0 : i32
    %c0_i32_0 = arith.constant 0 : i32
    %c0_i32_1 = arith.constant 0 : i32
    return %c0_i32, %c0_i32_0 : i32, i32
  }
  func.func @transform_3(%arg0: i32, %arg1: i32) -> (i32, i32) {
    %c0_i32 = arith.constant 0 : i32
    %c0_i32_0 = arith.constant 0 : i32
    return %arg0, %c0_i32 : i32, i32
  }
  func.func @transform_4(%arg0: i32, %arg1: i32) -> (i32, i32) {
    %c0_i32 = arith.constant 0 : i32
    %c0_i32_0 = arith.constant 0 : i32
    %c0_i32_1 = arith.constant 0 : i32
    return %c0_i32, %c0_i32_0 : i32, i32
  }
  func.func @transform_5(%arg0: i32, %arg1: i32) -> (i32, i32) {
    %c0_i32 = arith.constant 0 : i32
    %c0_i32_0 = arith.constant 0 : i32
    %c0_i32_1 = arith.constant 0 : i32
    return %c0_i32, %c0_i32_0 : i32, i32
  }
  func.func @transform_6(%arg0: i32, %arg1: i32) -> (i32, i32) {
    %c0_i32 = arith.constant 0 : i32
    %c0_i32_0 = arith.constant 0 : i32
    return %arg0, %c0_i32 : i32, i32
  }
}

module attributes {stable_mosaic.version = 11 : i64} {
  func.func @_matmul_kernel(%arg0: i32, %arg1: i32, %arg2: i32, %arg3: memref<16x32xbf16, #tpu.memory_space<vmem>>, %arg4: memref<32x512xbf16, #tpu.memory_space<vmem>>, %arg5: memref<1x512xf32, #tpu.memory_space<vmem>>, %arg6: memref<16x512xbf16, #tpu.memory_space<vmem>>, %arg7: memref<16x512xf32, #tpu.memory_space<vmem>>) attributes {dimension_semantics = [#tpu.dimension_semantics<parallel>, #tpu.dimension_semantics<parallel>, #tpu.dimension_semantics<arbitrary>], iteration_bounds = array<i64: 1, 4, 1>, scalar_prefetch = 0 : i64, scratch_operands = 1 : i64, tpu.core_type = #tpu.core_type<tc>, window_params = [{transform_indices = @transform_0, window_bounds = array<i64: 16, 32>}, {transform_indices = @transform_1, window_bounds = array<i64: 32, 512>}, {transform_indices = @transform_2, window_bounds = array<i64: 1, 512>}, {transform_indices = @transform_3, window_bounds = array<i64: 16, 512>}]} {
    %c0_i32 = arith.constant 0 : i32
    %0 = arith.cmpi eq, %arg2, %c0_i32 : i32
    %1 = arith.extui %0 : i1 to i32
    %c0_i32_0 = arith.constant 0 : i32
    %2 = arith.cmpi ne, %1, %c0_i32_0 : i32
    scf.if %2 {
      %cst_10 = arith.constant 0.000000e+00 : f32
      %12 = vector.broadcast %cst_10 : f32 to vector<16x512xf32>
      %c0_11 = arith.constant 0 : index
      %c0_12 = arith.constant 0 : index
      %13 = vector.load %arg7[%c0_11, %c0_12] : memref<16x512xf32, #tpu.memory_space<vmem>>, vector<16x512xf32>
      tpu.vector_store %arg7[%c0_11, %c0_12], %12 {strides = array<i32>} : memref<16x512xf32, #tpu.memory_space<vmem>>, vector<16x512xf32>,
    } else {
    }
    %c0 = arith.constant 0 : index
    %c0_1 = arith.constant 0 : index
    %3 = vector.load %arg7[%c0, %c0_1] : memref<16x512xf32, #tpu.memory_space<vmem>>, vector<16x512xf32>
    %c0_2 = arith.constant 0 : index
    %c0_3 = arith.constant 0 : index
    %4 = vector.load %arg3[%c0_2, %c0_3] : memref<16x32xbf16, #tpu.memory_space<vmem>>, vector<16x32xbf16>
    %c0_4 = arith.constant 0 : index
    %c0_5 = arith.constant 0 : index
    %5 = vector.load %arg4[%c0_4, %c0_5] : memref<32x512xbf16, #tpu.memory_space<vmem>>, vector<32x512xbf16>
    %cst = arith.constant dense<0.000000e+00> : vector<16x512xf32>
    %6 = tpu.matmul %4, %5, %cst {dimension_numbers = #tpu.dot_dimension_numbers<[1], [0], [0], [1], [0, 0, 1, 1], [], []>} : vector<16x32xbf16>, vector<32x512xbf16>, vector<16x512xf32> -> vector<16x512xf32>
    %7 = arith.addf %3, %6 : vector<16x512xf32>
    %c0_6 = arith.constant 0 : index
    %c0_7 = arith.constant 0 : index
    %8 = vector.load %arg7[%c0_6, %c0_7] : memref<16x512xf32, #tpu.memory_space<vmem>>, vector<16x512xf32>
    tpu.vector_store %arg7[%c0_6, %c0_7], %7 {strides = array<i32>} : memref<16x512xf32, #tpu.memory_space<vmem>>, vector<16x512xf32>,
    %c0_i32_8 = arith.constant 0 : i32
    %9 = arith.cmpi eq, %arg2, %c0_i32_8 : i32
    %10 = arith.extui %9 : i1 to i32
    %c0_i32_9 = arith.constant 0 : i32
    %11 = arith.cmpi ne, %10, %c0_i32_9 : i32
    scf.if %11 {
      %c0_10 = arith.constant 0 : index
      %c0_11 = arith.constant 0 : index
      %12 = vector.load %arg7[%c0_10, %c0_11] : memref<16x512xf32, #tpu.memory_space<vmem>>, vector<16x512xf32>
      %c0_12 = arith.constant 0 : index
      %c0_13 = arith.constant 0 : index
      %13 = vector.load %arg5[%c0_12, %c0_13] : memref<1x512xf32, #tpu.memory_space<vmem>>, vector<1x512xf32>
      %14 = vector.broadcast %13 : vector<1x512xf32> to vector<16x512xf32>
      %15 = arith.addf %12, %14 : vector<16x512xf32>
      %cst_14 = arith.constant 0.000000e+00 : f32
      %16 = vector.broadcast %cst_14 : f32 to vector<16x512xf32>
      %17 = arith.maximumf %15, %16 : vector<16x512xf32>
      %18 = arith.truncf %17 : vector<16x512xf32> to vector<16x512xbf16>
      %c0_15 = arith.constant 0 : index
      %c0_16 = arith.constant 0 : index
      %19 = vector.load %arg6[%c0_15, %c0_16] : memref<16x512xbf16, #tpu.memory_space<vmem>>, vector<16x512xbf16>
      tpu.vector_store %arg6[%c0_15, %c0_16], %18 {strides = array<i32>} : memref<16x512xbf16, #tpu.memory_space<vmem>>, vector<16x512xbf16>,
    } else {
    }
    return
  }
  func.func @transform_0(%arg0: i32, %arg1: i32, %arg2: i32) -> (i32, i32) {
    %c0_i32 = arith.constant 0 : i32
    return %arg0, %arg2 : i32, i32
  }
  func.func @transform_1(%arg0: i32, %arg1: i32, %arg2: i32) -> (i32, i32) {
    %c0_i32 = arith.constant 0 : i32
    return %arg2, %arg1 : i32, i32
  }
  func.func @transform_2(%arg0: i32, %arg1: i32, %arg2: i32) -> (i32, i32) {
    %c0_i32 = arith.constant 0 : i32
    %c0_i32_0 = arith.constant 0 : i32
    return %c0_i32, %arg1 : i32, i32
  }
  func.func @transform_3(%arg0: i32, %arg1: i32, %arg2: i32) -> (i32, i32) {
    %c0_i32 = arith.constant 0 : i32
    return %arg0, %arg1 : i32, i32
  }
}

module attributes {stable_mosaic.version = 11 : i64} {
  func.func @_matmul_res_ln_kernel(%arg0: i32, %arg1: i32, %arg2: memref<16x512xbf16, #tpu.memory_space<vmem>>, %arg3: memref<512x32xbf16, #tpu.memory_space<vmem>>, %arg4: memref<1x32xf32, #tpu.memory_space<vmem>>, %arg5: memref<16x32xbf16, #tpu.memory_space<vmem>>, %arg6: memref<1x32xf32, #tpu.memory_space<vmem>>, %arg7: memref<1x32xf32, #tpu.memory_space<vmem>>, %arg8: memref<16x32xbf16, #tpu.memory_space<vmem>>, %arg9: memref<16x32xf32, #tpu.memory_space<vmem>>) attributes {dimension_semantics = [#tpu.dimension_semantics<parallel>, #tpu.dimension_semantics<arbitrary>], iteration_bounds = array<i64: 1, 4>, scalar_prefetch = 0 : i64, scratch_operands = 1 : i64, tpu.core_type = #tpu.core_type<tc>, window_params = [{transform_indices = @transform_0, window_bounds = array<i64: 16, 512>}, {transform_indices = @transform_1, window_bounds = array<i64: 512, 32>}, {pipeline_mode = #tpu.pipeline_mode<synchronous>, transform_indices = @transform_2, window_bounds = array<i64: 1, 32>}, {transform_indices = @transform_3, window_bounds = array<i64: 16, 32>}, {pipeline_mode = #tpu.pipeline_mode<synchronous>, transform_indices = @transform_4, window_bounds = array<i64: 1, 32>}, {pipeline_mode = #tpu.pipeline_mode<synchronous>, transform_indices = @transform_5, window_bounds = array<i64: 1, 32>}, {transform_indices = @transform_6, window_bounds = array<i64: 16, 32>}]} {
    %c0_i32 = arith.constant 0 : i32
    %0 = arith.cmpi eq, %arg1, %c0_i32 : i32
    %1 = arith.extui %0 : i1 to i32
    %c0_i32_0 = arith.constant 0 : i32
    %2 = arith.cmpi ne, %1, %c0_i32_0 : i32
    scf.if %2 {
      %cst_9 = arith.constant 0.000000e+00 : f32
      %12 = vector.broadcast %cst_9 : f32 to vector<16x32xf32>
      %c0_10 = arith.constant 0 : index
      %c0_11 = arith.constant 0 : index
      %13 = vector.load %arg9[%c0_10, %c0_11] : memref<16x32xf32, #tpu.memory_space<vmem>>, vector<16x32xf32>
      tpu.vector_store %arg9[%c0_10, %c0_11], %12 {strides = array<i32>} : memref<16x32xf32, #tpu.memory_space<vmem>>, vector<16x32xf32>,
    } else {
    }
    %c0 = arith.constant 0 : index
    %c0_1 = arith.constant 0 : index
    %3 = vector.load %arg9[%c0, %c0_1] : memref<16x32xf32, #tpu.memory_space<vmem>>, vector<16x32xf32>
    %c0_2 = arith.constant 0 : index
    %c0_3 = arith.constant 0 : index
    %4 = vector.load %arg2[%c0_2, %c0_3] : memref<16x512xbf16, #tpu.memory_space<vmem>>, vector<16x512xbf16>
    %c0_4 = arith.constant 0 : index
    %c0_5 = arith.constant 0 : index
    %5 = vector.load %arg3[%c0_4, %c0_5] : memref<512x32xbf16, #tpu.memory_space<vmem>>, vector<512x32xbf16>
    %cst = arith.constant dense<0.000000e+00> : vector<16x32xf32>
    %6 = tpu.matmul %4, %5, %cst {dimension_numbers = #tpu.dot_dimension_numbers<[1], [0], [0], [1], [0, 0, 1, 1], [], []>} : vector<16x512xbf16>, vector<512x32xbf16>, vector<16x32xf32> -> vector<16x32xf32>
    %7 = arith.addf %3, %6 : vector<16x32xf32>
    %c0_6 = arith.constant 0 : index
    %c0_7 = arith.constant 0 : index
    %8 = vector.load %arg9[%c0_6, %c0_7] : memref<16x32xf32, #tpu.memory_space<vmem>>, vector<16x32xf32>
    tpu.vector_store %arg9[%c0_6, %c0_7], %7 {strides = array<i32>} : memref<16x32xf32, #tpu.memory_space<vmem>>, vector<16x32xf32>,
    %c3_i32 = arith.constant 3 : i32
    %9 = arith.cmpi eq, %arg1, %c3_i32 : i32
    %10 = arith.extui %9 : i1 to i32
    %c0_i32_8 = arith.constant 0 : i32
    %11 = arith.cmpi ne, %10, %c0_i32_8 : i32
    scf.if %11 {
      %c0_9 = arith.constant 0 : index
      %c0_10 = arith.constant 0 : index
      %12 = vector.load %arg9[%c0_9, %c0_10] : memref<16x32xf32, #tpu.memory_space<vmem>>, vector<16x32xf32>
      %c0_11 = arith.constant 0 : index
      %c0_12 = arith.constant 0 : index
      %13 = vector.load %arg4[%c0_11, %c0_12] : memref<1x32xf32, #tpu.memory_space<vmem>>, vector<1x32xf32>
      %14 = vector.broadcast %13 : vector<1x32xf32> to vector<16x32xf32>
      %15 = arith.addf %12, %14 : vector<16x32xf32>
      %c0_13 = arith.constant 0 : index
      %c0_14 = arith.constant 0 : index
      %16 = vector.load %arg5[%c0_13, %c0_14] : memref<16x32xbf16, #tpu.memory_space<vmem>>, vector<16x32xbf16>
      %17 = arith.extf %16 : vector<16x32xbf16> to vector<16x32xf32>
      %18 = arith.addf %15, %17 : vector<16x32xf32>
      %cst_15 = arith.constant dense<0.000000e+00> : vector<16xf32>
      %19 = vector.multi_reduction <add>, %18, %cst_15 [1] : vector<16x32xf32> to vector<16xf32>
      %20 = vector.shape_cast %19 : vector<16xf32> to vector<16x1xf32>
      %cst_16 = arith.constant 3.200000e+01 : f32
      %21 = vector.broadcast %cst_16 : f32 to vector<16x1xf32>
      %22 = arith.divf %20, %21 : vector<16x1xf32>
      %23 = vector.broadcast %22 : vector<16x1xf32> to vector<16x32xf32>
      %24 = arith.subf %18, %23 : vector<16x32xf32>
      %25 = arith.mulf %24, %24 : vector<16x32xf32>
      %cst_17 = arith.constant dense<0.000000e+00> : vector<16xf32>
      %26 = vector.multi_reduction <add>, %25, %cst_17 [1] : vector<16x32xf32> to vector<16xf32>
      %27 = vector.shape_cast %26 : vector<16xf32> to vector<16x1xf32>
      %cst_18 = arith.constant 3.200000e+01 : f32
      %28 = vector.broadcast %cst_18 : f32 to vector<16x1xf32>
      %29 = arith.divf %27, %28 : vector<16x1xf32>
      %30 = vector.broadcast %22 : vector<16x1xf32> to vector<16x32xf32>
      %31 = arith.subf %18, %30 : vector<16x32xf32>
      %cst_19 = arith.constant 9.99999974E-6 : f32
      %32 = vector.broadcast %cst_19 : f32 to vector<16x1xf32>
      %33 = arith.addf %29, %32 : vector<16x1xf32>
      %34 = math.rsqrt %33 : vector<16x1xf32>
      %35 = vector.broadcast %34 : vector<16x1xf32> to vector<16x32xf32>
      %36 = arith.mulf %31, %35 : vector<16x32xf32>
      %c0_20 = arith.constant 0 : index
      %c0_21 = arith.constant 0 : index
      %37 = vector.load %arg6[%c0_20, %c0_21] : memref<1x32xf32, #tpu.memory_space<vmem>>, vector<1x32xf32>
      %38 = vector.broadcast %37 : vector<1x32xf32> to vector<16x32xf32>
      %39 = arith.mulf %36, %38 : vector<16x32xf32>
      %c0_22 = arith.constant 0 : index
      %c0_23 = arith.constant 0 : index
      %40 = vector.load %arg7[%c0_22, %c0_23] : memref<1x32xf32, #tpu.memory_space<vmem>>, vector<1x32xf32>
      %41 = vector.broadcast %40 : vector<1x32xf32> to vector<16x32xf32>
      %42 = arith.addf %39, %41 : vector<16x32xf32>
      %43 = arith.truncf %42 : vector<16x32xf32> to vector<16x32xbf16>
      %c0_24 = arith.constant 0 : index
      %c0_25 = arith.constant 0 : index
      %44 = vector.load %arg8[%c0_24, %c0_25] : memref<16x32xbf16, #tpu.memory_space<vmem>>, vector<16x32xbf16>
      tpu.vector_store %arg8[%c0_24, %c0_25], %43 {strides = array<i32>} : memref<16x32xbf16, #tpu.memory_space<vmem>>, vector<16x32xbf16>,
    } else {
    }
    return
  }
  func.func @transform_0(%arg0: i32, %arg1: i32) -> (i32, i32) {
    %c0_i32 = arith.constant 0 : i32
    return %arg0, %arg1 : i32, i32
  }
  func.func @transform_1(%arg0: i32, %arg1: i32) -> (i32, i32) {
    %c0_i32 = arith.constant 0 : i32
    %c0_i32_0 = arith.constant 0 : i32
    return %arg1, %c0_i32 : i32, i32
  }
  func.func @transform_2(%arg0: i32, %arg1: i32) -> (i32, i32) {
    %c0_i32 = arith.constant 0 : i32
    %c0_i32_0 = arith.constant 0 : i32
    %c0_i32_1 = arith.constant 0 : i32
    return %c0_i32, %c0_i32_0 : i32, i32
  }
  func.func @transform_3(%arg0: i32, %arg1: i32) -> (i32, i32) {
    %c0_i32 = arith.constant 0 : i32
    %c0_i32_0 = arith.constant 0 : i32
    return %arg0, %c0_i32 : i32, i32
  }
  func.func @transform_4(%arg0: i32, %arg1: i32) -> (i32, i32) {
    %c0_i32 = arith.constant 0 : i32
    %c0_i32_0 = arith.constant 0 : i32
    %c0_i32_1 = arith.constant 0 : i32
    return %c0_i32, %c0_i32_0 : i32, i32
  }
  func.func @transform_5(%arg0: i32, %arg1: i32) -> (i32, i32) {
    %c0_i32 = arith.constant 0 : i32
    %c0_i32_0 = arith.constant 0 : i32
    %c0_i32_1 = arith.constant 0 : i32
    return %c0_i32, %c0_i32_0 : i32, i32
  }
  func.func @transform_6(%arg0: i32, %arg1: i32) -> (i32, i32) {
    %c0_i32 = arith.constant 0 : i32
    %c0_i32_0 = arith.constant 0 : i32
    return %arg0, %c0_i32 : i32, i32
  }
}

module attributes {stable_mosaic.version = 11 : i64} {
  func.func @_head_kernel(%arg0: i32, %arg1: memref<2x32xbf16, #tpu.memory_space<vmem>>, %arg2: memref<32x16xbf16, #tpu.memory_space<vmem>>, %arg3: memref<1x16xf32, #tpu.memory_space<vmem>>, %arg4: memref<1x16xf32, #tpu.memory_space<vmem>>, %arg5: memref<1x16xf32, #tpu.memory_space<vmem>>, %arg6: memref<16x4xbf16, #tpu.memory_space<vmem>>, %arg7: memref<1x4xf32, #tpu.memory_space<vmem>>, %arg8: memref<2x4xf32, #tpu.memory_space<vmem>>) attributes {dimension_semantics = [#tpu.dimension_semantics<parallel>], iteration_bounds = array<i64: 1>, scalar_prefetch = 0 : i64, scratch_operands = 0 : i64, tpu.core_type = #tpu.core_type<tc>, window_params = [{transform_indices = @transform_0, window_bounds = array<i64: 2, 32>}, {pipeline_mode = #tpu.pipeline_mode<synchronous>, transform_indices = @transform_1, window_bounds = array<i64: 32, 16>}, {pipeline_mode = #tpu.pipeline_mode<synchronous>, transform_indices = @transform_2, window_bounds = array<i64: 1, 16>}, {pipeline_mode = #tpu.pipeline_mode<synchronous>, transform_indices = @transform_3, window_bounds = array<i64: 1, 16>}, {pipeline_mode = #tpu.pipeline_mode<synchronous>, transform_indices = @transform_4, window_bounds = array<i64: 1, 16>}, {pipeline_mode = #tpu.pipeline_mode<synchronous>, transform_indices = @transform_5, window_bounds = array<i64: 16, 4>}, {pipeline_mode = #tpu.pipeline_mode<synchronous>, transform_indices = @transform_6, window_bounds = array<i64: 1, 4>}, {transform_indices = @transform_7, window_bounds = array<i64: 2, 4>}]} {
    %c0 = arith.constant 0 : index
    %c0_0 = arith.constant 0 : index
    %0 = vector.load %arg1[%c0, %c0_0] : memref<2x32xbf16, #tpu.memory_space<vmem>>, vector<2x32xbf16>
    %c0_1 = arith.constant 0 : index
    %c0_2 = arith.constant 0 : index
    %1 = vector.load %arg2[%c0_1, %c0_2] : memref<32x16xbf16, #tpu.memory_space<vmem>>, vector<32x16xbf16>
    %cst = arith.constant dense<0.000000e+00> : vector<2x16xf32>
    %2 = tpu.matmul %0, %1, %cst {dimension_numbers = #tpu.dot_dimension_numbers<[1], [0], [0], [1], [0, 0, 1, 1], [], []>} : vector<2x32xbf16>, vector<32x16xbf16>, vector<2x16xf32> -> vector<2x16xf32>
    %c0_3 = arith.constant 0 : index
    %c0_4 = arith.constant 0 : index
    %3 = vector.load %arg3[%c0_3, %c0_4] : memref<1x16xf32, #tpu.memory_space<vmem>>, vector<1x16xf32>
    %4 = vector.broadcast %3 : vector<1x16xf32> to vector<2x16xf32>
    %5 = arith.addf %2, %4 : vector<2x16xf32>
    %cst_5 = arith.constant dense<0.000000e+00> : vector<2xf32>
    %6 = vector.multi_reduction <add>, %5, %cst_5 [1] : vector<2x16xf32> to vector<2xf32>
    %7 = vector.shape_cast %6 : vector<2xf32> to vector<2x1xf32>
    %cst_6 = arith.constant 1.600000e+01 : f32
    %8 = vector.broadcast %cst_6 : f32 to vector<2x1xf32>
    %9 = arith.divf %7, %8 : vector<2x1xf32>
    %10 = vector.broadcast %9 : vector<2x1xf32> to vector<2x16xf32>
    %11 = arith.subf %5, %10 : vector<2x16xf32>
    %12 = arith.mulf %11, %11 : vector<2x16xf32>
    %cst_7 = arith.constant dense<0.000000e+00> : vector<2xf32>
    %13 = vector.multi_reduction <add>, %12, %cst_7 [1] : vector<2x16xf32> to vector<2xf32>
    %14 = vector.shape_cast %13 : vector<2xf32> to vector<2x1xf32>
    %cst_8 = arith.constant 1.600000e+01 : f32
    %15 = vector.broadcast %cst_8 : f32 to vector<2x1xf32>
    %16 = arith.divf %14, %15 : vector<2x1xf32>
    %17 = vector.broadcast %9 : vector<2x1xf32> to vector<2x16xf32>
    %18 = arith.subf %5, %17 : vector<2x16xf32>
    %cst_9 = arith.constant 9.99999974E-6 : f32
    %19 = vector.broadcast %cst_9 : f32 to vector<2x1xf32>
    %20 = arith.addf %16, %19 : vector<2x1xf32>
    %21 = math.rsqrt %20 : vector<2x1xf32>
    %22 = vector.broadcast %21 : vector<2x1xf32> to vector<2x16xf32>
    %23 = arith.mulf %18, %22 : vector<2x16xf32>
    %c0_10 = arith.constant 0 : index
    %c0_11 = arith.constant 0 : index
    %24 = vector.load %arg4[%c0_10, %c0_11] : memref<1x16xf32, #tpu.memory_space<vmem>>, vector<1x16xf32>
    %25 = vector.broadcast %24 : vector<1x16xf32> to vector<2x16xf32>
    %26 = arith.mulf %23, %25 : vector<2x16xf32>
    %c0_12 = arith.constant 0 : index
    %c0_13 = arith.constant 0 : index
    %27 = vector.load %arg5[%c0_12, %c0_13] : memref<1x16xf32, #tpu.memory_space<vmem>>, vector<1x16xf32>
    %28 = vector.broadcast %27 : vector<1x16xf32> to vector<2x16xf32>
    %29 = arith.addf %26, %28 : vector<2x16xf32>
    %cst_14 = arith.constant 0.000000e+00 : f32
    %30 = vector.broadcast %cst_14 : f32 to vector<2x16xf32>
    %31 = arith.maximumf %29, %30 : vector<2x16xf32>
    %32 = arith.truncf %31 : vector<2x16xf32> to vector<2x16xbf16>
    %c0_15 = arith.constant 0 : index
    %c0_16 = arith.constant 0 : index
    %33 = vector.load %arg6[%c0_15, %c0_16] : memref<16x4xbf16, #tpu.memory_space<vmem>>, vector<16x4xbf16>
    %cst_17 = arith.constant dense<0.000000e+00> : vector<2x4xf32>
    %34 = tpu.matmul %32, %33, %cst_17 {dimension_numbers = #tpu.dot_dimension_numbers<[1], [0], [0], [1], [0, 0, 1, 1], [], []>} : vector<2x16xbf16>, vector<16x4xbf16>, vector<2x4xf32> -> vector<2x4xf32>
    %c0_18 = arith.constant 0 : index
    %c0_19 = arith.constant 0 : index
    %35 = vector.load %arg7[%c0_18, %c0_19] : memref<1x4xf32, #tpu.memory_space<vmem>>, vector<1x4xf32>
    %36 = vector.broadcast %35 : vector<1x4xf32> to vector<2x4xf32>
    %37 = arith.addf %34, %36 : vector<2x4xf32>
    %c0_20 = arith.constant 0 : index
    %c0_21 = arith.constant 0 : index
    %38 = vector.load %arg8[%c0_20, %c0_21] : memref<2x4xf32, #tpu.memory_space<vmem>>, vector<2x4xf32>
    tpu.vector_store %arg8[%c0_20, %c0_21], %37 {strides = array<i32>} : memref<2x4xf32, #tpu.memory_space<vmem>>, vector<2x4xf32>,
    return
  }
  func.func @transform_0(%arg0: i32) -> (i32, i32) {
    %c0_i32 = arith.constant 0 : i32
    %c0_i32_0 = arith.constant 0 : i32
    return %arg0, %c0_i32 : i32, i32
  }
  func.func @transform_1(%arg0: i32) -> (i32, i32) {
    %c0_i32 = arith.constant 0 : i32
    %c0_i32_0 = arith.constant 0 : i32
    %c0_i32_1 = arith.constant 0 : i32
    return %c0_i32, %c0_i32_0 : i32, i32
  }
  func.func @transform_2(%arg0: i32) -> (i32, i32) {
    %c0_i32 = arith.constant 0 : i32
    %c0_i32_0 = arith.constant 0 : i32
    %c0_i32_1 = arith.constant 0 : i32
    return %c0_i32, %c0_i32_0 : i32, i32
  }
  func.func @transform_3(%arg0: i32) -> (i32, i32) {
    %c0_i32 = arith.constant 0 : i32
    %c0_i32_0 = arith.constant 0 : i32
    %c0_i32_1 = arith.constant 0 : i32
    return %c0_i32, %c0_i32_0 : i32, i32
  }
  func.func @transform_4(%arg0: i32) -> (i32, i32) {
    %c0_i32 = arith.constant 0 : i32
    %c0_i32_0 = arith.constant 0 : i32
    %c0_i32_1 = arith.constant 0 : i32
    return %c0_i32, %c0_i32_0 : i32, i32
  }
  func.func @transform_5(%arg0: i32) -> (i32, i32) {
    %c0_i32 = arith.constant 0 : i32
    %c0_i32_0 = arith.constant 0 : i32
    %c0_i32_1 = arith.constant 0 : i32
    return %c0_i32, %c0_i32_0 : i32, i32
  }
  func.func @transform_6(%arg0: i32) -> (i32, i32) {
    %c0_i32 = arith.constant 0 : i32
    %c0_i32_0 = arith.constant 0 : i32
    %c0_i32_1 = arith.constant 0 : i32
    return %c0_i32, %c0_i32_0 : i32, i32
  }
  func.func @transform_7(%arg0: i32) -> (i32, i32) {
    %c0_i32 = arith.constant 0 : i32
    %c0_i32_0 = arith.constant 0 : i32
    return %arg0, %c0_i32 : i32, i32
  }
}

</mosaic_0001>

<llo_original>
// kernel: transformer_forward.13
$region0: #{transformer_forward.13}
  #allocation0 [shape = 'u32[]', space=smem, size = 0x4, offset = 0x4, fixed_abs, tag = 'smem constant byte address 0x4 - core index']
  #allocation1 [shape = 'u32[144,128]{1,0:T(1,128)}', space=vmem, size = 0x12000, scoped, tag = 'internal scratch']
  #allocation2 [shape = 'f32[16,96]{1,0:T(8,128)}', space=vmem, size = 0x2000, scoped, tag = 'scratch operand']
  %s0 = inlined_call_operand.vmem [shape: bf16[16,32], index: 0, kind: input, shape index: {}]
  %s1 = inlined_call_operand.vmem [shape: bf16[32,96], index: 1, kind: input, shape index: {}]
  %s2 = inlined_call_operand.vmem [shape: f32[1,96], index: 2, kind: input, shape index: {}]
  %s3 = inlined_call_operand.vmem [shape: bf16[16,96], index: 3, kind: output, shape index: {}]
  %s4 = sld [smem:[#allocation0]]
  $region30: #{transformer_forward.13} parent=0
    _
  %s6 = ssub.s32 1, %s4
  %s7 = scalar_select 0, %s6, %s4
  // Predicated region
  $region2: #{transformer_forward.13} parent=0 // pred_check
    _
  $region3: #{transformer_forward.13} parent=0 // pred_check_branch
    %9 = sbr.rel (0) target = $region5
  $region4: #{transformer_forward.13} parent=0 // pred_region
    _
  $region5: #{transformer_forward.13} parent=0 // pred_fallthru
    _
  // Predicated region
  $region6: #{transformer_forward.13} parent=0 // pred_check
    _
  $region7: #{transformer_forward.13} parent=0 // pred_check_branch
    %11 = sbr.rel (0) target = $region9
  $region8: #{transformer_forward.13} parent=0 // pred_region
    _
  $region9: #{transformer_forward.13} parent=0 // pred_fallthru
    _
  // Predicated region
  $region10: #{transformer_forward.13} parent=0 // pred_check
    _
  $region11: #{transformer_forward.13} parent=0 // pred_check_branch
    %13 = sbr.rel (0) target = $region13
  $region12: #{transformer_forward.13} parent=0 // pred_region
    _
  $region13: #{transformer_forward.13} parent=0 // pred_fallthru
    _
  %p15 = scmp.eq.s32.totalorder 0, 0
  // Predicated region
  $region14: #{transformer_forward.13} parent=0 // pred_check
    %p16 = pneg %p15
  $region15: #{transformer_forward.13} parent=0 // pred_check_branch
    %18 = sbr.rel (%p16) target = $region17
  $region16: #{transformer_forward.13} parent=0 // pred_region
    %vm19 = vcmask 785408
    %20 = vst.msk [vmem:[#allocation2] sm:$0xff] %vm19, 0.0
    %21 = vst.msk [vmem:[#allocation2 + $0x8] sm:$0xff] %vm19, 0.0
  $region17: #{transformer_forward.13} parent=0 // pred_fallthru
    _
  %v22 = vld [vmem:[#allocation2] sm:$0xff]
  %v23 = vld [vmem:[#allocation2 + $0x8] sm:$0xff]
  %v24 = vld [vmem:[%s0] sm:$0xf]
  %v25 = vld [vmem:[%s0 + $0x4] sm:$0xf]
  %v26 = vld [vmem:[%s1] sm:$0xf]
  %v27 = vld [vmem:[%s1 + $0x4] sm:$0xf]
  %v28 = vld [vmem:[%s1 + $0x8] sm:$0xf]
  %v29 = vld [vmem:[%s1 + $0xc] sm:$0xf]
  %v32 = vunpack.c.l.b16 %v24
  %v33 = vunpack.c.l.b16 %v25
  %v34 = vpack.c.b16 %v33, %v32
  %v39 = vunpack.c.l.b16 %v26
  %v40 = vunpack.c.l.b16 %v27
  %v41 = vunpack.c.l.b16 %v28
  %v42 = vunpack.c.l.b16 %v29
  %v43 = vpack.c.b16 %v40, %v39
  %v44 = vpack.c.b16 %v42, %v41
  %vm47 = vcmask 261120
  %v49 = vsel %vm47, %v34, 0
  %51 = vmatprep.subr.bf16.mxu0 0
  %52 = vmatpush1.bf16.msra.mxu0 %v43
  %53 = vmatprep.subr.bf16.mxu0 0
  %54 = vmatpush1.bf16.msra.mxu0 %v44
  %55 = vmatprep.subr.bf16.mxu0 0
  %56 = vmatpush1.bf16.msra.mxu0 0
  %57 = vmatprep.subr.bf16.mxu0 0
  %58 = vmatpush1.bf16.msra.mxu0 0
  %59 = vmatprep.subr.bf16.mxu0 0
  %60 = vmatpush1.bf16.msra.mxu0 0
  %61 = vmatprep.subr.bf16.mxu0 0
  %62 = vmatpush1.bf16.msra.mxu0 0
  %63 = vmatprep.subr.bf16.mxu0 0
  %64 = vmatpush1.bf16.msra.mxu0 0
  %65 = vmatprep.subr.bf16.mxu0 0
  %66 = vmatpush1.bf16.msra.mxu0 0
  %67 = vmatprep.subr.bf16.mxu0 0
  %68 = vmatpush1.bf16.msra.mxu0 0
  %69 = vmatprep.subr.bf16.mxu0 0
  %70 = vmatpush1.bf16.msra.mxu0 0
  %71 = vmatprep.subr.bf16.mxu0 0
  %72 = vmatpush1.bf16.msra.mxu0 0
  %73 = vmatprep.subr.bf16.mxu0 0
  %74 = vmatpush1.bf16.msra.mxu0 0
  %75 = vmatprep.subr.bf16.mxu0 0
  %76 = vmatpush1.bf16.msra.mxu0 0
  %77 = vmatprep.subr.bf16.mxu0 0
  %78 = vmatpush1.bf16.msra.mxu0 0
  %79 = vmatprep.subr.bf16.mxu0 0
  %80 = vmatpush1.bf16.msra.mxu0 0
  %81 = vmatprep.subr.bf16.mxu0 0
  %82 = vmatpush1.bf16.msra.mxu0 0
  %83 = vmatprep.mubr.bf16.mxu0 0
  %84 = vmatmul.mubr.bf16.gmra.mrb[0].mxu0 %v49
  %v85 = vpop.f32.mrb[0].mxu0
  %v86 = vadd.f32 0.0, %v85
  %v87 = vpop.f32.mrb[0].mxu0
  %v88 = vpop.f32.mrb[0].mxu0
  %v89 = vadd.f32 0.0, %v88
  %v90 = vpop.f32.mrb[0].mxu0
  %91 = vdwg.mxu0
  %v92 = vadd.f32 %v22, %v86
  %v93 = vadd.f32 %v23, %v89
  %vm94 = vcmask 785408
  %95 = vst.msk [vmem:[#allocation2] sm:$0xff] %vm94, %v92
  %96 = vst.msk [vmem:[#allocation2 + $0x8] sm:$0xff] %vm94, %v93
  // Predicated region
  $region18: #{transformer_forward.13} parent=0 // pred_check
    %p97 = pneg %p15
  $region19: #{transformer_forward.13} parent=0 // pred_check_branch
    %99 = sbr.rel (%p97) target = $region21
  $region20: #{transformer_forward.13} parent=0 // pred_region
    %v100 = vld [vmem:[#allocation2] sm:$0xff]
    %v101 = vld [vmem:[#allocation2 + $0x8] sm:$0xff]
    %v102 = vld [vmem:[%s2] sm:$0x1]
    %v104 = vlaneseq
    %v105 = vshrl.u32 %v104, 7
    %v106 = vsub.s32 0, %v105
    %v107 = vrot.slane %v102, %v106
    %v109 = vadd.f32 %v100, %v107
    %v110 = vadd.f32 %v101, %v107
    %v111 = vpack.c.bf16 %v110, %v109
    %v113 = vunpack.c.l.b16 %v111
    %v114 = vunpack.c.h.b16 %v111
    %v115 = vpack.c.b16 %v113, %v113
    %v116 = vpack.c.b16 %v114, %v114
    %vm119 = vcmask 781312
    %120 = vst.msk [vmem:[%s3] sm:$0xf] %vm119, %v115
    %121 = vst.msk [vmem:[%s3 + $0x4] sm:$0xf] %vm119, %v116
  $region21: #{transformer_forward.13} parent=0 // pred_fallthru
    _
  // Predicated region
  $region22: #{transformer_forward.13} parent=0 // pred_check
    _
  $region23: #{transformer_forward.13} parent=0 // pred_check_branch
    %123 = sbr.rel (0) target = $region25
  $region24: #{transformer_forward.13} parent=0 // pred_region
    _
  $region25: #{transformer_forward.13} parent=0 // pred_fallthru
    _
  // Predicated region
  $region26: #{transformer_forward.13} parent=0 // pred_check
    _
  $region27: #{transformer_forward.13} parent=0 // pred_check_branch
    %125 = sbr.rel (0) target = $region29
  $region28: #{transformer_forward.13} parent=0 // pred_region
    _
  $region29: #{transformer_forward.13} parent=0 // pred_fallthru
    _

// kernel: transformer_forward.12
$region0: #{transformer_forward.12}
  #allocation0 [shape = 'u32[]', space=smem, size = 0x4, offset = 0x4, fixed_abs, tag = 'smem constant byte address 0x4 - core index']
  #allocation1 [shape = 'u32[144,128]{1,0:T(1,128)}', space=vmem, size = 0x12000, scoped, tag = 'internal scratch']
  #allocation2 [shape = 'f32[16,32]{1,0:T(8,128)}', space=vmem, size = 0x2000, scoped, tag = 'scratch operand']
  %s0 = inlined_call_operand.vmem [shape: bf16[16,16], index: 0, kind: input, shape index: {}]
  %s1 = inlined_call_operand.vmem [shape: bf16[16,32], index: 1, kind: input, shape index: {}]
  %s2 = inlined_call_operand.vmem [shape: f32[1,32], index: 2, kind: input, shape index: {}]
  %s3 = inlined_call_operand.vmem [shape: bf16[16,32], index: 3, kind: output, shape index: {}]
  %s4 = sld [smem:[#allocation0]]
  $region30: #{transformer_forward.12} parent=0
    _
  %s6 = ssub.s32 1, %s4
  %s7 = scalar_select 0, %s6, %s4
  // Predicated region
  $region2: #{transformer_forward.12} parent=0 // pred_check
    _
  $region3: #{transformer_forward.12} parent=0 // pred_check_branch
    %9 = sbr.rel (0) target = $region5
  $region4: #{transformer_forward.12} parent=0 // pred_region
    _
  $region5: #{transformer_forward.12} parent=0 // pred_fallthru
    _
  // Predicated region
  $region6: #{transformer_forward.12} parent=0 // pred_check
    _
  $region7: #{transformer_forward.12} parent=0 // pred_check_branch
    %11 = sbr.rel (0) target = $region9
  $region8: #{transformer_forward.12} parent=0 // pred_region
    _
  $region9: #{transformer_forward.12} parent=0 // pred_fallthru
    _
  // Predicated region
  $region10: #{transformer_forward.12} parent=0 // pred_check
    _
  $region11: #{transformer_forward.12} parent=0 // pred_check_branch
    %13 = sbr.rel (0) target = $region13
  $region12: #{transformer_forward.12} parent=0 // pred_region
    _
  $region13: #{transformer_forward.12} parent=0 // pred_fallthru
    _
  %p15 = scmp.eq.s32.totalorder 0, 0
  // Predicated region
  $region14: #{transformer_forward.12} parent=0 // pred_check
    %p16 = pneg %p15
  $region15: #{transformer_forward.12} parent=0 // pred_check_branch
    %18 = sbr.rel (%p16) target = $region17
  $region16: #{transformer_forward.12} parent=0 // pred_region
    %vm19 = vcmask 261120
    %20 = vst.msk [vmem:[#allocation2] sm:$0xff] %vm19, 0.0
    %21 = vst.msk [vmem:[#allocation2 + $0x8] sm:$0xff] %vm19, 0.0
  $region17: #{transformer_forward.12} parent=0 // pred_fallthru
    _
  %v22 = vld [vmem:[#allocation2] sm:$0xff]
  %v23 = vld [vmem:[#allocation2 + $0x8] sm:$0xff]
  %v24 = vld [vmem:[%s0] sm:$0xf]
  %v25 = vld [vmem:[%s0 + $0x4] sm:$0xf]
  %v26 = vld [vmem:[%s1] sm:$0xf]
  %v27 = vld [vmem:[%s1 + $0x4] sm:$0xf]
  %v30 = vunpack.c.l.b16 %v24
  %v31 = vunpack.c.l.b16 %v25
  %v32 = vpack.c.b16 %v31, %v30
  %v35 = vunpack.c.l.b16 %v26
  %v36 = vunpack.c.l.b16 %v27
  %v37 = vpack.c.b16 %v36, %v35
  %vm39 = vcmask 130048
  %v41 = vsel %vm39, %v32, 0
  %43 = vmatprep.subr.bf16.mxu0 0
  %44 = vmatpush1.bf16.msra.mxu0 %v37
  %45 = vmatprep.subr.bf16.mxu0 0
  %46 = vmatpush1.bf16.msra.mxu0 0
  %47 = vmatprep.subr.bf16.mxu0 0
  %48 = vmatpush1.bf16.msra.mxu0 0
  %49 = vmatprep.subr.bf16.mxu0 0
  %50 = vmatpush1.bf16.msra.mxu0 0
  %51 = vmatprep.subr.bf16.mxu0 0
  %52 = vmatpush1.bf16.msra.mxu0 0
  %53 = vmatprep.subr.bf16.mxu0 0
  %54 = vmatpush1.bf16.msra.mxu0 0
  %55 = vmatprep.subr.bf16.mxu0 0
  %56 = vmatpush1.bf16.msra.mxu0 0
  %57 = vmatprep.subr.bf16.mxu0 0
  %58 = vmatpush1.bf16.msra.mxu0 0
  %59 = vmatprep.subr.bf16.mxu0 0
  %60 = vmatpush1.bf16.msra.mxu0 0
  %61 = vmatprep.subr.bf16.mxu0 0
  %62 = vmatpush1.bf16.msra.mxu0 0
  %63 = vmatprep.subr.bf16.mxu0 0
  %64 = vmatpush1.bf16.msra.mxu0 0
  %65 = vmatprep.subr.bf16.mxu0 0
  %66 = vmatpush1.bf16.msra.mxu0 0
  %67 = vmatprep.subr.bf16.mxu0 0
  %68 = vmatpush1.bf16.msra.mxu0 0
  %69 = vmatprep.subr.bf16.mxu0 0
  %70 = vmatpush1.bf16.msra.mxu0 0
  %71 = vmatprep.subr.bf16.mxu0 0
  %72 = vmatpush1.bf16.msra.mxu0 0
  %73 = vmatprep.subr.bf16.mxu0 0
  %74 = vmatpush1.bf16.msra.mxu0 0
  %75 = vmatprep.mubr.bf16.mxu0 0
  %76 = vmatmul.mubr.bf16.gmra.mrb[0].mxu0 %v41
  %v77 = vpop.f32.mrb[0].mxu0
  %v78 = vadd.f32 0.0, %v77
  %v79 = vpop.f32.mrb[0].mxu0
  %v80 = vpop.f32.mrb[0].mxu0
  %v81 = vadd.f32 0.0, %v80
  %v82 = vpop.f32.mrb[0].mxu0
  %83 = vdwg.mxu0
  %v84 = vadd.f32 %v22, %v78
  %v85 = vadd.f32 %v23, %v81
  %vm86 = vcmask 261120
  %87 = vst.msk [vmem:[#allocation2] sm:$0xff] %vm86, %v84
  %88 = vst.msk [vmem:[#allocation2 + $0x8] sm:$0xff] %vm86, %v85
  // Predicated region
  $region18: #{transformer_forward.12} parent=0 // pred_check
    %p89 = pneg %p15
  $region19: #{transformer_forward.12} parent=0 // pred_check_branch
    %91 = sbr.rel (%p89) target = $region21
  $region20: #{transformer_forward.12} parent=0 // pred_region
    %v92 = vld [vmem:[#allocation2] sm:$0xff]
    %v93 = vld [vmem:[#allocation2 + $0x8] sm:$0xff]
    %v94 = vld [vmem:[%s2] sm:$0x1]
    %v96 = vlaneseq
    %v97 = vshrl.u32 %v96, 7
    %v98 = vsub.s32 0, %v97
    %v99 = vrot.slane %v94, %v98
    %v101 = vadd.f32 %v92, %v99
    %v102 = vadd.f32 %v93, %v99
    %v103 = vpack.c.bf16 %v102, %v101
    %v105 = vunpack.c.l.b16 %v103
    %v106 = vunpack.c.h.b16 %v103
    %v107 = vpack.c.b16 %v105, %v105
    %v108 = vpack.c.b16 %v106, %v106
    %vm111 = vcmask 257024
    %112 = vst.msk [vmem:[%s3] sm:$0xf] %vm111, %v107
    %113 = vst.msk [vmem:[%s3 + $0x4] sm:$0xf] %vm111, %v108
  $region21: #{transformer_forward.12} parent=0 // pred_fallthru
    _
  // Predicated region
  $region22: #{transformer_forward.12} parent=0 // pred_check
    _
  $region23: #{transformer_forward.12} parent=0 // pred_check_branch
    %115 = sbr.rel (0) target = $region25
  $region24: #{transformer_forward.12} parent=0 // pred_region
    _
  $region25: #{transformer_forward.12} parent=0 // pred_fallthru
    _
  // Predicated region
  $region26: #{transformer_forward.12} parent=0 // pred_check
    _
  $region27: #{transformer_forward.12} parent=0 // pred_check_branch
    %117 = sbr.rel (0) target = $region29
  $region28: #{transformer_forward.12} parent=0 // pred_region
    _
  $region29: #{transformer_forward.12} parent=0 // pred_fallthru
    _

// kernel: transformer_forward.14
$region0: #{transformer_forward.14}
  #allocation0 [shape = 'u32[]', space=smem, size = 0x4, offset = 0x4, fixed_abs, tag = 'smem constant byte address 0x4 - core index']
  #allocation1 [shape = 'u32[144,128]{1,0:T(1,128)}', space=vmem, size = 0x12000, scoped, tag = 'internal scratch']
  #allocation2 [shape = 'f32[8,1]{1,0:T(8,128)}', space=vmem, size = 0x1000, scoped, tag = 'scratch operand']
  #allocation3 [shape = 'f32[8,1]{1,0:T(8,128)}', space=vmem, size = 0x1000, scoped, tag = 'scratch operand']
  #allocation4 [shape = 'f32[8,8]{1,0:T(8,128)}', space=vmem, size = 0x1000, scoped, tag = 'scratch operand']
  %s0 = inlined_call_operand.vmem [shape: bf16[2,4,8,8], index: 0, kind: input, shape index: {}]
  %s1 = inlined_call_operand.vmem [shape: bf16[2,4,8,8], index: 1, kind: input, shape index: {}]
  %s2 = inlined_call_operand.vmem [shape: bf16[2,4,8,8], index: 2, kind: input, shape index: {}]
  %s3 = inlined_call_operand.vmem [shape: bf16[2,4,8,8], index: 3, kind: output, shape index: {}]
  %s4 = sld [smem:[#allocation0]]
  $region53: #{transformer_forward.14} parent=0
    _
  %s6 = ssub.s32 1, %s4
  %s7 = scalar_select 0, %s6, %s4
  loop: start=0, step=1, limit=10
  $region2: #{transformer_forward.14} parent=0 // loop_pre_header
    _
  $region3: #{transformer_forward.14} parent=0 // loop_header
    %s9 = sphi 0, %s13
    %p10 = scmp.ge.s32.totalorder %s9, 10
    %s16 = sphi 0, %s42
    %s17 = sphi 0, %s38
    %s18 = sphi 0, %s34
    %s19 = sphi 0, %s30
    %s20 = sphi 0, %s16
    %s21 = sphi 0, %s17
    %s22 = sphi 0, %s18
    %s23 = sphi 0, %s19
    %s24 = sphi 0, %s20
    %s25 = sphi 0, %s21
    %s26 = sphi 0, %s22
    %s27 = sphi 0, %s23
    %s49 = sphi 0, %s51
    %s52 = sphi 0, %s49
    %s53 = sphi 0, %s52
    %s69 = sphi 0, %s53
    %s79 = sphi 0, %s81
    %s82 = sphi 0, %s79
    %s83 = sphi 0, %s82
    %s99 = sphi 0, %s83
    %s109 = sphi 0, %s111
    %s112 = sphi 0, %s109
    %s113 = sphi 0, %s112
    %s129 = sphi 0, %s113
    %s139 = sphi 0, %s141
    %s142 = sphi 0, %s139
    %s143 = sphi 0, %s142
    %s159 = sphi 0, %s143
  $region4: #{transformer_forward.14} parent=0 // loop_header_branch
    %12 = sbr.rel (%p10) target = $region8
  $region5: #{transformer_forward.14} parent=0 // loop_body
    %s14 = ssub.s32 %s9, 1
    %s15 = ssub.s32 %s9, 2
    %s28 = sadd.s32 1, %s19
    %p29 = scmp.ge.s32.totalorder %s28, 1
    %s30 = scalar_select %p29, 0, %s28
    %s31 = sadd.s32 1, %s18
    %s32 = scalar_select %p29, %s31, %s18
    %p33 = scmp.ge.s32.totalorder %s32, 1
    %s34 = scalar_select %p33, 0, %s32
    %s35 = sadd.s32 1, %s17
    %s36 = scalar_select %p33, %s35, %s17
    %p37 = scmp.ge.s32.totalorder %s36, 4
    %s38 = scalar_select %p37, 0, %s36
    %s39 = sadd.s32 1, %s16
    %s40 = scalar_select %p37, %s39, %s16
    %p41 = scmp.ge.s32.totalorder %s40, 2
    %s42 = scalar_select %p41, 0, %s40
    %s43 = ssub.s32 %s16, %s42
    %s44 = ssub.s32 %s17, %s38
    %s45 = sor.u32 %s43, %s44
    %s46 = ssub.s32 %s18, %s34
    %s47 = sor.u32 %s45, %s46
    %p48 = scmp.eq.s32.totalorder %s47, 0
    %s50 = sadd.s32 %s49, 1
    %s51 = scalar_select %p48, %s49, %s50
    %p54 = pneg %p48
    %p55 = scmp.eq.s32.totalorder %s9, 7
    %p56 = por %p54, %p55
    %p57 = scmp.ne.s32.totalorder %s49, %s52
    %p58 = scmp.eq.s32.totalorder %s9, 0
    %p59 = por %p57, %p58
    %p60 = scmp.ne.s32.totalorder %s49, %s52
    %p61 = scmp.eq.s32.totalorder %s14, 7
    %p62 = por %p60, %p61
    %p63 = scmp.ne.s32.totalorder %s52, %s53
    %p64 = scmp.eq.s32.totalorder %s14, 0
    %p65 = por %p63, %p64
    %p66 = scmp.ne.s32.totalorder %s52, %s53
    %p67 = scmp.eq.s32.totalorder %s15, 7
    %p68 = por %p66, %p67
    %p70 = scmp.ne.s32.totalorder %s53, %s69
    %p71 = scmp.eq.s32.totalorder %s15, 0
    %p72 = por %p70, %p71
    %s73 = ssub.s32 %s16, %s42
    %s74 = ssub.s32 %s17, %s38
    %s75 = sor.u32 %s73, %s74
    %s76 = ssub.s32 %s19, %s30
    %s77 = sor.u32 %s75, %s76
    %p78 = scmp.eq.s32.totalorder %s77, 0
    %s80 = sadd.s32 %s79, 1
    %s81 = scalar_select %p78, %s79, %s80
    %p84 = pneg %p78
    %p85 = scmp.eq.s32.totalorder %s9, 7
    %p86 = por %p84, %p85
    %p87 = scmp.ne.s32.totalorder %s79, %s82
    %p88 = scmp.eq.s32.totalorder %s9, 0
    %p89 = por %p87, %p88
    %p90 = scmp.ne.s32.totalorder %s79, %s82
    %p91 = scmp.eq.s32.totalorder %s14, 7
    %p92 = por %p90, %p91
    %p93 = scmp.ne.s32.totalorder %s82, %s83
    %p94 = scmp.eq.s32.totalorder %s14, 0
    %p95 = por %p93, %p94
    %p96 = scmp.ne.s32.totalorder %s82, %s83
    %p97 = scmp.eq.s32.totalorder %s15, 7
    %p98 = por %p96, %p97
    %p100 = scmp.ne.s32.totalorder %s83, %s99
    %p101 = scmp.eq.s32.totalorder %s15, 0
    %p102 = por %p100, %p101
    %s103 = ssub.s32 %s16, %s42
    %s104 = ssub.s32 %s17, %s38
    %s105 = sor.u32 %s103, %s104
    %s106 = ssub.s32 %s19, %s30
    %s107 = sor.u32 %s105, %s106
    %p108 = scmp.eq.s32.totalorder %s107, 0
    %s110 = sadd.s32 %s109, 1
    %s111 = scalar_select %p108, %s109, %s110
    %p114 = pneg %p108
    %p115 = scmp.eq.s32.totalorder %s9, 7
    %p116 = por %p114, %p115
    %p117 = scmp.ne.s32.totalorder %s109, %s112
    %p118 = scmp.eq.s32.totalorder %s9, 0
    %p119 = por %p117, %p118
    %p120 = scmp.ne.s32.totalorder %s109, %s112
    %p121 = scmp.eq.s32.totalorder %s14, 7
    %p122 = por %p120, %p121
    %p123 = scmp.ne.s32.totalorder %s112, %s113
    %p124 = scmp.eq.s32.totalorder %s14, 0
    %p125 = por %p123, %p124
    %p126 = scmp.ne.s32.totalorder %s112, %s113
    %p127 = scmp.eq.s32.totalorder %s15, 7
    %p128 = por %p126, %p127
    %p130 = scmp.ne.s32.totalorder %s113, %s129
    %p131 = scmp.eq.s32.totalorder %s15, 0
    %p132 = por %p130, %p131
    %s133 = ssub.s32 %s16, %s42
    %s134 = ssub.s32 %s17, %s38
    %s135 = sor.u32 %s133, %s134
    %s136 = ssub.s32 %s18, %s34
    %s137 = sor.u32 %s135, %s136
    %p138 = scmp.eq.s32.totalorder %s137, 0
    %s140 = sadd.s32 %s139, 1
    %s141 = scalar_select %p138, %s139, %s140
    %p144 = pneg %p138
    %p145 = scmp.eq.s32.totalorder %s9, 7
    %p146 = por %p144, %p145
    %p147 = scmp.ne.s32.totalorder %s139, %s142
    %p148 = scmp.eq.s32.totalorder %s9, 0
    %p149 = por %p147, %p148
    %p150 = scmp.ne.s32.totalorder %s139, %s142
    %p151 = scmp.eq.s32.totalorder %s14, 7
    %p152 = por %p150, %p151
    %p153 = scmp.ne.s32.totalorder %s142, %s143
    %p154 = scmp.eq.s32.totalorder %s14, 0
    %p155 = por %p153, %p154
    %p156 = scmp.ne.s32.totalorder %s142, %s143
    %p157 = scmp.eq.s32.totalorder %s15, 7
    %p158 = por %p156, %p157
    %p160 = scmp.ne.s32.totalorder %s143, %s159
    %p161 = scmp.eq.s32.totalorder %s15, 0
    %p162 = por %p160, %p161
    %p163 = scmp.le.s32.totalorder 1, %s9
    %p164 = scmp.lt.s32.totalorder %s9, 9
    %p165 = pnand %p163, %p164
    %p166 = pneg %p165
    // Predicated region
    $region9: #{transformer_forward.14} parent=5 // pred_check
      _
    $region10: #{transformer_forward.14} parent=5 // pred_check_branch
      %168 = sbr.rel (%p165) target = $region12
    $region11: #{transformer_forward.14} parent=5 // pred_region
      %s169 = ssub.s32 %s9, 1
    $region12: #{transformer_forward.14} parent=5 // pred_fallthru
      _
    %p170 = scmp.lt.s32.totalorder %s9, 8
    // Predicated region
    $region13: #{transformer_forward.14} parent=5 // pred_check
      %p171 = pneg %p170
    $region14: #{transformer_forward.14} parent=5 // pred_check_branch
      %173 = sbr.rel (%p171) target = $region16
    $region15: #{transformer_forward.14} parent=5 // pred_region
      // Predicated region
      $region17: #{transformer_forward.14} parent=15 // pred_check
        %p174 = pneg %p59
      $region18: #{transformer_forward.14} parent=15 // pred_check_branch
        %176 = sbr.rel (%p174) target = $region20
      $region19: #{transformer_forward.14} parent=15 // pred_region
        %p177 = scmp.lt.s32.totalorder %s16, 1
        %s178 = scalar_select %p177, %s16, 1
        %p179 = scmp.lt.s32.totalorder %s17, 3
        %s180 = scalar_select %p179, %s17, 3
        %p181 = scmp.lt.s32.totalorder %s18, 0
        %s182 = scalar_select %p181, %s18, 0
        %s183 = sadd.s32 %s182, %s180
        %s184 = smul.addr %s178, 4
        %s185 = sadd.s32 %s183, %s184
        %s186 = smul.addr %s185, 4
        %s187 = scalar_lea.vmem %s0, %s186
      $region20: #{transformer_forward.14} parent=15 // pred_fallthru
        _
      // Predicated region
      $region21: #{transformer_forward.14} parent=15 // pred_check
        %p188 = pneg %p89
      $region22: #{transformer_forward.14} parent=15 // pred_check_branch
        %190 = sbr.rel (%p188) target = $region24
      $region23: #{transformer_forward.14} parent=15 // pred_region
        %p191 = scmp.lt.s32.totalorder %s16, 1
        %s192 = scalar_select %p191, %s16, 1
        %p193 = scmp.lt.s32.totalorder %s17, 3
        %s194 = scalar_select %p193, %s17, 3
        %p195 = scmp.lt.s32.totalorder %s19, 0
        %s196 = scalar_select %p195, %s19, 0
        %s197 = sadd.s32 %s196, %s194
        %s198 = smul.addr %s192, 4
        %s199 = sadd.s32 %s197, %s198
        %s200 = smul.addr %s199, 4
        %s201 = scalar_lea.vmem %s1, %s200
      $region24: #{transformer_forward.14} parent=15 // pred_fallthru
        _
      // Predicated region
      $region25: #{transformer_forward.14} parent=15 // pred_check
        %p202 = pneg %p119
      $region26: #{transformer_forward.14} parent=15 // pred_check_branch
        %204 = sbr.rel (%p202) target = $region28
      $region27: #{transformer_forward.14} parent=15 // pred_region
        %p205 = scmp.lt.s32.totalorder %s16, 1
        %s206 = scalar_select %p205, %s16, 1
        %p207 = scmp.lt.s32.totalorder %s17, 3
        %s208 = scalar_select %p207, %s17, 3
        %p209 = scmp.lt.s32.totalorder %s19, 0
        %s210 = scalar_select %p209, %s19, 0
        %s211 = sadd.s32 %s210, %s208
        %s212 = smul.addr %s206, 4
        %s213 = sadd.s32 %s211, %s212
        %s214 = smul.addr %s213, 4
        %s215 = scalar_lea.vmem %s2, %s214
      $region28: #{transformer_forward.14} parent=15 // pred_fallthru
        _
    $region16: #{transformer_forward.14} parent=5 // pred_fallthru
      _
    %p216 = scmp.le.s32.totalorder 1, %s9
    %p217 = scmp.lt.s32.totalorder %s9, 9
    %p218 = pnand %p216, %p217
    %p219 = pneg %p218
    // Predicated region
    $region29: #{transformer_forward.14} parent=5 // pred_check
      _
    $region30: #{transformer_forward.14} parent=5 // pred_check_branch
      %221 = sbr.rel (%p218) target = $region32
    $region31: #{transformer_forward.14} parent=5 // pred_region
      %s222 = ssub.s32 %s9, 1
      %p223 = scmp.lt.s32.totalorder %s20, 1
      %s224 = scalar_select %p223, %s20, 1
      %p225 = scmp.lt.s32.totalorder %s21, 3
      %s226 = scalar_select %p225, %s21, 3
      %p227 = scmp.lt.s32.totalorder %s22, 0
      %s228 = scalar_select %p227, %s22, 0
      %s229 = sadd.s32 %s228, %s226
      %s230 = smul.addr %s224, 4
      %s231 = sadd.s32 %s229, %s230
      %s232 = smul.addr %s231, 4
      %s233 = scalar_lea.vmem %s0, %s232
      %p234 = pneg %p65
      %p235 = pneg %p62
      %p236 = scmp.lt.s32.totalorder %s20, 1
      %s237 = scalar_select %p236, %s20, 1
      %p238 = scmp.lt.s32.totalorder %s21, 3
      %s239 = scalar_select %p238, %s21, 3
      %p240 = scmp.lt.s32.totalorder %s23, 0
      %s241 = scalar_select %p240, %s23, 0
      %s242 = sadd.s32 %s241, %s239
      %s243 = smul.addr %s237, 4
      %s244 = sadd.s32 %s242, %s243
      %s245 = smul.addr %s244, 4
      %s246 = scalar_lea.vmem %s1, %s245
      %p247 = pneg %p95
      %p248 = pneg %p92
      %p249 = scmp.lt.s32.totalorder %s20, 1
      %s250 = scalar_select %p249, %s20, 1
      %p251 = scmp.lt.s32.totalorder %s21, 3
      %s252 = scalar_select %p251, %s21, 3
      %p253 = scmp.lt.s32.totalorder %s23, 0
      %s254 = scalar_select %p253, %s23, 0
      %s255 = sadd.s32 %s254, %s252
      %s256 = smul.addr %s250, 4
      %s257 = sadd.s32 %s255, %s256
      %s258 = smul.addr %s257, 4
      %s259 = scalar_lea.vmem %s2, %s258
      %p260 = pneg %p125
      %p261 = pneg %p122
      %p262 = pneg %p155
      %p263 = pneg %p152
      %p264 = scmp.lt.s32.totalorder %s20, 1
      %s265 = scalar_select %p264, %s20, 1
      %p266 = scmp.lt.s32.totalorder %s21, 3
      %s267 = scalar_select %p266, %s21, 3
      %p268 = scmp.lt.s32.totalorder %s22, 0
      %s269 = scalar_select %p268, %s22, 0
      %s270 = sadd.s32 %s269, %s267
      %s271 = smul.addr %s265, 4
      %s272 = sadd.s32 %s270, %s271
      %s273 = smul.addr %s272, 4
      %s274 = scalar_lea.vmem %s3, %s273
      %p275 = scmp.lt.s32.totalorder %s20, 1
      %s276 = scalar_select %p275, %s20, 1
      %p277 = scmp.lt.s32.totalorder %s21, 3
      %s278 = scalar_select %p277, %s21, 3
      %p279 = scmp.lt.s32.totalorder %s22, 0
      %s280 = scalar_select %p279, %s22, 0
      %s281 = sadd.s32 %s280, %s278
      %s282 = smul.addr %s276, 4
      %s283 = sadd.s32 %s281, %s282
      %s284 = smul.addr %s283, 4
      %s285 = scalar_lea.vmem %s0, %s284
      %p286 = scmp.lt.s32.totalorder %s20, 1
      %s287 = scalar_select %p286, %s20, 1
      %p288 = scmp.lt.s32.totalorder %s21, 3
      %s289 = scalar_select %p288, %s21, 3
      %p290 = scmp.lt.s32.totalorder %s23, 0
      %s291 = scalar_select %p290, %s23, 0
      %s292 = sadd.s32 %s291, %s289
      %s293 = smul.addr %s287, 4
      %s294 = sadd.s32 %s292, %s293
      %s295 = smul.addr %s294, 4
      %s296 = scalar_lea.vmem %s1, %s295
      %p297 = scmp.lt.s32.totalorder %s20, 1
      %s298 = scalar_select %p297, %s20, 1
      %p299 = scmp.lt.s32.totalorder %s21, 3
      %s300 = scalar_select %p299, %s21, 3
      %p301 = scmp.lt.s32.totalorder %s23, 0
      %s302 = scalar_select %p301, %s23, 0
      %s303 = sadd.s32 %s302, %s300
      %s304 = smul.addr %s298, 4
      %s305 = sadd.s32 %s303, %s304
      %s306 = smul.addr %s305, 4
      %s307 = scalar_lea.vmem %s2, %s306
      %p308 = scmp.lt.s32.totalorder %s20, 1
      %s309 = scalar_select %p308, %s20, 1
      %p310 = scmp.lt.s32.totalorder %s21, 3
      %s311 = scalar_select %p310, %s21, 3
      %p312 = scmp.lt.s32.totalorder %s22, 0
      %s313 = scalar_select %p312, %s22, 0
      %s314 = sadd.s32 %s313, %s311
      %s315 = smul.addr %s309, 4
      %s316 = sadd.s32 %s314, %s315
      %s317 = smul.addr %s316, 4
      %s318 = scalar_lea.vmem %s3, %s317
      %p320 = scmp.eq.s32.totalorder %s23, 0
      // Predicated region
      $region33: #{transformer_forward.14} parent=31 // pred_check
        %p321 = pneg %p320
      $region34: #{transformer_forward.14} parent=31 // pred_check_branch
        %323 = sbr.rel (%p321) target = $region36
      $region35: #{transformer_forward.14} parent=31 // pred_region
        %vm324 = vcmask 7168
        %325 = vst.msk [vmem:[#allocation2] sm:$0xff] %vm324, -inf
        %326 = vst.msk [vmem:[#allocation3] sm:$0xff] %vm324, 0.0
        %vm327 = vcmask 64512
        %328 = vst.msk [vmem:[#allocation4] sm:$0xff] %vm327, 0.0
      $region36: #{transformer_forward.14} parent=31 // pred_fallthru
        _
      %v329 = vld [vmem:[%s285] sm:$0xf]
      %v330 = vld [vmem:[%s296] sm:$0xf]
      %v331 = vld [vmem:[%s307] sm:$0xf]
      %vm332 = vcmask 64512
      %v334 = vsel %vm332, %v329, 0
      %vm336 = vcmask 1043456
      %v338 = vsel %vm336, %v330, 0
      %340 = vmatprep.subr.bf16.mxu0 0
      %341 = vmatpush1.bf16.msra.mxu0 %v338
      %342 = vmatprep.subr.bf16.mxu0 0
      %343 = vmatpush1.bf16.msra.mxu0 0
      %344 = vmatprep.subr.bf16.mxu0 0
      %345 = vmatpush1.bf16.msra.mxu0 0
      %346 = vmatprep.subr.bf16.mxu0 0
      %347 = vmatpush1.bf16.msra.mxu0 0
      %348 = vmatprep.subr.bf16.mxu0 0
      %349 = vmatpush1.bf16.msra.mxu0 0
      %350 = vmatprep.subr.bf16.mxu0 0
      %351 = vmatpush1.bf16.msra.mxu0 0
      %352 = vmatprep.subr.bf16.mxu0 0
      %353 = vmatpush1.bf16.msra.mxu0 0
      %354 = vmatprep.subr.bf16.mxu0 0
      %355 = vmatpush1.bf16.msra.mxu0 0
      %356 = vmatprep.subr.bf16.mxu0 0
      %357 = vmatpush1.bf16.msra.mxu0 0
      %358 = vmatprep.subr.bf16.mxu0 0
      %359 = vmatpush1.bf16.msra.mxu0 0
      %360 = vmatprep.subr.bf16.mxu0 0
      %361 = vmatpush1.bf16.msra.mxu0 0
      %362 = vmatprep.subr.bf16.mxu0 0
      %363 = vmatpush1.bf16.msra.mxu0 0
      %364 = vmatprep.subr.bf16.mxu0 0
      %365 = vmatpush1.bf16.msra.mxu0 0
      %366 = vmatprep.subr.bf16.mxu0 0
      %367 = vmatpush1.bf16.msra.mxu0 0
      %368 = vmatprep.subr.bf16.mxu0 0
      %369 = vmatpush1.bf16.msra.mxu0 0
      %370 = vmatprep.subr.bf16.mxu0 0
      %371 = vmatpush1.bf16.msra.mxu0 0
      %372 = vmatprep.mubr.bf16.mxu0 0
      %373 = vmatmul.mubr.bf16.gmra.mrb[0].mxu0 %v334
      %v374 = vpop.f32.mrb[0].mxu0
      %v375 = vadd.f32 0.0, %v374
      %v376 = vpop.f32.mrb[0].mxu0
      %v377 = vpop.f32.mrb[0].mxu0
      %v378 = vpop.f32.mrb[0].mxu0
      %379 = vdwg.mxu0
      %v380 = vmul.f32 %v375, 0.35355338
      %v381 = vld [vmem:[#allocation2] sm:$0xff]
      %v382 = vsel %vm332, %v380, -inf
      %383 = vmax.xlane.f32.xlu0 %v382
      %v384 = vpop.xlane.xlu0 %383
      %v385 = vmax.f32 %v381, %v384
      %v386 = vsub.f32 %v381, %v385
      %v387 = vmul.f32 %v386, 1.442695
      %v388 = vpow.pop %v387
      %390 = vset.pattern.permute.xlu0 0
      %391 = vperm.xlu0 %390, %v385
      %v392 = vpop.permute.xlu0 %391
      %v394 = vsub.f32 %v380, %v392
      %v395 = vmul.f32 %v394, 1.442695
      %v396 = vpow.pop %v395
      %v397 = vld [vmem:[#allocation3] sm:$0xff]
      %v398 = vmul.f32 %v388, %v397
      %v399 = vsel %vm332, %v396, 0.0
      %400 = vadd.xlane.f32.xlu0 %v399
      %v401 = vpop.xlane.xlu0 %400
      %v402 = vadd.f32 %v398, %v401
      %vm403 = vcmask 7168
      %404 = vst.msk [vmem:[#allocation3] sm:$0xff] %vm403, %v402
      %v405 = vld [vmem:[#allocation4] sm:$0xff]
      %407 = vset.pattern.permute.xlu0 0
      %408 = vperm.xlu0 %407, %v388
      %v409 = vpop.permute.xlu0 %408
      %v411 = vmul.f32 %v409, %v405
      %v412 = vpack.c.bf16 %v396, %v396
      %v414 = vsel %vm332, %v412, 0
      %v417 = vsel %vm336, %v331, 0
      %419 = vmatprep.subr.bf16.mxu0 0
      %420 = vmatpush1.bf16.msra.mxu0 %v417
      %421 = vmatprep.subr.bf16.mxu0 0
      %422 = vmatpush1.bf16.msra.mxu0 0
      %423 = vmatprep.subr.bf16.mxu0 0
      %424 = vmatpush1.bf16.msra.mxu0 0
      %425 = vmatprep.subr.bf16.mxu0 0
      %426 = vmatpush1.bf16.msra.mxu0 0
      %427 = vmatprep.subr.bf16.mxu0 0
      %428 = vmatpush1.bf16.msra.mxu0 0
      %429 = vmatprep.subr.bf16.mxu0 0
      %430 = vmatpush1.bf16.msra.mxu0 0
      %431 = vmatprep.subr.bf16.mxu0 0
      %432 = vmatpush1.bf16.msra.mxu0 0
      %433 = vmatprep.subr.bf16.mxu0 0
      %434 = vmatpush1.bf16.msra.mxu0 0
      %435 = vmatprep.subr.bf16.mxu0 0
      %436 = vmatpush1.bf16.msra.mxu0 0
      %437 = vmatprep.subr.bf16.mxu0 0
      %438 = vmatpush1.bf16.msra.mxu0 0
      %439 = vmatprep.subr.bf16.mxu0 0
      %440 = vmatpush1.bf16.msra.mxu0 0
      %441 = vmatprep.subr.bf16.mxu0 0
      %442 = vmatpush1.bf16.msra.mxu0 0
      %443 = vmatprep.subr.bf16.mxu0 0
      %444 = vmatpush1.bf16.msra.mxu0 0
      %445 = vmatprep.subr.bf16.mxu0 0
      %446 = vmatpush1.bf16.msra.mxu0 0
      %447 = vmatprep.subr.bf16.mxu0 0
      %448 = vmatpush1.bf16.msra.mxu0 0
      %449 = vmatprep.subr.bf16.mxu0 0
      %450 = vmatpush1.bf16.msra.mxu0 0
      %451 = vmatprep.mubr.bf16.mxu0 0
      %452 = vmatmul.mubr.bf16.gmra.mrb[0].mxu0 %v414
      %v453 = vpop.f32.mrb[0].mxu0
      %v454 = vadd.f32 0.0, %v453
      %v455 = vpop.f32.mrb[0].mxu0
      %v456 = vpop.f32.mrb[0].mxu0
      %v457 = vpop.f32.mrb[0].mxu0
      %458 = vdwg.mxu0
      %v459 = vadd.f32 %v411, %v454
      %460 = vst.msk [vmem:[#allocation4] sm:$0xff] %vm332, %v459
      %461 = vst.msk [vmem:[#allocation2] sm:$0xff] %vm403, %v385
      // Predicated region
      $region37: #{transformer_forward.14} parent=31 // pred_check
        %p462 = pneg %p320
      $region38: #{transformer_forward.14} parent=31 // pred_check_branch
        %464 = sbr.rel (%p462) target = $region40
      $region39: #{transformer_forward.14} parent=31 // pred_region
        %v465 = vld [vmem:[#allocation4] sm:$0xff]
        %v466 = vld [vmem:[#allocation3] sm:$0xff]
        %v467 = vrcp.pop %v466
        %469 = vset.pattern.permute.xlu0 0
        %470 = vperm.xlu0 %469, %v467
        %v471 = vpop.permute.xlu0 %470
        %v473 = vmul.f32 %v465, %v471
        %v474 = vpack.c.bf16 %v473, %v473
        %vm475 = vcmask 60416
        %476 = vst.msk [vmem:[%s318] sm:$0xf] %vm475, %v474
      $region40: #{transformer_forward.14} parent=31 // pred_fallthru
        _
      %p477 = scmp.lt.s32.totalorder %s20, 1
      %s478 = scalar_select %p477, %s20, 1
      %p479 = scmp.lt.s32.totalorder %s21, 3
      %s480 = scalar_select %p479, %s21, 3
      %p481 = scmp.lt.s32.totalorder %s22, 0
      %s482 = scalar_select %p481, %s22, 0
      %s483 = sadd.s32 %s482, %s480
      %s484 = smul.addr %s478, 4
      %s485 = sadd.s32 %s483, %s484
      %s486 = smul.addr %s485, 4
      %s487 = scalar_lea.vmem %s3, %s486
      // Predicated region
      $region41: #{transformer_forward.14} parent=31 // pred_check
        %p488 = pneg %p152
      $region42: #{transformer_forward.14} parent=31 // pred_check_branch
        %490 = sbr.rel (%p488) target = $region44
      $region43: #{transformer_forward.14} parent=31 // pred_region
        _
      $region44: #{transformer_forward.14} parent=31 // pred_fallthru
        _
    $region32: #{transformer_forward.14} parent=5 // pred_fallthru
      _
    %p491 = scmp.le.s32.totalorder 2, %s9
    // Predicated region
    $region45: #{transformer_forward.14} parent=5 // pred_check
      %p492 = pneg %p491
    $region46: #{transformer_forward.14} parent=5 // pred_check_branch
      %494 = sbr.rel (%p492) target = $region48
    $region47: #{transformer_forward.14} parent=5 // pred_region
      %s495 = ssub.s32 %s9, 2
      // Predicated region
      $region49: #{transformer_forward.14} parent=47 // pred_check
        %p496 = pneg %p158
      $region50: #{transformer_forward.14} parent=47 // pred_check_branch
        %498 = sbr.rel (%p496) target = $region52
      $region51: #{transformer_forward.14} parent=47 // pred_region
        %p499 = scmp.lt.s32.totalorder %s24, 1
        %s500 = scalar_select %p499, %s24, 1
        %p501 = scmp.lt.s32.totalorder %s25, 3
        %s502 = scalar_select %p501, %s25, 3
        %p503 = scmp.lt.s32.totalorder %s26, 0
        %s504 = scalar_select %p503, %s26, 0
        %s505 = sadd.s32 %s504, %s502
        %s506 = smul.addr %s500, 4
        %s507 = sadd.s32 %s505, %s506
        %s508 = smul.addr %s507, 4
        %s509 = scalar_lea.vmem %s3, %s508
      $region52: #{transformer_forward.14} parent=47 // pred_fallthru
        _
    $region48: #{transformer_forward.14} parent=5 // pred_fallthru
      _
  $region6: #{transformer_forward.14} parent=0 // loop_footer
    %s13 = sadd.s32 1, %s9
  $region7: #{transformer_forward.14} parent=0 // loop_footer_branch
    %8 = sbr.rel target = $region3
  $region8: #{transformer_forward.14} parent=0 // loop_exit
    _

// kernel: transformer_forward.16
$region0: #{transformer_forward.16}
  #allocation0 [shape = 'u32[]', space=smem, size = 0x4, offset = 0x4, fixed_abs, tag = 'smem constant byte address 0x4 - core index']
  #allocation1 [shape = 'u32[144,128]{1,0:T(1,128)}', space=vmem, size = 0x12000, scoped, tag = 'internal scratch']
  #allocation2 [shape = 'f32[16,512]{1,0:T(8,128)}', space=vmem, size = 0x8000, scoped, tag = 'scratch operand']
  %s0 = inlined_call_operand.vmem [shape: bf16[16,32], index: 0, kind: input, shape index: {}]
  %s1 = inlined_call_operand.vmem [shape: bf16[32,2048], index: 1, kind: input, shape index: {}]
  %s2 = inlined_call_operand.vmem [shape: f32[1,2048], index: 2, kind: input, shape index: {}]
  %s3 = inlined_call_operand.vmem [shape: bf16[16,2048], index: 3, kind: output, shape index: {}]
  %s4 = sld [smem:[#allocation0]]
  $region95: #{transformer_forward.16} parent=0
    _
  %s6 = ssub.s32 1, %s4
  %s7 = scalar_select 0, %s6, %s4
  $region1: #{transformer_forward.16} parent=0
    #allocation3 [shape = 'u8[65536]{0}', space=vmem, size = 0x10000, scoped, tag = 'input window, operand 1']
    #allocation4 [shape = 'u8[32768]{0}', space=vmem, size = 0x8000, scoped, tag = 'output window, operand 0']
    loop: start=0, step=1, limit=6
    $region2: #{transformer_forward.16} parent=1 // loop_pre_header
      _
    $region3: #{transformer_forward.16} parent=1 // loop_header
      %s9 = sphi 0, %s13
      %p10 = scmp.ge.s32.totalorder %s9, 6
      %s16 = sphi 0, %s35
      %s17 = sphi 0, %s31
      %s18 = sphi 0, %s27
      %s19 = sphi 0, %s16
      %s20 = sphi 0, %s17
      %s21 = sphi 0, %s18
      %s22 = sphi 0, %s19
      %s23 = sphi 0, %s20
      %s24 = sphi 0, %s21
      %s40 = sphi 0, %s42
      %s43 = sphi 0, %s40
      %s44 = sphi 0, %s43
      %s60 = sphi 0, %s44
      %s68 = sphi 0, %s70
      %s71 = sphi 0, %s68
      %s72 = sphi 0, %s71
      %s88 = sphi 0, %s72
      %s94 = sphi 0, %s96
      %s97 = sphi 0, %s94
      %s98 = sphi 0, %s97
      %s114 = sphi 0, %s98
      %s122 = sphi 0, %s124
      %s125 = sphi 0, %s122
      %s126 = sphi 0, %s125
      %s142 = sphi 0, %s126
    $region4: #{transformer_forward.16} parent=1 // loop_header_branch
      %12 = sbr.rel (%p10) target = $region8
    $region5: #{transformer_forward.16} parent=1 // loop_body
      %s14 = ssub.s32 %s9, 1
      %s15 = ssub.s32 %s9, 2
      %s25 = sadd.s32 1, %s18
      %p26 = scmp.ge.s32.totalorder %s25, 1
      %s27 = scalar_select %p26, 0, %s25
      %s28 = sadd.s32 1, %s17
      %s29 = scalar_select %p26, %s28, %s17
      %p30 = scmp.ge.s32.totalorder %s29, 4
      %s31 = scalar_select %p30, 0, %s29
      %s32 = sadd.s32 1, %s16
      %s33 = scalar_select %p30, %s32, %s16
      %p34 = scmp.ge.s32.totalorder %s33, 1
      %s35 = scalar_select %p34, 0, %s33
      %s36 = ssub.s32 %s16, %s35
      %s37 = ssub.s32 %s18, %s27
      %s38 = sor.u32 %s36, %s37
      %p39 = scmp.eq.s32.totalorder %s38, 0
      %s41 = sadd.s32 %s40, 1
      %s42 = scalar_select %p39, %s40, %s41
      %p45 = pneg %p39
      %p46 = scmp.eq.s32.totalorder %s9, 3
      %p47 = por %p45, %p46
      %p48 = scmp.ne.s32.totalorder %s40, %s43
      %p49 = scmp.eq.s32.totalorder %s9, 0
      %p50 = por %p48, %p49
      %p51 = scmp.ne.s32.totalorder %s40, %s43
      %p52 = scmp.eq.s32.totalorder %s14, 3
      %p53 = por %p51, %p52
      %p54 = scmp.ne.s32.totalorder %s43, %s44
      %p55 = scmp.eq.s32.totalorder %s14, 0
      %p56 = por %p54, %p55
      %p57 = scmp.ne.s32.totalorder %s43, %s44
      %p58 = scmp.eq.s32.totalorder %s15, 3
      %p59 = por %p57, %p58
      %p61 = scmp.ne.s32.totalorder %s44, %s60
      %p62 = scmp.eq.s32.totalorder %s15, 0
      %p63 = por %p61, %p62
      %s64 = ssub.s32 %s18, %s27
      %s65 = ssub.s32 %s17, %s31
      %s66 = sor.u32 %s64, %s65
      %p67 = scmp.eq.s32.totalorder %s66, 0
      %s69 = sadd.s32 %s68, 1
      %s70 = scalar_select %p67, %s68, %s69
      %p73 = pneg %p67
      %p74 = scmp.eq.s32.totalorder %s9, 3
      %p75 = por %p73, %p74
      %p76 = scmp.ne.s32.totalorder %s68, %s71
      %p77 = scmp.eq.s32.totalorder %s9, 0
      %p78 = por %p76, %p77
      %p79 = scmp.ne.s32.totalorder %s68, %s71
      %p80 = scmp.eq.s32.totalorder %s14, 3
      %p81 = por %p79, %p80
      %p82 = scmp.ne.s32.totalorder %s71, %s72
      %p83 = scmp.eq.s32.totalorder %s14, 0
      %p84 = por %p82, %p83
      %p85 = scmp.ne.s32.totalorder %s71, %s72
      %p86 = scmp.eq.s32.totalorder %s15, 3
      %p87 = por %p85, %p86
      %p89 = scmp.ne.s32.totalorder %s72, %s88
      %p90 = scmp.eq.s32.totalorder %s15, 0
      %p91 = por %p89, %p90
      %s92 = ssub.s32 %s17, %s31
      %p93 = scmp.eq.s32.totalorder %s92, 0
      %s95 = sadd.s32 %s94, 1
      %s96 = scalar_select %p93, %s94, %s95
      %p99 = pneg %p93
      %p100 = scmp.eq.s32.totalorder %s9, 3
      %p101 = por %p99, %p100
      %p102 = scmp.ne.s32.totalorder %s94, %s97
      %p103 = scmp.eq.s32.totalorder %s9, 0
      %p104 = por %p102, %p103
      %p105 = scmp.ne.s32.totalorder %s94, %s97
      %p106 = scmp.eq.s32.totalorder %s14, 3
      %p107 = por %p105, %p106
      %p108 = scmp.ne.s32.totalorder %s97, %s98
      %p109 = scmp.eq.s32.totalorder %s14, 0
      %p110 = por %p108, %p109
      %p111 = scmp.ne.s32.totalorder %s97, %s98
      %p112 = scmp.eq.s32.totalorder %s15, 3
      %p113 = por %p111, %p112
      %p115 = scmp.ne.s32.totalorder %s98, %s114
      %p116 = scmp.eq.s32.totalorder %s15, 0
      %p117 = por %p115, %p116
      %s118 = ssub.s32 %s16, %s35
      %s119 = ssub.s32 %s17, %s31
      %s120 = sor.u32 %s118, %s119
      %p121 = scmp.eq.s32.totalorder %s120, 0
      %s123 = sadd.s32 %s122, 1
      %s124 = scalar_select %p121, %s122, %s123
      %p127 = pneg %p121
      %p128 = scmp.eq.s32.totalorder %s9, 3
      %p129 = por %p127, %p128
      %p130 = scmp.ne.s32.totalorder %s122, %s125
      %p131 = scmp.eq.s32.totalorder %s9, 0
      %p132 = por %p130, %p131
      %p133 = scmp.ne.s32.totalorder %s122, %s125
      %p134 = scmp.eq.s32.totalorder %s14, 3
      %p135 = por %p133, %p134
      %p136 = scmp.ne.s32.totalorder %s125, %s126
      %p137 = scmp.eq.s32.totalorder %s14, 0
      %p138 = por %p136, %p137
      %p139 = scmp.ne.s32.totalorder %s125, %s126
      %p140 = scmp.eq.s32.totalorder %s15, 3
      %p141 = por %p139, %p140
      %p143 = scmp.ne.s32.totalorder %s126, %s142
      %p144 = scmp.eq.s32.totalorder %s15, 0
      %p145 = por %p143, %p144
      %p146 = scmp.le.s32.totalorder 1, %s9
      %p147 = scmp.lt.s32.totalorder %s9, 5
      %p148 = pnand %p146, %p147
      %p149 = pneg %p148
      // Predicated region
      $region9: #{transformer_forward.16} parent=5 // pred_check
        _
      $region10: #{transformer_forward.16} parent=5 // pred_check_branch
        %151 = sbr.rel (%p148) target = $region12
      $region11: #{transformer_forward.16} parent=5 // pred_region
        %s152 = ssub.s32 %s9, 1
        // Predicated region
        $region13: #{transformer_forward.16} parent=11 // pred_check
          %p153 = pneg %p56
        $region14: #{transformer_forward.16} parent=11 // pred_check_branch
          %155 = sbr.rel (%p153) target = $region16
        $region15: #{transformer_forward.16} parent=11 // pred_region
          %s156 = smul.u32 2, %s19
          %p157 = scmp.lt.s32.totalorder %s156, 1
          %s158 = scalar_select %p157, %s156, 1
          %p159 = scmp.lt.s32.totalorder %s21, 0
          %s160 = scalar_select %p159, %s21, 0
          %s161 = sadd.s32 %s160, %s158
          %s162 = smul.addr %s161, 4
          %s163 = scalar_lea.vmem %s0, %s162
          %s164 = smul.u32 2, %s19
        $region16: #{transformer_forward.16} parent=11 // pred_fallthru
          _
      $region12: #{transformer_forward.16} parent=5 // pred_fallthru
        _
      %p165 = scmp.lt.s32.totalorder %s9, 4
      // Predicated region
      $region17: #{transformer_forward.16} parent=5 // pred_check
        %p166 = pneg %p165
      $region18: #{transformer_forward.16} parent=5 // pred_check_branch
        %168 = sbr.rel (%p166) target = $region20
      $region19: #{transformer_forward.16} parent=5 // pred_region
        // Predicated region
        $region21: #{transformer_forward.16} parent=19 // pred_check
          %p169 = pneg %p78
        $region22: #{transformer_forward.16} parent=19 // pred_check_branch
          %171 = sbr.rel (%p169) target = $region24
        $region23: #{transformer_forward.16} parent=19 // pred_region
          %s172 = sand.u32 %s68, 1
          %s173 = sand.u32 %s68, 1
          %s174 = smul.addr %s173, 64
          %s175 = scalar_lea.vmem [#allocation3], %s174
          %s176 = smul.u32 4, %s18
          %s177 = smul.u32 4, %s17
          %s178 = smul.addr %s176, 16
          %s179 = sadd.s32 %s177, %s178
          %s180 = smul.addr %s179, 4
          %s181 = scalar_lea.vmem %s1, %s180
          // Predicated region
          $region25: #{transformer_forward.16} parent=23 // pred_check
            _
          $region26: #{transformer_forward.16} parent=23 // pred_check_branch
            %183 = sbr.rel (0) target = $region28
          $region27: #{transformer_forward.16} parent=23 // pred_region
            // Predicated region
            $region29: #{transformer_forward.16} parent=27 // pred_check
              _
            $region30: #{transformer_forward.16} parent=27 // pred_check_branch
              %185 = sbr.rel (0) target = $region32
            $region31: #{transformer_forward.16} parent=27 // pred_region
              loop: start=0, step=1, limit=1
              $region33: #{transformer_forward.16} parent=31 // loop_pre_header
                _
              $region34: #{transformer_forward.16} parent=31 // loop_header
                %s187 = sphi 0, %s191
                %p188 = scmp.ge.s32.totalorder %s187, 1
                %s192 = sphi %s181, %s181
                %s193 = sphi %s175, %s175
              $region35: #{transformer_forward.16} parent=31 // loop_header_branch
                %190 = sbr.rel (%p188) target = $region39
              $region36: #{transformer_forward.16} parent=31 // loop_body
                %v194 = vld [vmem:[%s192] sm:$0xff]
                %195 = vst [vmem:[%s193] sm:$0xff] %v194
                %v196 = vld [vmem:[%s192 + $0x8] sm:$0xff]
                %197 = vst [vmem:[%s193 + $0x8] sm:$0xff] %v196
                %v198 = vld [vmem:[%s192 + $0x40] sm:$0xff]
                %199 = vst [vmem:[%s193 + $0x10] sm:$0xff] %v198
                %v200 = vld [vmem:[%s192 + $0x48] sm:$0xff]
                %201 = vst [vmem:[%s193 + $0x18] sm:$0xff] %v200
                %v202 = vld [vmem:[%s192 + $0x80] sm:$0xff]
                %203 = vst [vmem:[%s193 + $0x20] sm:$0xff] %v202
                %v204 = vld [vmem:[%s192 + $0x88] sm:$0xff]
                %205 = vst [vmem:[%s193 + $0x28] sm:$0xff] %v204
                %v206 = vld [vmem:[%s192 + $0xc0] sm:$0xff]
                %207 = vst [vmem:[%s193 + $0x30] sm:$0xff] %v206
                %v208 = vld [vmem:[%s192 + $0xc8] sm:$0xff]
                %209 = vst [vmem:[%s193 + $0x38] sm:$0xff] %v208
              $region37: #{transformer_forward.16} parent=31 // loop_footer
                %s191 = sadd.s32 1, %s187
              $region38: #{transformer_forward.16} parent=31 // loop_footer_branch
                %186 = sbr.rel target = $region34
              $region39: #{transformer_forward.16} parent=31 // loop_exit
                _
            $region32: #{transformer_forward.16} parent=27 // pred_fallthru
              _
            // Predicated region
            $region40: #{transformer_forward.16} parent=27 // pred_check
              _
            $region41: #{transformer_forward.16} parent=27 // pred_check_branch
              %211 = sbr.rel target = $region43
            $region42: #{transformer_forward.16} parent=27 // pred_region
              _
            $region43: #{transformer_forward.16} parent=27 // pred_fallthru
              _
          $region28: #{transformer_forward.16} parent=23 // pred_fallthru
            _
          %212 = vnop
        $region24: #{transformer_forward.16} parent=19 // pred_fallthru
          _
        // Predicated region
        $region44: #{transformer_forward.16} parent=19 // pred_check
          %p213 = pneg %p104
        $region45: #{transformer_forward.16} parent=19 // pred_check_branch
          %215 = sbr.rel (%p213) target = $region47
        $region46: #{transformer_forward.16} parent=19 // pred_region
          %s216 = smul.u32 4, %s17
          %p217 = scmp.lt.s32.totalorder %s216, 15
          %s218 = scalar_select %p217, %s216, 15
          %s219 = scalar_lea.vmem %s2, %s218
          %s220 = smul.u32 4, %s17
        $region47: #{transformer_forward.16} parent=19 // pred_fallthru
          _
      $region20: #{transformer_forward.16} parent=5 // pred_fallthru
        _
      %p221 = scmp.le.s32.totalorder 1, %s9
      %p222 = scmp.lt.s32.totalorder %s9, 5
      %p223 = pnand %p221, %p222
      %p224 = pneg %p223
      // Predicated region
      $region48: #{transformer_forward.16} parent=5 // pred_check
        _
      $region49: #{transformer_forward.16} parent=5 // pred_check_branch
        %226 = sbr.rel (%p223) target = $region51
      $region50: #{transformer_forward.16} parent=5 // pred_region
        %s227 = ssub.s32 %s9, 1
        %s228 = sand.u32 %s71, 1
        %s229 = sand.u32 %s71, 1
        %s230 = smul.addr %s229, 64
        %s231 = scalar_lea.vmem [#allocation3], %s230
        // Predicated region
        $region52: #{transformer_forward.16} parent=50 // pred_check
          %p232 = pneg %p84
        $region53: #{transformer_forward.16} parent=50 // pred_check_branch
          %234 = sbr.rel (%p232) target = $region55
        $region54: #{transformer_forward.16} parent=50 // pred_region
          _
        $region55: #{transformer_forward.16} parent=50 // pred_fallthru
          _
        %s235 = smul.u32 2, %s19
        %p236 = scmp.lt.s32.totalorder %s235, 1
        %s237 = scalar_select %p236, %s235, 1
        %p238 = scmp.lt.s32.totalorder %s21, 0
        %s239 = scalar_select %p238, %s21, 0
        %s240 = sadd.s32 %s239, %s237
        %s241 = smul.addr %s240, 4
        %s242 = scalar_lea.vmem %s0, %s241
        %p243 = pneg %p56
        %p244 = pneg %p53
        %s245 = sand.u32 %s71, 1
        %s246 = sand.u32 %s71, 1
        %s247 = smul.addr %s246, 64
        %s248 = scalar_lea.vmem [#allocation3], %s247
        %p249 = pneg %p84
        %p250 = pneg %p81
        %s251 = smul.u32 4, %s20
        %p252 = scmp.lt.s32.totalorder %s251, 15
        %s253 = scalar_select %p252, %s251, 15
        %s254 = scalar_lea.vmem %s2, %s253
        %p255 = pneg %p110
        %p256 = pneg %p107
        %p257 = pneg %p138
        %p258 = pneg %p135
        %s259 = sand.u32 %s125, 1
        %s260 = sand.u32 %s125, 1
        %s261 = smul.addr %s260, 32
        %s262 = scalar_lea.vmem [#allocation4], %s261
        %s263 = smul.u32 2, %s19
        %p264 = scmp.lt.s32.totalorder %s263, 1
        %s265 = scalar_select %p264, %s263, 1
        %p266 = scmp.lt.s32.totalorder %s21, 0
        %s267 = scalar_select %p266, %s21, 0
        %s268 = sadd.s32 %s267, %s265
        %s269 = smul.addr %s268, 4
        %s270 = scalar_lea.vmem %s0, %s269
        %s271 = smul.u32 2, %s19
        %s272 = smul.u32 4, %s21
        %s273 = smul.u32 4, %s20
        %s274 = smul.u32 4, %s20
        %p275 = scmp.lt.s32.totalorder %s274, 15
        %s276 = scalar_select %p275, %s274, 15
        %s277 = scalar_lea.vmem %s2, %s276
        %s278 = smul.u32 4, %s20
        %s279 = smul.u32 2, %s19
        %s280 = smul.u32 4, %s20
        %p282 = scmp.eq.s32.totalorder %s21, 0
        // Predicated region
        $region56: #{transformer_forward.16} parent=50 // pred_check
          %p283 = pneg %p282
        $region57: #{transformer_forward.16} parent=50 // pred_check_branch
          %285 = sbr.rel (%p283) target = $region59
        $region58: #{transformer_forward.16} parent=50 // pred_region
          %286 = vst [vmem:[#allocation2] sm:$0xff] 0.0
          %287 = vst [vmem:[#allocation2 + $0x8] sm:$0xff] 0.0
          %288 = vst [vmem:[#allocation2 + $0x10] sm:$0xff] 0.0
          %289 = vst [vmem:[#allocation2 + $0x18] sm:$0xff] 0.0
          %290 = vst [vmem:[#allocation2 + $0x20] sm:$0xff] 0.0
          %291 = vst [vmem:[#allocation2 + $0x28] sm:$0xff] 0.0
          %292 = vst [vmem:[#allocation2 + $0x30] sm:$0xff] 0.0
          %293 = vst [vmem:[#allocation2 + $0x38] sm:$0xff] 0.0
        $region59: #{transformer_forward.16} parent=50 // pred_fallthru
          _
        %v294 = vld [vmem:[#allocation2] sm:$0xff]
        %v295 = vld [vmem:[#allocation2 + $0x8] sm:$0xff]
        %v296 = vld [vmem:[#allocation2 + $0x10] sm:$0xff]
        %v297 = vld [vmem:[#allocation2 + $0x18] sm:$0xff]
        %v298 = vld [vmem:[#allocation2 + $0x20] sm:$0xff]
        %v299 = vld [vmem:[#allocation2 + $0x28] sm:$0xff]
        %v300 = vld [vmem:[#allocation2 + $0x30] sm:$0xff]
        %v301 = vld [vmem:[#allocation2 + $0x38] sm:$0xff]
        %v302 = vld [vmem:[%s270] sm:$0xf]
        %v303 = vld [vmem:[%s270 + $0x4] sm:$0xf]
        %v304 = vld [vmem:[%s231] sm:$0xff]
        %v305 = vld [vmem:[%s231 + $0x8] sm:$0xff]
        %v306 = vld [vmem:[%s231 + $0x10] sm:$0xff]
        %v307 = vld [vmem:[%s231 + $0x18] sm:$0xff]
        %v308 = vld [vmem:[%s231 + $0x20] sm:$0xff]
        %v309 = vld [vmem:[%s231 + $0x28] sm:$0xff]
        %v310 = vld [vmem:[%s231 + $0x30] sm:$0xff]
        %v311 = vld [vmem:[%s231 + $0x38] sm:$0xff]
        %v314 = vunpack.c.l.b16 %v302
        %v315 = vunpack.c.l.b16 %v303
        %v316 = vpack.c.b16 %v315, %v314
        %v325 = vunpack.c.l.b16 %v304
        %v326 = vunpack.c.h.b16 %v304
        %v327 = vunpack.c.l.b16 %v305
        %v328 = vunpack.c.h.b16 %v305
        %v329 = vunpack.c.l.b16 %v306
        %v330 = vunpack.c.h.b16 %v306
        %v331 = vunpack.c.l.b16 %v307
        %v332 = vunpack.c.h.b16 %v307
        %v333 = vunpack.c.l.b16 %v308
        %v334 = vunpack.c.h.b16 %v308
        %v335 = vunpack.c.l.b16 %v309
        %v336 = vunpack.c.h.b16 %v309
        %v337 = vunpack.c.l.b16 %v310
        %v338 = vunpack.c.h.b16 %v310
        %v339 = vunpack.c.l.b16 %v311
        %v340 = vunpack.c.h.b16 %v311
        %v341 = vpack.c.b16 %v329, %v325
        %v342 = vpack.c.b16 %v330, %v326
        %v343 = vpack.c.b16 %v331, %v327
        %v344 = vpack.c.b16 %v332, %v328
        %v345 = vpack.c.b16 %v337, %v333
        %v346 = vpack.c.b16 %v338, %v334
        %v347 = vpack.c.b16 %v339, %v335
        %v348 = vpack.c.b16 %v340, %v336
        %vm357 = vcmask 261120
        %v359 = vsel %vm357, %v316, 0
        %361 = vmatprep.subr.bf16.mxu0 %v342
        %362 = vmatpush1.bf16.msra.mxu0 %v341
        %363 = vmatprep.subr.bf16.mxu0 %v346
        %364 = vmatpush1.bf16.msra.mxu0 %v345
        %365 = vmatprep.subr.bf16.mxu0 0
        %366 = vmatpush1.bf16.msra.mxu0 0
        %367 = vmatprep.subr.bf16.mxu0 0
        %368 = vmatpush1.bf16.msra.mxu0 0
        %369 = vmatprep.subr.bf16.mxu0 0
        %370 = vmatpush1.bf16.msra.mxu0 0
        %371 = vmatprep.subr.bf16.mxu0 0
        %372 = vmatpush1.bf16.msra.mxu0 0
        %373 = vmatprep.subr.bf16.mxu0 0
        %374 = vmatpush1.bf16.msra.mxu0 0
        %375 = vmatprep.subr.bf16.mxu0 0
        %376 = vmatpush1.bf16.msra.mxu0 0
        %377 = vmatprep.subr.bf16.mxu0 0
        %378 = vmatpush1.bf16.msra.mxu0 0
        %379 = vmatprep.subr.bf16.mxu0 0
        %380 = vmatpush1.bf16.msra.mxu0 0
        %381 = vmatprep.subr.bf16.mxu0 0
        %382 = vmatpush1.bf16.msra.mxu0 0
        %383 = vmatprep.subr.bf16.mxu0 0
        %384 = vmatpush1.bf16.msra.mxu0 0
        %385 = vmatprep.subr.bf16.mxu0 0
        %386 = vmatpush1.bf16.msra.mxu0 0
        %387 = vmatprep.subr.bf16.mxu0 0
        %388 = vmatpush1.bf16.msra.mxu0 0
        %389 = vmatprep.subr.bf16.mxu0 0
        %390 = vmatpush1.bf16.msra.mxu0 0
        %391 = vmatprep.subr.bf16.mxu0 0
        %392 = vmatpush1.bf16.msra.mxu0 0
        %393 = vmatprep.mubr.bf16.mxu0 0
        %394 = vmatmul.mubr.bf16.gmra.mrb[0].mxu0 %v359
        %v395 = vpop.f32.mrb[0].mxu0
        %v396 = vadd.f32 0.0, %v395
        %v397 = vpop.f32.mrb[0].mxu0
        %v398 = vadd.f32 0.0, %v397
        %v399 = vpop.f32.mrb[0].mxu0
        %v400 = vadd.f32 0.0, %v399
        %v401 = vpop.f32.mrb[0].mxu0
        %v402 = vadd.f32 0.0, %v401
        %403 = vdwg.mxu0
        %404 = vmatprep.subr.bf16.mxu0 %v344
        %405 = vmatpush1.bf16.msra.mxu0 %v343
        %406 = vmatprep.subr.bf16.mxu0 %v348
        %407 = vmatpush1.bf16.msra.mxu0 %v347
        %408 = vmatprep.subr.bf16.mxu0 0
        %409 = vmatpush1.bf16.msra.mxu0 0
        %410 = vmatprep.subr.bf16.mxu0 0
        %411 = vmatpush1.bf16.msra.mxu0 0
        %412 = vmatprep.subr.bf16.mxu0 0
        %413 = vmatpush1.bf16.msra.mxu0 0
        %414 = vmatprep.subr.bf16.mxu0 0
        %415 = vmatpush1.bf16.msra.mxu0 0
        %416 = vmatprep.subr.bf16.mxu0 0
        %417 = vmatpush1.bf16.msra.mxu0 0
        %418 = vmatprep.subr.bf16.mxu0 0
        %419 = vmatpush1.bf16.msra.mxu0 0
        %420 = vmatprep.subr.bf16.mxu0 0
        %421 = vmatpush1.bf16.msra.mxu0 0
        %422 = vmatprep.subr.bf16.mxu0 0
        %423 = vmatpush1.bf16.msra.mxu0 0
        %424 = vmatprep.subr.bf16.mxu0 0
        %425 = vmatpush1.bf16.msra.mxu0 0
        %426 = vmatprep.subr.bf16.mxu0 0
        %427 = vmatpush1.bf16.msra.mxu0 0
        %428 = vmatprep.subr.bf16.mxu0 0
        %429 = vmatpush1.bf16.msra.mxu0 0
        %430 = vmatprep.subr.bf16.mxu0 0
        %431 = vmatpush1.bf16.msra.mxu0 0
        %432 = vmatprep.subr.bf16.mxu0 0
        %433 = vmatpush1.bf16.msra.mxu0 0
        %434 = vmatprep.subr.bf16.mxu0 0
        %435 = vmatpush1.bf16.msra.mxu0 0
        %436 = vmatprep.mubr.bf16.mxu0 0
        %437 = vmatmul.mubr.bf16.gmra.mrb[0].mxu0 %v359
        %v438 = vpop.f32.mrb[0].mxu0
        %v439 = vadd.f32 0.0, %v438
        %v440 = vpop.f32.mrb[0].mxu0
        %v441 = vadd.f32 0.0, %v440
        %v442 = vpop.f32.mrb[0].mxu0
        %v443 = vadd.f32 0.0, %v442
        %v444 = vpop.f32.mrb[0].mxu0
        %v445 = vadd.f32 0.0, %v444
        %446 = vdwg.mxu0
        %v447 = vadd.f32 %v294, %v396
        %v448 = vadd.f32 %v295, %v398
        %v449 = vadd.f32 %v296, %v439
        %v450 = vadd.f32 %v297, %v441
        %v451 = vadd.f32 %v298, %v400
        %v452 = vadd.f32 %v299, %v402
        %v453 = vadd.f32 %v300, %v443
        %v454 = vadd.f32 %v301, %v445
        %455 = vst [vmem:[#allocation2] sm:$0xff] %v447
        %456 = vst [vmem:[#allocation2 + $0x8] sm:$0xff] %v448
        %457 = vst [vmem:[#allocation2 + $0x10] sm:$0xff] %v449
        %458 = vst [vmem:[#allocation2 + $0x18] sm:$0xff] %v450
        %459 = vst [vmem:[#allocation2 + $0x20] sm:$0xff] %v451
        %460 = vst [vmem:[#allocation2 + $0x28] sm:$0xff] %v452
        %461 = vst [vmem:[#allocation2 + $0x30] sm:$0xff] %v453
        %462 = vst [vmem:[#allocation2 + $0x38] sm:$0xff] %v454
        // Predicated region
        $region60: #{transformer_forward.16} parent=50 // pred_check
          %p463 = pneg %p282
        $region61: #{transformer_forward.16} parent=50 // pred_check_branch
          %465 = sbr.rel (%p463) target = $region63
        $region62: #{transformer_forward.16} parent=50 // pred_region
          %v466 = vld [vmem:[#allocation2] sm:$0xff]
          %v467 = vld [vmem:[#allocation2 + $0x8] sm:$0xff]
          %v468 = vld [vmem:[#allocation2 + $0x10] sm:$0xff]
          %v469 = vld [vmem:[#allocation2 + $0x18] sm:$0xff]
          %v470 = vld [vmem:[#allocation2 + $0x20] sm:$0xff]
          %v471 = vld [vmem:[#allocation2 + $0x28] sm:$0xff]
          %v472 = vld [vmem:[#allocation2 + $0x30] sm:$0xff]
          %v473 = vld [vmem:[#allocation2 + $0x38] sm:$0xff]
          %v474 = vld [vmem:[%s277] sm:$0xf]
          %v476 = vlaneseq
          %v477 = vshrl.u32 %v476, 7
          %v478 = vsub.s32 0, %v477
          %v479 = vrot.slane %v474, %v478
          %v480 = vlaneseq
          %v481 = vshrl.u32 %v480, 7
          %v482 = vsub.s32 1, %v481
          %v483 = vrot.slane %v474, %v482
          %v484 = vlaneseq
          %v485 = vshrl.u32 %v484, 7
          %v486 = vsub.s32 2, %v485
          %v487 = vrot.slane %v474, %v486
          %v488 = vlaneseq
          %v489 = vshrl.u32 %v488, 7
          %v490 = vsub.s32 3, %v489
          %v491 = vrot.slane %v474, %v490
          %v496 = vadd.f32 %v466, %v479
          %v497 = vadd.f32 %v467, %v483
          %v498 = vadd.f32 %v468, %v487
          %v499 = vadd.f32 %v469, %v491
          %v500 = vadd.f32 %v470, %v479
          %v501 = vadd.f32 %v471, %v483
          %v502 = vadd.f32 %v472, %v487
          %v503 = vadd.f32 %v473, %v491
          %v504 = vmax.f32 %v496, 0.0
          %v505 = vmax.f32 %v497, 0.0
          %v506 = vmax.f32 %v498, 0.0
          %v507 = vmax.f32 %v499, 0.0
          %v508 = vmax.f32 %v500, 0.0
          %v509 = vmax.f32 %v501, 0.0
          %v510 = vmax.f32 %v502, 0.0
          %v511 = vmax.f32 %v503, 0.0
          %v512 = vpack.c.bf16 %v508, %v504
          %v513 = vpack.c.bf16 %v509, %v505
          %v514 = vpack.c.bf16 %v510, %v506
          %v515 = vpack.c.bf16 %v511, %v507
          %v520 = vunpack.c.l.b16 %v512
          %v521 = vunpack.c.l.b16 %v513
          %v522 = vunpack.c.l.b16 %v514
          %v523 = vunpack.c.l.b16 %v515
          %v524 = vunpack.c.h.b16 %v512
          %v525 = vunpack.c.h.b16 %v513
          %v526 = vunpack.c.h.b16 %v514
          %v527 = vunpack.c.h.b16 %v515
          %v528 = vpack.c.b16 %v521, %v520
          %v529 = vpack.c.b16 %v523, %v522
          %v530 = vpack.c.b16 %v525, %v524
          %v531 = vpack.c.b16 %v527, %v526
          %536 = vst [vmem:[%s262] sm:$0xff] %v528
          %537 = vst [vmem:[%s262 + $0x8] sm:$0xff] %v529
          %538 = vst [vmem:[%s262 + $0x10] sm:$0xff] %v530
          %539 = vst [vmem:[%s262 + $0x18] sm:$0xff] %v531
        $region63: #{transformer_forward.16} parent=50 // pred_fallthru
          _
        %s540 = sand.u32 %s125, 1
        %s541 = sand.u32 %s125, 1
        %s542 = smul.addr %s541, 32
        %s543 = scalar_lea.vmem [#allocation4], %s542
        // Predicated region
        $region64: #{transformer_forward.16} parent=50 // pred_check
          %p544 = pneg %p135
        $region65: #{transformer_forward.16} parent=50 // pred_check_branch
          %546 = sbr.rel (%p544) target = $region67
        $region66: #{transformer_forward.16} parent=50 // pred_region
          %s547 = smul.u32 2, %s19
          %s548 = smul.u32 4, %s20
          %s549 = smul.addr %s547, 16
          %s550 = sadd.s32 %s548, %s549
          %s551 = smul.addr %s550, 4
          %s552 = scalar_lea.vmem %s3, %s551
          // Predicated region
          $region68: #{transformer_forward.16} parent=66 // pred_check
            _
          $region69: #{transformer_forward.16} parent=66 // pred_check_branch
            %554 = sbr.rel (0) target = $region71
          $region70: #{transformer_forward.16} parent=66 // pred_region
            // Predicated region
            $region72: #{transformer_forward.16} parent=70 // pred_check
              _
            $region73: #{transformer_forward.16} parent=70 // pred_check_branch
              %556 = sbr.rel (0) target = $region75
            $region74: #{transformer_forward.16} parent=70 // pred_region
              loop: start=0, step=1, limit=1
              $region76: #{transformer_forward.16} parent=74 // loop_pre_header
                _
              $region77: #{transformer_forward.16} parent=74 // loop_header
                %s558 = sphi 0, %s562
                %p559 = scmp.ge.s32.totalorder %s558, 1
                %s563 = sphi %s543, %s543
                %s564 = sphi %s552, %s552
              $region78: #{transformer_forward.16} parent=74 // loop_header_branch
                %561 = sbr.rel (%p559) target = $region82
              $region79: #{transformer_forward.16} parent=74 // loop_body
                %v565 = vld [vmem:[%s563] sm:$0xff]
                %566 = vst [vmem:[%s564] sm:$0xff] %v565
                %v567 = vld [vmem:[%s563 + $0x8] sm:$0xff]
                %568 = vst [vmem:[%s564 + $0x8] sm:$0xff] %v567
                %v569 = vld [vmem:[%s563 + $0x10] sm:$0xff]
                %570 = vst [vmem:[%s564 + $0x40] sm:$0xff] %v569
                %v571 = vld [vmem:[%s563 + $0x18] sm:$0xff]
                %572 = vst [vmem:[%s564 + $0x48] sm:$0xff] %v571
              $region80: #{transformer_forward.16} parent=74 // loop_footer
                %s562 = sadd.s32 1, %s558
              $region81: #{transformer_forward.16} parent=74 // loop_footer_branch
                %557 = sbr.rel target = $region77
              $region82: #{transformer_forward.16} parent=74 // loop_exit
                _
            $region75: #{transformer_forward.16} parent=70 // pred_fallthru
              _
            // Predicated region
            $region83: #{transformer_forward.16} parent=70 // pred_check
              _
            $region84: #{transformer_forward.16} parent=70 // pred_check_branch
              %574 = sbr.rel target = $region86
            $region85: #{transformer_forward.16} parent=70 // pred_region
              _
            $region86: #{transformer_forward.16} parent=70 // pred_fallthru
              _
          $region71: #{transformer_forward.16} parent=66 // pred_fallthru
            _
          %575 = vnop
        $region67: #{transformer_forward.16} parent=50 // pred_fallthru
          _
      $region51: #{transformer_forward.16} parent=5 // pred_fallthru
        _
      %p576 = scmp.le.s32.totalorder 2, %s9
      // Predicated region
      $region87: #{transformer_forward.16} parent=5 // pred_check
        %p577 = pneg %p576
      $region88: #{transformer_forward.16} parent=5 // pred_check_branch
        %579 = sbr.rel (%p577) target = $region90
      $region89: #{transformer_forward.16} parent=5 // pred_region
        %s580 = ssub.s32 %s9, 2
        // Predicated region
        $region91: #{transformer_forward.16} parent=89 // pred_check
          %p581 = pneg %p141
        $region92: #{transformer_forward.16} parent=89 // pred_check_branch
          %583 = sbr.rel (%p581) target = $region94
        $region93: #{transformer_forward.16} parent=89 // pred_region
          %s584 = sand.u32 %s126, 1
          %s585 = sand.u32 %s126, 1
          %s586 = smul.addr %s585, 32
          %s587 = scalar_lea.vmem [#allocation4], %s586
        $region94: #{transformer_forward.16} parent=89 // pred_fallthru
          _
      $region90: #{transformer_forward.16} parent=5 // pred_fallthru
        _
    $region6: #{transformer_forward.16} parent=1 // loop_footer
      %s13 = sadd.s32 1, %s9
    $region7: #{transformer_forward.16} parent=1 // loop_footer_branch
      %8 = sbr.rel target = $region3
    $region8: #{transformer_forward.16} parent=1 // loop_exit
      _

// kernel: transformer_forward.15
$region0: #{transformer_forward.15}
  #allocation0 [shape = 'u32[]', space=smem, size = 0x4, offset = 0x4, fixed_abs, tag = 'smem constant byte address 0x4 - core index']
  #allocation1 [shape = 'u32[144,128]{1,0:T(1,128)}', space=vmem, size = 0x12000, scoped, tag = 'internal scratch']
  #allocation2 [shape = 'f32[16,32]{1,0:T(8,128)}', space=vmem, size = 0x2000, scoped, tag = 'scratch operand']
  %s0 = inlined_call_operand.vmem [shape: bf16[16,32], index: 0, kind: input, shape index: {}]
  %s1 = inlined_call_operand.vmem [shape: bf16[32,32], index: 1, kind: input, shape index: {}]
  %s2 = inlined_call_operand.vmem [shape: f32[1,32], index: 2, kind: input, shape index: {}]
  %s3 = inlined_call_operand.vmem [shape: bf16[16,32], index: 3, kind: input, shape index: {}]
  %s4 = inlined_call_operand.vmem [shape: f32[1,32], index: 4, kind: input, shape index: {}]
  %s5 = inlined_call_operand.vmem [shape: f32[1,32], index: 5, kind: input, shape index: {}]
  %s6 = inlined_call_operand.vmem [shape: bf16[16,32], index: 6, kind: output, shape index: {}]
  %s7 = sld [smem:[#allocation0]]
  $region42: #{transformer_forward.15} parent=0
    _
  %s9 = ssub.s32 1, %s7
  %s10 = scalar_select 0, %s9, %s7
  // Predicated region
  $region2: #{transformer_forward.15} parent=0 // pred_check
    _
  $region3: #{transformer_forward.15} parent=0 // pred_check_branch
    %12 = sbr.rel (0) target = $region5
  $region4: #{transformer_forward.15} parent=0 // pred_region
    _
  $region5: #{transformer_forward.15} parent=0 // pred_fallthru
    _
  // Predicated region
  $region6: #{transformer_forward.15} parent=0 // pred_check
    _
  $region7: #{transformer_forward.15} parent=0 // pred_check_branch
    %14 = sbr.rel (0) target = $region9
  $region8: #{transformer_forward.15} parent=0 // pred_region
    _
  $region9: #{transformer_forward.15} parent=0 // pred_fallthru
    _
  // Predicated region
  $region10: #{transformer_forward.15} parent=0 // pred_check
    _
  $region11: #{transformer_forward.15} parent=0 // pred_check_branch
    %16 = sbr.rel (0) target = $region13
  $region12: #{transformer_forward.15} parent=0 // pred_region
    _
  $region13: #{transformer_forward.15} parent=0 // pred_fallthru
    _
  // Predicated region
  $region14: #{transformer_forward.15} parent=0 // pred_check
    _
  $region15: #{transformer_forward.15} parent=0 // pred_check_branch
    %18 = sbr.rel (0) target = $region17
  $region16: #{transformer_forward.15} parent=0 // pred_region
    _
  $region17: #{transformer_forward.15} parent=0 // pred_fallthru
    _
  // Predicated region
  $region18: #{transformer_forward.15} parent=0 // pred_check
    _
  $region19: #{transformer_forward.15} parent=0 // pred_check_branch
    %20 = sbr.rel (0) target = $region21
  $region20: #{transformer_forward.15} parent=0 // pred_region
    _
  $region21: #{transformer_forward.15} parent=0 // pred_fallthru
    _
  // Predicated region
  $region22: #{transformer_forward.15} parent=0 // pred_check
    _
  $region23: #{transformer_forward.15} parent=0 // pred_check_branch
    %22 = sbr.rel (0) target = $region25
  $region24: #{transformer_forward.15} parent=0 // pred_region
    _
  $region25: #{transformer_forward.15} parent=0 // pred_fallthru
    _
  %p24 = scmp.eq.s32.totalorder 0, 0
  // Predicated region
  $region26: #{transformer_forward.15} parent=0 // pred_check
    %p25 = pneg %p24
  $region27: #{transformer_forward.15} parent=0 // pred_check_branch
    %27 = sbr.rel (%p25) target = $region29
  $region28: #{transformer_forward.15} parent=0 // pred_region
    %vm28 = vcmask 261120
    %29 = vst.msk [vmem:[#allocation2] sm:$0xff] %vm28, 0.0
    %30 = vst.msk [vmem:[#allocation2 + $0x8] sm:$0xff] %vm28, 0.0
  $region29: #{transformer_forward.15} parent=0 // pred_fallthru
    _
  %v31 = vld [vmem:[#allocation2] sm:$0xff]
  %v32 = vld [vmem:[#allocation2 + $0x8] sm:$0xff]
  %v33 = vld [vmem:[%s0] sm:$0xf]
  %v34 = vld [vmem:[%s0 + $0x4] sm:$0xf]
  %v35 = vld [vmem:[%s1] sm:$0xf]
  %v36 = vld [vmem:[%s1 + $0x4] sm:$0xf]
  %v37 = vld [vmem:[%s1 + $0x8] sm:$0xf]
  %v38 = vld [vmem:[%s1 + $0xc] sm:$0xf]
  %v41 = vunpack.c.l.b16 %v33
  %v42 = vunpack.c.l.b16 %v34
  %v43 = vpack.c.b16 %v42, %v41
  %v48 = vunpack.c.l.b16 %v35
  %v49 = vunpack.c.l.b16 %v36
  %v50 = vunpack.c.l.b16 %v37
  %v51 = vunpack.c.l.b16 %v38
  %v52 = vpack.c.b16 %v49, %v48
  %v53 = vpack.c.b16 %v51, %v50
  %vm56 = vcmask 261120
  %v58 = vsel %vm56, %v43, 0
  %60 = vmatprep.subr.bf16.mxu0 0
  %61 = vmatpush1.bf16.msra.mxu0 %v52
  %62 = vmatprep.subr.bf16.mxu0 0
  %63 = vmatpush1.bf16.msra.mxu0 %v53
  %64 = vmatprep.subr.bf16.mxu0 0
  %65 = vmatpush1.bf16.msra.mxu0 0
  %66 = vmatprep.subr.bf16.mxu0 0
  %67 = vmatpush1.bf16.msra.mxu0 0
  %68 = vmatprep.subr.bf16.mxu0 0
  %69 = vmatpush1.bf16.msra.mxu0 0
  %70 = vmatprep.subr.bf16.mxu0 0
  %71 = vmatpush1.bf16.msra.mxu0 0
  %72 = vmatprep.subr.bf16.mxu0 0
  %73 = vmatpush1.bf16.msra.mxu0 0
  %74 = vmatprep.subr.bf16.mxu0 0
  %75 = vmatpush1.bf16.msra.mxu0 0
  %76 = vmatprep.subr.bf16.mxu0 0
  %77 = vmatpush1.bf16.msra.mxu0 0
  %78 = vmatprep.subr.bf16.mxu0 0
  %79 = vmatpush1.bf16.msra.mxu0 0
  %80 = vmatprep.subr.bf16.mxu0 0
  %81 = vmatpush1.bf16.msra.mxu0 0
  %82 = vmatprep.subr.bf16.mxu0 0
  %83 = vmatpush1.bf16.msra.mxu0 0
  %84 = vmatprep.subr.bf16.mxu0 0
  %85 = vmatpush1.bf16.msra.mxu0 0
  %86 = vmatprep.subr.bf16.mxu0 0
  %87 = vmatpush1.bf16.msra.mxu0 0
  %88 = vmatprep.subr.bf16.mxu0 0
  %89 = vmatpush1.bf16.msra.mxu0 0
  %90 = vmatprep.subr.bf16.mxu0 0
  %91 = vmatpush1.bf16.msra.mxu0 0
  %92 = vmatprep.mubr.bf16.mxu0 0
  %93 = vmatmul.mubr.bf16.gmra.mrb[0].mxu0 %v58
  %v94 = vpop.f32.mrb[0].mxu0
  %v95 = vadd.f32 0.0, %v94
  %v96 = vpop.f32.mrb[0].mxu0
  %v97 = vpop.f32.mrb[0].mxu0
  %v98 = vadd.f32 0.0, %v97
  %v99 = vpop.f32.mrb[0].mxu0
  %100 = vdwg.mxu0
  %v101 = vadd.f32 %v31, %v95
  %v102 = vadd.f32 %v32, %v98
  %103 = vst.msk [vmem:[#allocation2] sm:$0xff] %vm56, %v101
  %104 = vst.msk [vmem:[#allocation2 + $0x8] sm:$0xff] %vm56, %v102
  // Predicated region
  $region30: #{transformer_forward.15} parent=0 // pred_check
    %p105 = pneg %p24
  $region31: #{transformer_forward.15} parent=0 // pred_check_branch
    %107 = sbr.rel (%p105) target = $region33
  $region32: #{transformer_forward.15} parent=0 // pred_region
    %v108 = vld [vmem:[#allocation2] sm:$0xff]
    %v109 = vld [vmem:[#allocation2 + $0x8] sm:$0xff]
    %v110 = vld [vmem:[%s2] sm:$0x1]
    %v112 = vlaneseq
    %v113 = vshrl.u32 %v112, 7
    %v114 = vsub.s32 0, %v113
    %v115 = vrot.slane %v110, %v114
    %v117 = vadd.f32 %v108, %v115
    %v118 = vadd.f32 %v109, %v115
    %v119 = vld [vmem:[%s3] sm:$0xf]
    %v120 = vld [vmem:[%s3 + $0x4] sm:$0xf]
    %v121 = vunpack.c.l.bf16 %v119
    %v122 = vunpack.c.l.bf16 %v120
    %v123 = vadd.f32 %v117, %v121
    %v124 = vadd.f32 %v118, %v122
    %v125 = vsel %vm56, %v123, 0.0
    %126 = vadd.xlane.f32.xlu0 %v125
    %v127 = vpop.xlane.xlu0 %126
    %v128 = vsel %vm56, %v124, 0.0
    %129 = vadd.xlane.f32.xlu0 %v128
    %v130 = vpop.xlane.xlu0 %129
    %v131 = vrcp.pop 32.0
    %v132 = vmul.f32 %v127, %v131
    %v133 = vmul.f32 %v130, %v131
    %v134 = vsub.f32 %v123, %v132
    %v135 = vsub.f32 %v124, %v133
    %v136 = vmul.f32 %v134, %v134
    %v137 = vmul.f32 %v135, %v135
    %v138 = vsel %vm56, %v136, 0.0
    %139 = vadd.xlane.f32.xlu0 %v138
    %v140 = vpop.xlane.xlu0 %139
    %v141 = vsel %vm56, %v137, 0.0
    %142 = vadd.xlane.f32.xlu0 %v141
    %v143 = vpop.xlane.xlu0 %142
    %v144 = vmul.f32 %v140, %v131
    %v145 = vmul.f32 %v143, %v131
    %v146 = vadd.f32 %v144, 1e-05
    %v147 = vadd.f32 %v145, 1e-05
    %v148 = vrsqrt.pop %v146
    %v149 = vrsqrt.pop %v147
    %v150 = vmul.f32 %v134, %v148
    %v151 = vmul.f32 %v135, %v149
    %v152 = vld [vmem:[%s4] sm:$0x1]
    %v154 = vlaneseq
    %v155 = vshrl.u32 %v154, 7
    %v156 = vsub.s32 0, %v155
    %v157 = vrot.slane %v152, %v156
    %v159 = vmul.f32 %v150, %v157
    %v160 = vmul.f32 %v151, %v157
    %v161 = vld [vmem:[%s5] sm:$0x1]
    %v163 = vlaneseq
    %v164 = vshrl.u32 %v163, 7
    %v165 = vsub.s32 0, %v164
    %v166 = vrot.slane %v161, %v165
    %v168 = vadd.f32 %v159, %v166
    %v169 = vadd.f32 %v160, %v166
    %v170 = vpack.c.bf16 %v169, %v168
    %v172 = vunpack.c.l.b16 %v170
    %v173 = vunpack.c.h.b16 %v170
    %v174 = vpack.c.b16 %v172, %v172
    %v175 = vpack.c.b16 %v173, %v173
    %vm178 = vcmask 257024
    %179 = vst.msk [vmem:[%s6] sm:$0xf] %vm178, %v174
    %180 = vst.msk [vmem:[%s6 + $0x4] sm:$0xf] %vm178, %v175
  $region33: #{transformer_forward.15} parent=0 // pred_fallthru
    _
  // Predicated region
  $region34: #{transformer_forward.15} parent=0 // pred_check
    _
  $region35: #{transformer_forward.15} parent=0 // pred_check_branch
    %182 = sbr.rel (0) target = $region37
  $region36: #{transformer_forward.15} parent=0 // pred_region
    _
  $region37: #{transformer_forward.15} parent=0 // pred_fallthru
    _
  // Predicated region
  $region38: #{transformer_forward.15} parent=0 // pred_check
    _
  $region39: #{transformer_forward.15} parent=0 // pred_check_branch
    %184 = sbr.rel (0) target = $region41
  $region40: #{transformer_forward.15} parent=0 // pred_region
    _
  $region41: #{transformer_forward.15} parent=0 // pred_fallthru
    _

// kernel: transformer_forward.17
$region0: #{transformer_forward.17}
  #allocation0 [shape = 'u32[]', space=smem, size = 0x4, offset = 0x4, fixed_abs, tag = 'smem constant byte address 0x4 - core index']
  #allocation1 [shape = 'u32[144,128]{1,0:T(1,128)}', space=vmem, size = 0x12000, scoped, tag = 'internal scratch']
  #allocation2 [shape = 'f32[16,32]{1,0:T(8,128)}', space=vmem, size = 0x2000, scoped, tag = 'scratch operand']
  %s0 = inlined_call_operand.vmem [shape: bf16[16,2048], index: 0, kind: input, shape index: {}]
  %s1 = inlined_call_operand.vmem [shape: bf16[2048,32], index: 1, kind: input, shape index: {}]
  %s2 = inlined_call_operand.vmem [shape: f32[1,32], index: 2, kind: input, shape index: {}]
  %s3 = inlined_call_operand.vmem [shape: bf16[16,32], index: 3, kind: input, shape index: {}]
  %s4 = inlined_call_operand.vmem [shape: f32[1,32], index: 4, kind: input, shape index: {}]
  %s5 = inlined_call_operand.vmem [shape: f32[1,32], index: 5, kind: input, shape index: {}]
  %s6 = inlined_call_operand.vmem [shape: bf16[16,32], index: 6, kind: output, shape index: {}]
  %s7 = sld [smem:[#allocation0]]
  $region88: #{transformer_forward.17} parent=0
    _
  %s9 = ssub.s32 1, %s7
  %s10 = scalar_select 0, %s9, %s7
  $region1: #{transformer_forward.17} parent=0
    #allocation3 [shape = 'u8[32768]{0}', space=vmem, size = 0x8000, scoped, tag = 'input window, operand 0']
    loop: start=0, step=1, limit=6
    $region2: #{transformer_forward.17} parent=1 // loop_pre_header
      _
    $region3: #{transformer_forward.17} parent=1 // loop_header
      %s12 = sphi 0, %s16
      %p13 = scmp.ge.s32.totalorder %s12, 6
      %s19 = sphi 0, %s31
      %s20 = sphi 0, %s27
      %s21 = sphi 0, %s19
      %s22 = sphi 0, %s20
      %s23 = sphi 0, %s21
      %s24 = sphi 0, %s22
      %s36 = sphi 0, %s38
      %s39 = sphi 0, %s36
      %s40 = sphi 0, %s39
      %s56 = sphi 0, %s40
      %s62 = sphi 0, %s64
      %s65 = sphi 0, %s62
      %s66 = sphi 0, %s65
      %s82 = sphi 0, %s66
      %s86 = sphi 0, %s86
      %s88 = sphi 0, %s86
      %s89 = sphi 0, %s88
      %s103 = sphi 0, %s89
      %s109 = sphi 0, %s111
      %s112 = sphi 0, %s109
      %s113 = sphi 0, %s112
      %s129 = sphi 0, %s113
      %s133 = sphi 0, %s133
      %s135 = sphi 0, %s133
      %s136 = sphi 0, %s135
      %s150 = sphi 0, %s136
      %s154 = sphi 0, %s154
      %s156 = sphi 0, %s154
      %s157 = sphi 0, %s156
      %s171 = sphi 0, %s157
      %s177 = sphi 0, %s179
      %s180 = sphi 0, %s177
      %s181 = sphi 0, %s180
      %s197 = sphi 0, %s181
    $region4: #{transformer_forward.17} parent=1 // loop_header_branch
      %15 = sbr.rel (%p13) target = $region8
    $region5: #{transformer_forward.17} parent=1 // loop_body
      %s17 = ssub.s32 %s12, 1
      %s18 = ssub.s32 %s12, 2
      %s25 = sadd.s32 1, %s20
      %p26 = scmp.ge.s32.totalorder %s25, 4
      %s27 = scalar_select %p26, 0, %s25
      %s28 = sadd.s32 1, %s19
      %s29 = scalar_select %p26, %s28, %s19
      %p30 = scmp.ge.s32.totalorder %s29, 1
      %s31 = scalar_select %p30, 0, %s29
      %s32 = ssub.s32 %s19, %s31
      %s33 = ssub.s32 %s20, %s27
      %s34 = sor.u32 %s32, %s33
      %p35 = scmp.eq.s32.totalorder %s34, 0
      %s37 = sadd.s32 %s36, 1
      %s38 = scalar_select %p35, %s36, %s37
      %p41 = pneg %p35
      %p42 = scmp.eq.s32.totalorder %s12, 3
      %p43 = por %p41, %p42
      %p44 = scmp.ne.s32.totalorder %s36, %s39
      %p45 = scmp.eq.s32.totalorder %s12, 0
      %p46 = por %p44, %p45
      %p47 = scmp.ne.s32.totalorder %s36, %s39
      %p48 = scmp.eq.s32.totalorder %s17, 3
      %p49 = por %p47, %p48
      %p50 = scmp.ne.s32.totalorder %s39, %s40
      %p51 = scmp.eq.s32.totalorder %s17, 0
      %p52 = por %p50, %p51
      %p53 = scmp.ne.s32.totalorder %s39, %s40
      %p54 = scmp.eq.s32.totalorder %s18, 3
      %p55 = por %p53, %p54
      %p57 = scmp.ne.s32.totalorder %s40, %s56
      %p58 = scmp.eq.s32.totalorder %s18, 0
      %p59 = por %p57, %p58
      %s60 = ssub.s32 %s20, %s27
      %p61 = scmp.eq.s32.totalorder %s60, 0
      %s63 = sadd.s32 %s62, 1
      %s64 = scalar_select %p61, %s62, %s63
      %p67 = pneg %p61
      %p68 = scmp.eq.s32.totalorder %s12, 3
      %p69 = por %p67, %p68
      %p70 = scmp.ne.s32.totalorder %s62, %s65
      %p71 = scmp.eq.s32.totalorder %s12, 0
      %p72 = por %p70, %p71
      %p73 = scmp.ne.s32.totalorder %s62, %s65
      %p74 = scmp.eq.s32.totalorder %s17, 3
      %p75 = por %p73, %p74
      %p76 = scmp.ne.s32.totalorder %s65, %s66
      %p77 = scmp.eq.s32.totalorder %s17, 0
      %p78 = por %p76, %p77
      %p79 = scmp.ne.s32.totalorder %s65, %s66
      %p80 = scmp.eq.s32.totalorder %s18, 3
      %p81 = por %p79, %p80
      %p83 = scmp.ne.s32.totalorder %s66, %s82
      %p84 = scmp.eq.s32.totalorder %s18, 0
      %p85 = por %p83, %p84
      %s87 = sadd.s32 %s86, 1
      %p90 = scmp.eq.s32.totalorder %s12, 3
      %p91 = scmp.ne.s32.totalorder %s86, %s88
      %p92 = scmp.eq.s32.totalorder %s12, 0
      %p93 = por %p91, %p92
      %p94 = scmp.ne.s32.totalorder %s86, %s88
      %p95 = scmp.eq.s32.totalorder %s17, 3
      %p96 = por %p94, %p95
      %p97 = scmp.ne.s32.totalorder %s88, %s89
      %p98 = scmp.eq.s32.totalorder %s17, 0
      %p99 = por %p97, %p98
      %p100 = scmp.ne.s32.totalorder %s88, %s89
      %p101 = scmp.eq.s32.totalorder %s18, 3
      %p102 = por %p100, %p101
      %p104 = scmp.ne.s32.totalorder %s89, %s103
      %p105 = scmp.eq.s32.totalorder %s18, 0
      %p106 = por %p104, %p105
      %s107 = ssub.s32 %s19, %s31
      %p108 = scmp.eq.s32.totalorder %s107, 0
      %s110 = sadd.s32 %s109, 1
      %s111 = scalar_select %p108, %s109, %s110
      %p114 = pneg %p108
      %p115 = scmp.eq.s32.totalorder %s12, 3
      %p116 = por %p114, %p115
      %p117 = scmp.ne.s32.totalorder %s109, %s112
      %p118 = scmp.eq.s32.totalorder %s12, 0
      %p119 = por %p117, %p118
      %p120 = scmp.ne.s32.totalorder %s109, %s112
      %p121 = scmp.eq.s32.totalorder %s17, 3
      %p122 = por %p120, %p121
      %p123 = scmp.ne.s32.totalorder %s112, %s113
      %p124 = scmp.eq.s32.totalorder %s17, 0
      %p125 = por %p123, %p124
      %p126 = scmp.ne.s32.totalorder %s112, %s113
      %p127 = scmp.eq.s32.totalorder %s18, 3
      %p128 = por %p126, %p127
      %p130 = scmp.ne.s32.totalorder %s113, %s129
      %p131 = scmp.eq.s32.totalorder %s18, 0
      %p132 = por %p130, %p131
      %s134 = sadd.s32 %s133, 1
      %p137 = scmp.eq.s32.totalorder %s12, 3
      %p138 = scmp.ne.s32.totalorder %s133, %s135
      %p139 = scmp.eq.s32.totalorder %s12, 0
      %p140 = por %p138, %p139
      %p141 = scmp.ne.s32.totalorder %s133, %s135
      %p142 = scmp.eq.s32.totalorder %s17, 3
      %p143 = por %p141, %p142
      %p144 = scmp.ne.s32.totalorder %s135, %s136
      %p145 = scmp.eq.s32.totalorder %s17, 0
      %p146 = por %p144, %p145
      %p147 = scmp.ne.s32.totalorder %s135, %s136
      %p148 = scmp.eq.s32.totalorder %s18, 3
      %p149 = por %p147, %p148
      %p151 = scmp.ne.s32.totalorder %s136, %s150
      %p152 = scmp.eq.s32.totalorder %s18, 0
      %p153 = por %p151, %p152
      %s155 = sadd.s32 %s154, 1
      %p158 = scmp.eq.s32.totalorder %s12, 3
      %p159 = scmp.ne.s32.totalorder %s154, %s156
      %p160 = scmp.eq.s32.totalorder %s12, 0
      %p161 = por %p159, %p160
      %p162 = scmp.ne.s32.totalorder %s154, %s156
      %p163 = scmp.eq.s32.totalorder %s17, 3
      %p164 = por %p162, %p163
      %p165 = scmp.ne.s32.totalorder %s156, %s157
      %p166 = scmp.eq.s32.totalorder %s17, 0
      %p167 = por %p165, %p166
      %p168 = scmp.ne.s32.totalorder %s156, %s157
      %p169 = scmp.eq.s32.totalorder %s18, 3
      %p170 = por %p168, %p169
      %p172 = scmp.ne.s32.totalorder %s157, %s171
      %p173 = scmp.eq.s32.totalorder %s18, 0
      %p174 = por %p172, %p173
      %s175 = ssub.s32 %s19, %s31
      %p176 = scmp.eq.s32.totalorder %s175, 0
      %s178 = sadd.s32 %s177, 1
      %s179 = scalar_select %p176, %s177, %s178
      %p182 = pneg %p176
      %p183 = scmp.eq.s32.totalorder %s12, 3
      %p184 = por %p182, %p183
      %p185 = scmp.ne.s32.totalorder %s177, %s180
      %p186 = scmp.eq.s32.totalorder %s12, 0
      %p187 = por %p185, %p186
      %p188 = scmp.ne.s32.totalorder %s177, %s180
      %p189 = scmp.eq.s32.totalorder %s17, 3
      %p190 = por %p188, %p189
      %p191 = scmp.ne.s32.totalorder %s180, %s181
      %p192 = scmp.eq.s32.totalorder %s17, 0
      %p193 = por %p191, %p192
      %p194 = scmp.ne.s32.totalorder %s180, %s181
      %p195 = scmp.eq.s32.totalorder %s18, 3
      %p196 = por %p194, %p195
      %p198 = scmp.ne.s32.totalorder %s181, %s197
      %p199 = scmp.eq.s32.totalorder %s18, 0
      %p200 = por %p198, %p199
      %p201 = scmp.le.s32.totalorder 1, %s12
      %p202 = scmp.lt.s32.totalorder %s12, 5
      %p203 = pnand %p201, %p202
      %p204 = pneg %p203
      // Predicated region
      $region9: #{transformer_forward.17} parent=5 // pred_check
        _
      $region10: #{transformer_forward.17} parent=5 // pred_check_branch
        %206 = sbr.rel (%p203) target = $region12
      $region11: #{transformer_forward.17} parent=5 // pred_region
        %s207 = ssub.s32 %s12, 1
        // Predicated region
        $region13: #{transformer_forward.17} parent=11 // pred_check
          %p208 = pneg %p99
        $region14: #{transformer_forward.17} parent=11 // pred_check_branch
          %210 = sbr.rel (%p208) target = $region16
        $region15: #{transformer_forward.17} parent=11 // pred_region
          _
        $region16: #{transformer_forward.17} parent=11 // pred_fallthru
          _
        // Predicated region
        $region17: #{transformer_forward.17} parent=11 // pred_check
          %p211 = pneg %p125
        $region18: #{transformer_forward.17} parent=11 // pred_check_branch
          %213 = sbr.rel (%p211) target = $region20
        $region19: #{transformer_forward.17} parent=11 // pred_region
          %s214 = smul.u32 2, %s21
          %p215 = scmp.lt.s32.totalorder %s214, 1
          %s216 = scalar_select %p215, %s214, 1
          %s217 = smul.addr %s216, 4
          %s218 = scalar_lea.vmem %s3, %s217
          %s219 = smul.u32 2, %s21
        $region20: #{transformer_forward.17} parent=11 // pred_fallthru
          _
        // Predicated region
        $region21: #{transformer_forward.17} parent=11 // pred_check
          %p220 = pneg %p146
        $region22: #{transformer_forward.17} parent=11 // pred_check_branch
          %222 = sbr.rel (%p220) target = $region24
        $region23: #{transformer_forward.17} parent=11 // pred_region
          _
        $region24: #{transformer_forward.17} parent=11 // pred_fallthru
          _
        // Predicated region
        $region25: #{transformer_forward.17} parent=11 // pred_check
          %p223 = pneg %p167
        $region26: #{transformer_forward.17} parent=11 // pred_check_branch
          %225 = sbr.rel (%p223) target = $region28
        $region27: #{transformer_forward.17} parent=11 // pred_region
          _
        $region28: #{transformer_forward.17} parent=11 // pred_fallthru
          _
      $region12: #{transformer_forward.17} parent=5 // pred_fallthru
        _
      %p226 = scmp.lt.s32.totalorder %s12, 4
      // Predicated region
      $region29: #{transformer_forward.17} parent=5 // pred_check
        %p227 = pneg %p226
      $region30: #{transformer_forward.17} parent=5 // pred_check_branch
        %229 = sbr.rel (%p227) target = $region32
      $region31: #{transformer_forward.17} parent=5 // pred_region
        // Predicated region
        $region33: #{transformer_forward.17} parent=31 // pred_check
          %p230 = pneg %p46
        $region34: #{transformer_forward.17} parent=31 // pred_check_branch
          %232 = sbr.rel (%p230) target = $region36
        $region35: #{transformer_forward.17} parent=31 // pred_region
          %s233 = sand.u32 %s36, 1
          %s234 = sand.u32 %s36, 1
          %s235 = smul.addr %s234, 32
          %s236 = scalar_lea.vmem [#allocation3], %s235
          %s237 = smul.u32 2, %s19
          %s238 = smul.u32 4, %s20
          %s239 = smul.addr %s237, 16
          %s240 = sadd.s32 %s238, %s239
          %s241 = smul.addr %s240, 4
          %s242 = scalar_lea.vmem %s0, %s241
          // Predicated region
          $region37: #{transformer_forward.17} parent=35 // pred_check
            _
          $region38: #{transformer_forward.17} parent=35 // pred_check_branch
            %244 = sbr.rel (0) target = $region40
          $region39: #{transformer_forward.17} parent=35 // pred_region
            // Predicated region
            $region41: #{transformer_forward.17} parent=39 // pred_check
              _
            $region42: #{transformer_forward.17} parent=39 // pred_check_branch
              %246 = sbr.rel (0) target = $region44
            $region43: #{transformer_forward.17} parent=39 // pred_region
              loop: start=0, step=1, limit=1
              $region45: #{transformer_forward.17} parent=43 // loop_pre_header
                _
              $region46: #{transformer_forward.17} parent=43 // loop_header
                %s248 = sphi 0, %s252
                %p249 = scmp.ge.s32.totalorder %s248, 1
                %s253 = sphi %s242, %s242
                %s254 = sphi %s236, %s236
              $region47: #{transformer_forward.17} parent=43 // loop_header_branch
                %251 = sbr.rel (%p249) target = $region51
              $region48: #{transformer_forward.17} parent=43 // loop_body
                %v255 = vld [vmem:[%s253] sm:$0xff]
                %256 = vst [vmem:[%s254] sm:$0xff] %v255
                %v257 = vld [vmem:[%s253 + $0x8] sm:$0xff]
                %258 = vst [vmem:[%s254 + $0x8] sm:$0xff] %v257
                %v259 = vld [vmem:[%s253 + $0x40] sm:$0xff]
                %260 = vst [vmem:[%s254 + $0x10] sm:$0xff] %v259
                %v261 = vld [vmem:[%s253 + $0x48] sm:$0xff]
                %262 = vst [vmem:[%s254 + $0x18] sm:$0xff] %v261
              $region49: #{transformer_forward.17} parent=43 // loop_footer
                %s252 = sadd.s32 1, %s248
              $region50: #{transformer_forward.17} parent=43 // loop_footer_branch
                %247 = sbr.rel target = $region46
              $region51: #{transformer_forward.17} parent=43 // loop_exit
                _
            $region44: #{transformer_forward.17} parent=39 // pred_fallthru
              _
            // Predicated region
            $region52: #{transformer_forward.17} parent=39 // pred_check
              _
            $region53: #{transformer_forward.17} parent=39 // pred_check_branch
              %264 = sbr.rel target = $region55
            $region54: #{transformer_forward.17} parent=39 // pred_region
              _
            $region55: #{transformer_forward.17} parent=39 // pred_fallthru
              _
          $region40: #{transformer_forward.17} parent=35 // pred_fallthru
            _
          %265 = vnop
        $region36: #{transformer_forward.17} parent=31 // pred_fallthru
          _
        // Predicated region
        $region56: #{transformer_forward.17} parent=31 // pred_check
          %p266 = pneg %p72
        $region57: #{transformer_forward.17} parent=31 // pred_check_branch
          %268 = sbr.rel (%p266) target = $region59
        $region58: #{transformer_forward.17} parent=31 // pred_region
          %s269 = smul.u32 64, %s20
          %p270 = scmp.lt.s32.totalorder %s269, 255
          %s271 = scalar_select %p270, %s269, 255
          %s272 = smul.addr %s271, 4
          %s273 = scalar_lea.vmem %s1, %s272
          %s274 = smul.u32 64, %s20
        $region59: #{transformer_forward.17} parent=31 // pred_fallthru
          _
      $region32: #{transformer_forward.17} parent=5 // pred_fallthru
        _
      %p275 = scmp.le.s32.totalorder 1, %s12
      %p276 = scmp.lt.s32.totalorder %s12, 5
      %p277 = pnand %p275, %p276
      %p278 = pneg %p277
      // Predicated region
      $region60: #{transformer_forward.17} parent=5 // pred_check
        _
      $region61: #{transformer_forward.17} parent=5 // pred_check_branch
        %280 = sbr.rel (%p277) target = $region63
      $region62: #{transformer_forward.17} parent=5 // pred_region
        %s281 = ssub.s32 %s12, 1
        %s282 = sand.u32 %s39, 1
        %s283 = sand.u32 %s39, 1
        %s284 = smul.addr %s283, 32
        %s285 = scalar_lea.vmem [#allocation3], %s284
        // Predicated region
        $region64: #{transformer_forward.17} parent=62 // pred_check
          %p286 = pneg %p52
        $region65: #{transformer_forward.17} parent=62 // pred_check_branch
          %288 = sbr.rel (%p286) target = $region67
        $region66: #{transformer_forward.17} parent=62 // pred_region
          _
        $region67: #{transformer_forward.17} parent=62 // pred_fallthru
          _
        %s289 = sand.u32 %s39, 1
        %s290 = sand.u32 %s39, 1
        %s291 = smul.addr %s290, 32
        %s292 = scalar_lea.vmem [#allocation3], %s291
        %p293 = pneg %p52
        %p294 = pneg %p49
        %s295 = smul.u32 64, %s22
        %p296 = scmp.lt.s32.totalorder %s295, 255
        %s297 = scalar_select %p296, %s295, 255
        %s298 = smul.addr %s297, 4
        %s299 = scalar_lea.vmem %s1, %s298
        %p300 = pneg %p78
        %p301 = pneg %p75
        %p302 = pneg %p99
        %p303 = pneg %p96
        %s304 = smul.u32 2, %s21
        %p305 = scmp.lt.s32.totalorder %s304, 1
        %s306 = scalar_select %p305, %s304, 1
        %s307 = smul.addr %s306, 4
        %s308 = scalar_lea.vmem %s3, %s307
        %p309 = pneg %p125
        %p310 = pneg %p122
        %p311 = pneg %p146
        %p312 = pneg %p143
        %p313 = pneg %p167
        %p314 = pneg %p164
        %p315 = pneg %p193
        %p316 = pneg %p190
        %s317 = smul.u32 2, %s21
        %p318 = scmp.lt.s32.totalorder %s317, 1
        %s319 = scalar_select %p318, %s317, 1
        %s320 = smul.addr %s319, 4
        %s321 = scalar_lea.vmem %s6, %s320
        %s322 = smul.u32 2, %s21
        %s323 = smul.u32 4, %s22
        %s324 = smul.u32 64, %s22
        %p325 = scmp.lt.s32.totalorder %s324, 255
        %s326 = scalar_select %p325, %s324, 255
        %s327 = smul.addr %s326, 4
        %s328 = scalar_lea.vmem %s1, %s327
        %s329 = smul.u32 64, %s22
        %s330 = smul.u32 2, %s21
        %p331 = scmp.lt.s32.totalorder %s330, 1
        %s332 = scalar_select %p331, %s330, 1
        %s333 = smul.addr %s332, 4
        %s334 = scalar_lea.vmem %s3, %s333
        %s335 = smul.u32 2, %s21
        %s336 = smul.u32 2, %s21
        %p337 = scmp.lt.s32.totalorder %s336, 1
        %s338 = scalar_select %p337, %s336, 1
        %s339 = smul.addr %s338, 4
        %s340 = scalar_lea.vmem %s6, %s339
        %s341 = smul.u32 2, %s21
        %p343 = scmp.eq.s32.totalorder %s22, 0
        // Predicated region
        $region68: #{transformer_forward.17} parent=62 // pred_check
          %p344 = pneg %p343
        $region69: #{transformer_forward.17} parent=62 // pred_check_branch
          %346 = sbr.rel (%p344) target = $region71
        $region70: #{transformer_forward.17} parent=62 // pred_region
          %vm347 = vcmask 261120
          %348 = vst.msk [vmem:[#allocation2] sm:$0xff] %vm347, 0.0
          %349 = vst.msk [vmem:[#allocation2 + $0x8] sm:$0xff] %vm347, 0.0
        $region71: #{transformer_forward.17} parent=62 // pred_fallthru
          _
        %v350 = vld [vmem:[#allocation2] sm:$0xff]
        %v351 = vld [vmem:[#allocation2 + $0x8] sm:$0xff]
        %v352 = vld [vmem:[%s285] sm:$0xff]
        %v353 = vld [vmem:[%s285 + $0x8] sm:$0xff]
        %v354 = vld [vmem:[%s285 + $0x10] sm:$0xff]
        %v355 = vld [vmem:[%s285 + $0x18] sm:$0xff]
        %v356 = vld [vmem:[%s328] sm:$0xf]
        %v357 = vld [vmem:[%s328 + $0x4] sm:$0xf]
        %v358 = vld [vmem:[%s328 + $0x8] sm:$0xf]
        %v359 = vld [vmem:[%s328 + $0xc] sm:$0xf]
        %v360 = vld [vmem:[%s328 + $0x10] sm:$0xf]
        %v361 = vld [vmem:[%s328 + $0x14] sm:$0xf]
        %v362 = vld [vmem:[%s328 + $0x18] sm:$0xf]
        %v363 = vld [vmem:[%s328 + $0x1c] sm:$0xf]
        %v364 = vld [vmem:[%s328 + $0x20] sm:$0xf]
        %v365 = vld [vmem:[%s328 + $0x24] sm:$0xf]
        %v366 = vld [vmem:[%s328 + $0x28] sm:$0xf]
        %v367 = vld [vmem:[%s328 + $0x2c] sm:$0xf]
        %v368 = vld [vmem:[%s328 + $0x30] sm:$0xf]
        %v369 = vld [vmem:[%s328 + $0x34] sm:$0xf]
        %v370 = vld [vmem:[%s328 + $0x38] sm:$0xf]
        %v371 = vld [vmem:[%s328 + $0x3c] sm:$0xf]
        %v372 = vld [vmem:[%s328 + $0x40] sm:$0xf]
        %v373 = vld [vmem:[%s328 + $0x44] sm:$0xf]
        %v374 = vld [vmem:[%s328 + $0x48] sm:$0xf]
        %v375 = vld [vmem:[%s328 + $0x4c] sm:$0xf]
        %v376 = vld [vmem:[%s328 + $0x50] sm:$0xf]
        %v377 = vld [vmem:[%s328 + $0x54] sm:$0xf]
        %v378 = vld [vmem:[%s328 + $0x58] sm:$0xf]
        %v379 = vld [vmem:[%s328 + $0x5c] sm:$0xf]
        %v380 = vld [vmem:[%s328 + $0x60] sm:$0xf]
        %v381 = vld [vmem:[%s328 + $0x64] sm:$0xf]
        %v382 = vld [vmem:[%s328 + $0x68] sm:$0xf]
        %v383 = vld [vmem:[%s328 + $0x6c] sm:$0xf]
        %v384 = vld [vmem:[%s328 + $0x70] sm:$0xf]
        %v385 = vld [vmem:[%s328 + $0x74] sm:$0xf]
        %v386 = vld [vmem:[%s328 + $0x78] sm:$0xf]
        %v387 = vld [vmem:[%s328 + $0x7c] sm:$0xf]
        %v388 = vld [vmem:[%s328 + $0x80] sm:$0xf]
        %v389 = vld [vmem:[%s328 + $0x84] sm:$0xf]
        %v390 = vld [vmem:[%s328 + $0x88] sm:$0xf]
        %v391 = vld [vmem:[%s328 + $0x8c] sm:$0xf]
        %v392 = vld [vmem:[%s328 + $0x90] sm:$0xf]
        %v393 = vld [vmem:[%s328 + $0x94] sm:$0xf]
        %v394 = vld [vmem:[%s328 + $0x98] sm:$0xf]
        %v395 = vld [vmem:[%s328 + $0x9c] sm:$0xf]
        %v396 = vld [vmem:[%s328 + $0xa0] sm:$0xf]
        %v397 = vld [vmem:[%s328 + $0xa4] sm:$0xf]
        %v398 = vld [vmem:[%s328 + $0xa8] sm:$0xf]
        %v399 = vld [vmem:[%s328 + $0xac] sm:$0xf]
        %v400 = vld [vmem:[%s328 + $0xb0] sm:$0xf]
        %v401 = vld [vmem:[%s328 + $0xb4] sm:$0xf]
        %v402 = vld [vmem:[%s328 + $0xb8] sm:$0xf]
        %v403 = vld [vmem:[%s328 + $0xbc] sm:$0xf]
        %v404 = vld [vmem:[%s328 + $0xc0] sm:$0xf]
        %v405 = vld [vmem:[%s328 + $0xc4] sm:$0xf]
        %v406 = vld [vmem:[%s328 + $0xc8] sm:$0xf]
        %v407 = vld [vmem:[%s328 + $0xcc] sm:$0xf]
        %v408 = vld [vmem:[%s328 + $0xd0] sm:$0xf]
        %v409 = vld [vmem:[%s328 + $0xd4] sm:$0xf]
        %v410 = vld [vmem:[%s328 + $0xd8] sm:$0xf]
        %v411 = vld [vmem:[%s328 + $0xdc] sm:$0xf]
        %v412 = vld [vmem:[%s328 + $0xe0] sm:$0xf]
        %v413 = vld [vmem:[%s328 + $0xe4] sm:$0xf]
        %v414 = vld [vmem:[%s328 + $0xe8] sm:$0xf]
        %v415 = vld [vmem:[%s328 + $0xec] sm:$0xf]
        %v416 = vld [vmem:[%s328 + $0xf0] sm:$0xf]
        %v417 = vld [vmem:[%s328 + $0xf4] sm:$0xf]
        %v418 = vld [vmem:[%s328 + $0xf8] sm:$0xf]
        %v419 = vld [vmem:[%s328 + $0xfc] sm:$0xf]
        %v424 = vunpack.c.l.b16 %v352
        %v425 = vunpack.c.h.b16 %v352
        %v426 = vunpack.c.l.b16 %v353
        %v427 = vunpack.c.h.b16 %v353
        %v428 = vunpack.c.l.b16 %v354
        %v429 = vunpack.c.h.b16 %v354
        %v430 = vunpack.c.l.b16 %v355
        %v431 = vunpack.c.h.b16 %v355
        %v432 = vpack.c.b16 %v428, %v424
        %v433 = vpack.c.b16 %v429, %v425
        %v434 = vpack.c.b16 %v430, %v426
        %v435 = vpack.c.b16 %v431, %v427
        %v504 = vunpack.c.l.b16 %v356
        %v505 = vunpack.c.l.b16 %v357
        %v506 = vunpack.c.l.b16 %v358
        %v507 = vunpack.c.l.b16 %v359
        %v508 = vunpack.c.l.b16 %v360
        %v509 = vunpack.c.l.b16 %v361
        %v510 = vunpack.c.l.b16 %v362
        %v511 = vunpack.c.l.b16 %v363
        %v512 = vunpack.c.l.b16 %v364
        %v513 = vunpack.c.l.b16 %v365
        %v514 = vunpack.c.l.b16 %v366
        %v515 = vunpack.c.l.b16 %v367
        %v516 = vunpack.c.l.b16 %v368
        %v517 = vunpack.c.l.b16 %v369
        %v518 = vunpack.c.l.b16 %v370
        %v519 = vunpack.c.l.b16 %v371
        %v520 = vunpack.c.l.b16 %v372
        %v521 = vunpack.c.l.b16 %v373
        %v522 = vunpack.c.l.b16 %v374
        %v523 = vunpack.c.l.b16 %v375
        %v524 = vunpack.c.l.b16 %v376
        %v525 = vunpack.c.l.b16 %v377
        %v526 = vunpack.c.l.b16 %v378
        %v527 = vunpack.c.l.b16 %v379
        %v528 = vunpack.c.l.b16 %v380
        %v529 = vunpack.c.l.b16 %v381
        %v530 = vunpack.c.l.b16 %v382
        %v531 = vunpack.c.l.b16 %v383
        %v532 = vunpack.c.l.b16 %v384
        %v533 = vunpack.c.l.b16 %v385
        %v534 = vunpack.c.l.b16 %v386
        %v535 = vunpack.c.l.b16 %v387
        %v536 = vunpack.c.l.b16 %v388
        %v537 = vunpack.c.l.b16 %v389
        %v538 = vunpack.c.l.b16 %v390
        %v539 = vunpack.c.l.b16 %v391
        %v540 = vunpack.c.l.b16 %v392
        %v541 = vunpack.c.l.b16 %v393
        %v542 = vunpack.c.l.b16 %v394
        %v543 = vunpack.c.l.b16 %v395
        %v544 = vunpack.c.l.b16 %v396
        %v545 = vunpack.c.l.b16 %v397
        %v546 = vunpack.c.l.b16 %v398
        %v547 = vunpack.c.l.b16 %v399
        %v548 = vunpack.c.l.b16 %v400
        %v549 = vunpack.c.l.b16 %v401
        %v550 = vunpack.c.l.b16 %v402
        %v551 = vunpack.c.l.b16 %v403
        %v552 = vunpack.c.l.b16 %v404
        %v553 = vunpack.c.l.b16 %v405
        %v554 = vunpack.c.l.b16 %v406
        %v555 = vunpack.c.l.b16 %v407
        %v556 = vunpack.c.l.b16 %v408
        %v557 = vunpack.c.l.b16 %v409
        %v558 = vunpack.c.l.b16 %v410
        %v559 = vunpack.c.l.b16 %v411
        %v560 = vunpack.c.l.b16 %v412
        %v561 = vunpack.c.l.b16 %v413
        %v562 = vunpack.c.l.b16 %v414
        %v563 = vunpack.c.l.b16 %v415
        %v564 = vunpack.c.l.b16 %v416
        %v565 = vunpack.c.l.b16 %v417
        %v566 = vunpack.c.l.b16 %v418
        %v567 = vunpack.c.l.b16 %v419
        %v568 = vpack.c.b16 %v505, %v504
        %v569 = vpack.c.b16 %v507, %v506
        %v570 = vpack.c.b16 %v509, %v508
        %v571 = vpack.c.b16 %v511, %v510
        %v572 = vpack.c.b16 %v513, %v512
        %v573 = vpack.c.b16 %v515, %v514
        %v574 = vpack.c.b16 %v517, %v516
        %v575 = vpack.c.b16 %v519, %v518
        %v576 = vpack.c.b16 %v521, %v520
        %v577 = vpack.c.b16 %v523, %v522
        %v578 = vpack.c.b16 %v525, %v524
        %v579 = vpack.c.b16 %v527, %v526
        %v580 = vpack.c.b16 %v529, %v528
        %v581 = vpack.c.b16 %v531, %v530
        %v582 = vpack.c.b16 %v533, %v532
        %v583 = vpack.c.b16 %v535, %v534
        %v584 = vpack.c.b16 %v537, %v536
        %v585 = vpack.c.b16 %v539, %v538
        %v586 = vpack.c.b16 %v541, %v540
        %v587 = vpack.c.b16 %v543, %v542
        %v588 = vpack.c.b16 %v545, %v544
        %v589 = vpack.c.b16 %v547, %v546
        %v590 = vpack.c.b16 %v549, %v548
        %v591 = vpack.c.b16 %v551, %v550
        %v592 = vpack.c.b16 %v553, %v552
        %v593 = vpack.c.b16 %v555, %v554
        %v594 = vpack.c.b16 %v557, %v556
        %v595 = vpack.c.b16 %v559, %v558
        %v596 = vpack.c.b16 %v561, %v560
        %v597 = vpack.c.b16 %v563, %v562
        %v598 = vpack.c.b16 %v565, %v564
        %v599 = vpack.c.b16 %v567, %v566
        %632 = vmatprep.subr.bf16.mxu0 0
        %633 = vmatpush1.bf16.msra.mxu0 %v568
        %634 = vmatprep.subr.bf16.mxu0 0
        %635 = vmatpush1.bf16.msra.mxu0 %v569
        %636 = vmatprep.subr.bf16.mxu0 0
        %637 = vmatpush1.bf16.msra.mxu0 %v570
        %638 = vmatprep.subr.bf16.mxu0 0
        %639 = vmatpush1.bf16.msra.mxu0 %v571
        %640 = vmatprep.subr.bf16.mxu0 0
        %641 = vmatpush1.bf16.msra.mxu0 %v572
        %642 = vmatprep.subr.bf16.mxu0 0
        %643 = vmatpush1.bf16.msra.mxu0 %v573
        %644 = vmatprep.subr.bf16.mxu0 0
        %645 = vmatpush1.bf16.msra.mxu0 %v574
        %646 = vmatprep.subr.bf16.mxu0 0
        %647 = vmatpush1.bf16.msra.mxu0 %v575
        %648 = vmatprep.subr.bf16.mxu0 0
        %649 = vmatpush1.bf16.msra.mxu0 %v576
        %650 = vmatprep.subr.bf16.mxu0 0
        %651 = vmatpush1.bf16.msra.mxu0 %v577
        %652 = vmatprep.subr.bf16.mxu0 0
        %653 = vmatpush1.bf16.msra.mxu0 %v578
        %654 = vmatprep.subr.bf16.mxu0 0
        %655 = vmatpush1.bf16.msra.mxu0 %v579
        %656 = vmatprep.subr.bf16.mxu0 0
        %657 = vmatpush1.bf16.msra.mxu0 %v580
        %658 = vmatprep.subr.bf16.mxu0 0
        %659 = vmatpush1.bf16.msra.mxu0 %v581
        %660 = vmatprep.subr.bf16.mxu0 0
        %661 = vmatpush1.bf16.msra.mxu0 %v582
        %662 = vmatprep.subr.bf16.mxu0 0
        %663 = vmatpush1.bf16.msra.mxu0 %v583
        %664 = vmatprep.mubr.bf16.mxu0 %v433
        %665 = vmatmul.mubr.bf16.gmra.mrb[0].mxu0 %v432
        %v666 = vpop.f32.mrb[0].mxu0
        %v667 = vadd.f32 0.0, %v666
        %v668 = vpop.f32.mrb[0].mxu0
        %v669 = vpop.f32.mrb[0].mxu0
        %v670 = vadd.f32 0.0, %v669
        %v671 = vpop.f32.mrb[0].mxu0
        %672 = vdwg.mxu0
        %673 = vmatprep.subr.bf16.mxu0 0
        %674 = vmatpush1.bf16.msra.mxu0 %v584
        %675 = vmatprep.subr.bf16.mxu0 0
        %676 = vmatpush1.bf16.msra.mxu0 %v585
        %677 = vmatprep.subr.bf16.mxu0 0
        %678 = vmatpush1.bf16.msra.mxu0 %v586
        %679 = vmatprep.subr.bf16.mxu0 0
        %680 = vmatpush1.bf16.msra.mxu0 %v587
        %681 = vmatprep.subr.bf16.mxu0 0
        %682 = vmatpush1.bf16.msra.mxu0 %v588
        %683 = vmatprep.subr.bf16.mxu0 0
        %684 = vmatpush1.bf16.msra.mxu0 %v589
        %685 = vmatprep.subr.bf16.mxu0 0
        %686 = vmatpush1.bf16.msra.mxu0 %v590
        %687 = vmatprep.subr.bf16.mxu0 0
        %688 = vmatpush1.bf16.msra.mxu0 %v591
        %689 = vmatprep.subr.bf16.mxu0 0
        %690 = vmatpush1.bf16.msra.mxu0 %v592
        %691 = vmatprep.subr.bf16.mxu0 0
        %692 = vmatpush1.bf16.msra.mxu0 %v593
        %693 = vmatprep.subr.bf16.mxu0 0
        %694 = vmatpush1.bf16.msra.mxu0 %v594
        %695 = vmatprep.subr.bf16.mxu0 0
        %696 = vmatpush1.bf16.msra.mxu0 %v595
        %697 = vmatprep.subr.bf16.mxu0 0
        %698 = vmatpush1.bf16.msra.mxu0 %v596
        %699 = vmatprep.subr.bf16.mxu0 0
        %700 = vmatpush1.bf16.msra.mxu0 %v597
        %701 = vmatprep.subr.bf16.mxu0 0
        %702 = vmatpush1.bf16.msra.mxu0 %v598
        %703 = vmatprep.subr.bf16.mxu0 0
        %704 = vmatpush1.bf16.msra.mxu0 %v599
        %705 = vmatprep.mubr.bf16.mxu0 %v435
        %706 = vmatmul.mubr.bf16.gmra.mrb[0].mxu0 %v434
        %v707 = vpop.f32.mrb[0].mxu0
        %v708 = vadd.f32 %v667, %v707
        %v709 = vpop.f32.mrb[0].mxu0
        %v710 = vpop.f32.mrb[0].mxu0
        %v711 = vadd.f32 %v670, %v710
        %v712 = vpop.f32.mrb[0].mxu0
        %713 = vdwg.mxu0
        %v714 = vadd.f32 %v350, %v708
        %v715 = vadd.f32 %v351, %v711
        %vm716 = vcmask 261120
        %717 = vst.msk [vmem:[#allocation2] sm:$0xff] %vm716, %v714
        %718 = vst.msk [vmem:[#allocation2 + $0x8] sm:$0xff] %vm716, %v715
        %p719 = scmp.eq.s32.totalorder %s22, 3
        // Predicated region
        $region72: #{transformer_forward.17} parent=62 // pred_check
          %p720 = pneg %p719
        $region73: #{transformer_forward.17} parent=62 // pred_check_branch
          %722 = sbr.rel (%p720) target = $region75
        $region74: #{transformer_forward.17} parent=62 // pred_region
          %v723 = vld [vmem:[#allocation2] sm:$0xff]
          %v724 = vld [vmem:[#allocation2 + $0x8] sm:$0xff]
          %v725 = vld [vmem:[%s2] sm:$0x1]
          %v727 = vlaneseq
          %v728 = vshrl.u32 %v727, 7
          %v729 = vsub.s32 0, %v728
          %v730 = vrot.slane %v725, %v729
          %v732 = vadd.f32 %v723, %v730
          %v733 = vadd.f32 %v724, %v730
          %v734 = vld [vmem:[%s334] sm:$0xf]
          %v735 = vld [vmem:[%s334 + $0x4] sm:$0xf]
          %v736 = vunpack.c.l.bf16 %v734
          %v737 = vunpack.c.l.bf16 %v735
          %v738 = vadd.f32 %v732, %v736
          %v739 = vadd.f32 %v733, %v737
          %v740 = vsel %vm716, %v738, 0.0
          %741 = vadd.xlane.f32.xlu0 %v740
          %v742 = vpop.xlane.xlu0 %741
          %v743 = vsel %vm716, %v739, 0.0
          %744 = vadd.xlane.f32.xlu0 %v743
          %v745 = vpop.xlane.xlu0 %744
          %v746 = vrcp.pop 32.0
          %v747 = vmul.f32 %v742, %v746
          %v748 = vmul.f32 %v745, %v746
          %v749 = vsub.f32 %v738, %v747
          %v750 = vsub.f32 %v739, %v748
          %v751 = vmul.f32 %v749, %v749
          %v752 = vmul.f32 %v750, %v750
          %v753 = vsel %vm716, %v751, 0.0
          %754 = vadd.xlane.f32.xlu0 %v753
          %v755 = vpop.xlane.xlu0 %754
          %v756 = vsel %vm716, %v752, 0.0
          %757 = vadd.xlane.f32.xlu0 %v756
          %v758 = vpop.xlane.xlu0 %757
          %v759 = vmul.f32 %v755, %v746
          %v760 = vmul.f32 %v758, %v746
          %v761 = vadd.f32 %v759, 1e-05
          %v762 = vadd.f32 %v760, 1e-05
          %v763 = vrsqrt.pop %v761
          %v764 = vrsqrt.pop %v762
          %v765 = vmul.f32 %v749, %v763
          %v766 = vmul.f32 %v750, %v764
          %v767 = vld [vmem:[%s4] sm:$0x1]
          %v769 = vlaneseq
          %v770 = vshrl.u32 %v769, 7
          %v771 = vsub.s32 0, %v770
          %v772 = vrot.slane %v767, %v771
          %v774 = vmul.f32 %v765, %v772
          %v775 = vmul.f32 %v766, %v772
          %v776 = vld [vmem:[%s5] sm:$0x1]
          %v778 = vlaneseq
          %v779 = vshrl.u32 %v778, 7
          %v780 = vsub.s32 0, %v779
          %v781 = vrot.slane %v776, %v780
          %v783 = vadd.f32 %v774, %v781
          %v784 = vadd.f32 %v775, %v781
          %v785 = vpack.c.bf16 %v784, %v783
          %v787 = vunpack.c.l.b16 %v785
          %v788 = vunpack.c.h.b16 %v785
          %v789 = vpack.c.b16 %v787, %v787
          %v790 = vpack.c.b16 %v788, %v788
          %vm793 = vcmask 257024
          %794 = vst.msk [vmem:[%s340] sm:$0xf] %vm793, %v789
          %795 = vst.msk [vmem:[%s340 + $0x4] sm:$0xf] %vm793, %v790
        $region75: #{transformer_forward.17} parent=62 // pred_fallthru
          _
        %s796 = smul.u32 2, %s21
        %p797 = scmp.lt.s32.totalorder %s796, 1
        %s798 = scalar_select %p797, %s796, 1
        %s799 = smul.addr %s798, 4
        %s800 = scalar_lea.vmem %s6, %s799
        // Predicated region
        $region76: #{transformer_forward.17} parent=62 // pred_check
          %p801 = pneg %p190
        $region77: #{transformer_forward.17} parent=62 // pred_check_branch
          %803 = sbr.rel (%p801) target = $region79
        $region78: #{transformer_forward.17} parent=62 // pred_region
          %s804 = smul.u32 2, %s21
        $region79: #{transformer_forward.17} parent=62 // pred_fallthru
          _
        // Predicated region
        $region80: #{transformer_forward.17} parent=62 // pred_check
          %p805 = pneg %p190
        $region81: #{transformer_forward.17} parent=62 // pred_check_branch
          %807 = sbr.rel (%p805) target = $region83
        $region82: #{transformer_forward.17} parent=62 // pred_region
          %s808 = smul.u32 2, %s21
          %p809 = scmp.lt.s32.totalorder %s808, 1
          %s810 = scalar_select %p809, %s808, 1
          %s811 = smul.addr %s810, 4
          %s812 = scalar_lea.vmem %s6, %s811
        $region83: #{transformer_forward.17} parent=62 // pred_fallthru
          _
      $region63: #{transformer_forward.17} parent=5 // pred_fallthru
        _
      %p813 = scmp.le.s32.totalorder 2, %s12
      // Predicated region
      $region84: #{transformer_forward.17} parent=5 // pred_check
        %p814 = pneg %p813
      $region85: #{transformer_forward.17} parent=5 // pred_check_branch
        %816 = sbr.rel (%p814) target = $region87
      $region86: #{transformer_forward.17} parent=5 // pred_region
        %s817 = ssub.s32 %s12, 2
      $region87: #{transformer_forward.17} parent=5 // pred_fallthru
        _
    $region6: #{transformer_forward.17} parent=1 // loop_footer
      %s16 = sadd.s32 1, %s12
    $region7: #{transformer_forward.17} parent=1 // loop_footer_branch
      %11 = sbr.rel target = $region3
    $region8: #{transformer_forward.17} parent=1 // loop_exit
      _

// kernel: transformer_forward.23
$region0: #{transformer_forward.23}
  #allocation0 [shape = 'u32[]', space=smem, size = 0x4, offset = 0x4, fixed_abs, tag = 'smem constant byte address 0x4 - core index']
  #allocation1 [shape = 'u32[144,128]{1,0:T(1,128)}', space=vmem, size = 0x12000, scoped, tag = 'internal scratch']
  %s0 = inlined_call_operand.vmem [shape: bf16[2,32], index: 0, kind: input, shape index: {}]
  %s1 = inlined_call_operand.vmem [shape: bf16[32,16], index: 1, kind: input, shape index: {}]
  %s2 = inlined_call_operand.vmem [shape: f32[1,16], index: 2, kind: input, shape index: {}]
  %s3 = inlined_call_operand.vmem [shape: f32[1,16], index: 3, kind: input, shape index: {}]
  %s4 = inlined_call_operand.vmem [shape: f32[1,16], index: 4, kind: input, shape index: {}]
  %s5 = inlined_call_operand.vmem [shape: bf16[16,4], index: 5, kind: input, shape index: {}]
  %s6 = inlined_call_operand.vmem [shape: f32[1,4], index: 6, kind: input, shape index: {}]
  %s7 = inlined_call_operand.hbm [shape: f32[2,4], index: 7, kind: output, shape index: {}]
  %s8 = sld [smem:[#allocation0]]
  $region38: #{transformer_forward.23} parent=0
    _
  %s10 = ssub.s32 1, %s8
  %s11 = scalar_select 0, %s10, %s8
  $region1: #{transformer_forward.23} parent=0
    #allocation2 [shape = 'u8[1024]{0}', space=vmem, size = 0x400, scoped, tag = 'output window, operand 0, single buffered']
    #allocation3 [shape = 's32[1]{0}', space=sflag, size = 0x4, scoped, tag = 'scoped memory for transformer_forward.23']
    %12 = vsyncpa [#allocation3], 0
    // Predicated region
    $region2: #{transformer_forward.23} parent=1 // pred_check
      _
    $region3: #{transformer_forward.23} parent=1 // pred_check_branch
      %14 = sbr.rel (0) target = $region5
    $region4: #{transformer_forward.23} parent=1 // pred_region
      _
    $region5: #{transformer_forward.23} parent=1 // pred_fallthru
      _
    // Predicated region
    $region6: #{transformer_forward.23} parent=1 // pred_check
      _
    $region7: #{transformer_forward.23} parent=1 // pred_check_branch
      %16 = sbr.rel (0) target = $region9
    $region8: #{transformer_forward.23} parent=1 // pred_region
      _
    $region9: #{transformer_forward.23} parent=1 // pred_fallthru
      _
    // Predicated region
    $region10: #{transformer_forward.23} parent=1 // pred_check
      _
    $region11: #{transformer_forward.23} parent=1 // pred_check_branch
      %18 = sbr.rel (0) target = $region13
    $region12: #{transformer_forward.23} parent=1 // pred_region
      _
    $region13: #{transformer_forward.23} parent=1 // pred_fallthru
      _
    // Predicated region
    $region14: #{transformer_forward.23} parent=1 // pred_check
      _
    $region15: #{transformer_forward.23} parent=1 // pred_check_branch
      %20 = sbr.rel (0) target = $region17
    $region16: #{transformer_forward.23} parent=1 // pred_region
      _
    $region17: #{transformer_forward.23} parent=1 // pred_fallthru
      _
    // Predicated region
    $region18: #{transformer_forward.23} parent=1 // pred_check
      _
    $region19: #{transformer_forward.23} parent=1 // pred_check_branch
      %22 = sbr.rel (0) target = $region21
    $region20: #{transformer_forward.23} parent=1 // pred_region
      _
    $region21: #{transformer_forward.23} parent=1 // pred_fallthru
      _
    // Predicated region
    $region22: #{transformer_forward.23} parent=1 // pred_check
      _
    $region23: #{transformer_forward.23} parent=1 // pred_check_branch
      %24 = sbr.rel (0) target = $region25
    $region24: #{transformer_forward.23} parent=1 // pred_region
      _
    $region25: #{transformer_forward.23} parent=1 // pred_fallthru
      _
    // Predicated region
    $region26: #{transformer_forward.23} parent=1 // pred_check
      _
    $region27: #{transformer_forward.23} parent=1 // pred_check_branch
      %26 = sbr.rel (0) target = $region29
    $region28: #{transformer_forward.23} parent=1 // pred_region
      _
    $region29: #{transformer_forward.23} parent=1 // pred_fallthru
      _
    %v28 = vld [vmem:[%s0] sm:$0x1]
    %v29 = vld [vmem:[%s1] sm:$0xf]
    %v30 = vld [vmem:[%s1 + $0x4] sm:$0xf]
    %v31 = vld [vmem:[%s1 + $0x8] sm:$0xf]
    %v32 = vld [vmem:[%s1 + $0xc] sm:$0xf]
    %v33 = vld [vmem:[%s2] sm:$0x1]
    %v35 = vlaneseq
    %v36 = vshrl.u32 %v35, 7
    %v37 = vsub.s32 0, %v36
    %v38 = vrot.slane %v33, %v37
    %v44 = vunpack.c.l.b16 %v29
    %v45 = vunpack.c.l.b16 %v30
    %v46 = vunpack.c.l.b16 %v31
    %v47 = vunpack.c.l.b16 %v32
    %v48 = vpack.c.b16 %v45, %v44
    %v49 = vpack.c.b16 %v47, %v46
    %vm52 = vcmask 261120
    %v54 = vsel %vm52, %v28, 0
    %56 = vmatprep.subr.bf16.mxu0 0
    %57 = vmatpush1.bf16.msra.mxu0 %v48
    %58 = vmatprep.subr.bf16.mxu0 0
    %59 = vmatpush1.bf16.msra.mxu0 %v49
    %60 = vmatprep.subr.bf16.mxu0 0
    %61 = vmatpush1.bf16.msra.mxu0 0
    %62 = vmatprep.subr.bf16.mxu0 0
    %63 = vmatpush1.bf16.msra.mxu0 0
    %64 = vmatprep.subr.bf16.mxu0 0
    %65 = vmatpush1.bf16.msra.mxu0 0
    %66 = vmatprep.subr.bf16.mxu0 0
    %67 = vmatpush1.bf16.msra.mxu0 0
    %68 = vmatprep.subr.bf16.mxu0 0
    %69 = vmatpush1.bf16.msra.mxu0 0
    %70 = vmatprep.subr.bf16.mxu0 0
    %71 = vmatpush1.bf16.msra.mxu0 0
    %72 = vmatprep.subr.bf16.mxu0 0
    %73 = vmatpush1.bf16.msra.mxu0 0
    %74 = vmatprep.subr.bf16.mxu0 0
    %75 = vmatpush1.bf16.msra.mxu0 0
    %76 = vmatprep.subr.bf16.mxu0 0
    %77 = vmatpush1.bf16.msra.mxu0 0
    %78 = vmatprep.subr.bf16.mxu0 0
    %79 = vmatpush1.bf16.msra.mxu0 0
    %80 = vmatprep.subr.bf16.mxu0 0
    %81 = vmatpush1.bf16.msra.mxu0 0
    %82 = vmatprep.subr.bf16.mxu0 0
    %83 = vmatpush1.bf16.msra.mxu0 0
    %84 = vmatprep.subr.bf16.mxu0 0
    %85 = vmatpush1.bf16.msra.mxu0 0
    %86 = vmatprep.subr.bf16.mxu0 0
    %87 = vmatpush1.bf16.msra.mxu0 0
    %88 = vmatprep.mubr.bf16.mxu0 0
    %89 = vmatmul.mubr.bf16.gmra.mrb[0].mxu0 %v54
    %v90 = vpop.f32.mrb[0].mxu0
    %v91 = vadd.f32 %v38, %v90
    %v92 = vpop.f32.mrb[0].mxu0
    %v93 = vpop.f32.mrb[0].mxu0
    %v94 = vpop.f32.mrb[0].mxu0
    %95 = vdwg.mxu0
    %vm96 = vcmask 123904
    %v97 = vsel %vm96, %v91, 0.0
    %98 = vadd.xlane.f32.xlu0 %v97
    %v99 = vpop.xlane.xlu0 %98
    %v100 = vrcp.pop 16.0
    %v101 = vmul.f32 %v99, %v100
    %v102 = vsub.f32 %v91, %v101
    %v103 = vmul.f32 %v102, %v102
    %v104 = vsel %vm96, %v103, 0.0
    %105 = vadd.xlane.f32.xlu0 %v104
    %v106 = vpop.xlane.xlu0 %105
    %v107 = vmul.f32 %v106, %v100
    %v108 = vadd.f32 %v107, 1e-05
    %v109 = vrsqrt.pop %v108
    %v110 = vmul.f32 %v102, %v109
    %v111 = vld [vmem:[%s3] sm:$0x1]
    %v113 = vlaneseq
    %v114 = vshrl.u32 %v113, 7
    %v115 = vsub.s32 0, %v114
    %v116 = vrot.slane %v111, %v115
    %v118 = vmul.f32 %v110, %v116
    %v119 = vld [vmem:[%s4] sm:$0x1]
    %v121 = vlaneseq
    %v122 = vshrl.u32 %v121, 7
    %v123 = vsub.s32 0, %v122
    %v124 = vrot.slane %v119, %v123
    %v126 = vadd.f32 %v118, %v124
    %v127 = vmax.f32 %v126, 0.0
    %v128 = vpack.c.bf16 %v127, %v127
    %v129 = vld [vmem:[%s5] sm:$0xf]
    %v130 = vld [vmem:[%s5 + $0x4] sm:$0xf]
    %v131 = vld [vmem:[%s6] sm:$0x1]
    %v133 = vlaneseq
    %v134 = vshrl.u32 %v133, 7
    %v135 = vsub.s32 0, %v134
    %v136 = vrot.slane %v131, %v135
    %v140 = vunpack.c.l.b16 %v129
    %v141 = vunpack.c.l.b16 %v130
    %v142 = vpack.c.b16 %v141, %v140
    %vm144 = vcmask 130048
    %v146 = vsel %vm144, %v128, 0
    %148 = vmatprep.subr.bf16.mxu0 0
    %149 = vmatpush1.bf16.msra.mxu0 %v142
    %150 = vmatprep.subr.bf16.mxu0 0
    %151 = vmatpush1.bf16.msra.mxu0 0
    %152 = vmatprep.subr.bf16.mxu0 0
    %153 = vmatpush1.bf16.msra.mxu0 0
    %154 = vmatprep.subr.bf16.mxu0 0
    %155 = vmatpush1.bf16.msra.mxu0 0
    %156 = vmatprep.subr.bf16.mxu0 0
    %157 = vmatpush1.bf16.msra.mxu0 0
    %158 = vmatprep.subr.bf16.mxu0 0
    %159 = vmatpush1.bf16.msra.mxu0 0
    %160 = vmatprep.subr.bf16.mxu0 0
    %161 = vmatpush1.bf16.msra.mxu0 0
    %162 = vmatprep.subr.bf16.mxu0 0
    %163 = vmatpush1.bf16.msra.mxu0 0
    %164 = vmatprep.subr.bf16.mxu0 0
    %165 = vmatpush1.bf16.msra.mxu0 0
    %166 = vmatprep.subr.bf16.mxu0 0
    %167 = vmatpush1.bf16.msra.mxu0 0
    %168 = vmatprep.subr.bf16.mxu0 0
    %169 = vmatpush1.bf16.msra.mxu0 0
    %170 = vmatprep.subr.bf16.mxu0 0
    %171 = vmatpush1.bf16.msra.mxu0 0
    %172 = vmatprep.subr.bf16.mxu0 0
    %173 = vmatpush1.bf16.msra.mxu0 0
    %174 = vmatprep.subr.bf16.mxu0 0
    %175 = vmatpush1.bf16.msra.mxu0 0
    %176 = vmatprep.subr.bf16.mxu0 0
    %177 = vmatpush1.bf16.msra.mxu0 0
    %178 = vmatprep.subr.bf16.mxu0 0
    %179 = vmatpush1.bf16.msra.mxu0 0
    %180 = vmatprep.mubr.bf16.mxu0 0
    %181 = vmatmul.mubr.bf16.gmra.mrb[0].mxu0 %v146
    %v182 = vpop.f32.mrb[0].mxu0
    %v183 = vadd.f32 %v136, %v182
    %v184 = vpop.f32.mrb[0].mxu0
    %v185 = vpop.f32.mrb[0].mxu0
    %v186 = vpop.f32.mrb[0].mxu0
    %187 = vdwg.mxu0
    %vm188 = vcmask 25600
    %189 = vst.msk [vmem:[#allocation2] sm:$0x3] %vm188, %v183
    // Predicated region
    $region30: #{transformer_forward.23} parent=1 // pred_check
      _
    $region31: #{transformer_forward.23} parent=1 // pred_check_branch
      %191 = sbr.rel (0) target = $region33
    $region32: #{transformer_forward.23} parent=1 // pred_region
      %s193 = ssub.s32 32, 32
      %194 = vsyncadd [#allocation3], %s193
      %s196 = sshll.u32 [#allocation2], 4
      %s197 = int_to_ptr.vmem [resolvable:$true] %s196
      %199 = dma.vmem_to_hbm [thread:$0]  %s197, 32, %s7, [#allocation3]
    $region33: #{transformer_forward.23} parent=1 // pred_fallthru
      _
    // Predicated region
    $region34: #{transformer_forward.23} parent=1 // pred_check
      _
    $region35: #{transformer_forward.23} parent=1 // pred_check_branch
      %201 = sbr.rel (0) target = $region37
    $region36: #{transformer_forward.23} parent=1 // pred_region
      %202 = dma.done [#allocation3], 32
    $region37: #{transformer_forward.23} parent=1 // pred_fallthru
      _
    %203 = vsyncpa [#allocation3], 1

</llo_original>
